<compile_context>
chip_gen: v6e
topology: v6e:2x2x1
jax: 0.10.0
libtpu: 0.0.40
codegen_flags: <defaults>
</compile_context>

<pallas_src>
import functools

import numpy as np
import jax
import jax.numpy as jnp
from jax import lax
from jax.experimental import pallas as pl
from jax.experimental.pallas import tpu as pltpu


def _round_up(x, m):
    return ((x + m - 1) // m) * m


def _reflect_pads(k):
    # torch ReflectionPad2d split used by the module: odd k -> k//2 on both sides,
    # even k -> (k//2, k//2 - 1) per axis (left/top get the larger pad).
    if k % 2 == 1:
        return k // 2, k // 2
    return k // 2, k // 2 - 1


# --------------------- primary path: one 2D-Toeplitz batched matmul -----------------
def _toeplitz2d_kernel(x_ref, t_ref, o_ref):
    # x_ref: (Bt, C, K)   bf16, K = Hp*Wp (flattened reflection-padded sample)
    # t_ref: (Bt, K, Nt)  bf16, Nt = lane-dense chunk of round_up(H*W, 128)
    # o_ref: (Bt, C, Nt)  f32  (single wide unmasked store)
    o_ref[...] = jnp.einsum('bck,bkn->bcn', x_ref[...], t_ref[...],
                            preferred_element_type=jnp.float32)


def _blur_toeplitz2d(xpad, kernel, H, W):
    B, C, Hp, Wp = xpad.shape
    _, kH, kW = kernel.shape
    K = Hp * Wp
    N = H * W
    Npad = _round_up(N, 128)

    # One-hot shift tensors (trace-time numpy, tiny).
    EH = np.zeros((kH, Hp, H), np.float32)
    for u in range(kH):
        EH[u, np.arange(H) + u, np.arange(H)] = 1.0
    EW = np.zeros((kW, Wp, W), np.float32)
    for v in range(kW):
        EW[v, np.arange(W) + v, np.arange(W)] = 1.0

    # TW[b,u,q,j] = kernel[b,u,q-j];  T2[b,(p,q),(i,j)] = kernel[b,p-i,q-j] (0 outside)
    TW = jnp.einsum('buv,vqj->buqj', kernel.astype(jnp.float32), jnp.asarray(EW))
    T2 = jnp.einsum('upi,buqj->bpqij', jnp.asarray(EH), TW).reshape(B, K, N)
    if Npad != N:
        T2 = jnp.pad(T2, ((0, 0), (0, 0), (0, Npad - N)))
    T2 = T2.astype(jnp.bfloat16)
    x2 = xpad.reshape(B, C, K).astype(jnp.bfloat16)

    # Split the lane dim into two parallel chunks: keeps both v7x TensorCores busy
    # even when B == 1; no effect on single-TC v5e/v6e.
    nsplit = 2 if Npad % 256 == 0 else 1
    Nt = Npad // nsplit

    # Batch Bt samples per grid step (amortizes per-step overhead) under a VMEM budget
    # that stays comfortably inside v7x's 64 MiB even with double buffering.
    per_sample = C * K * 2 + K * Nt * 2 + C * Nt * 4
    Bt = max(1, min(B, (8 * 2 ** 20) // max(per_sample, 1)))
    while B % Bt:
        Bt -= 1

    step_bytes = Bt * per_sample
    vmem_limit = int(min(56 * 2 ** 20,
                         max(2 * step_bytes + 4 * 2 ** 20, 16 * 2 ** 20)))

    flops = 2 * B * C * K * Npad
    bytes_accessed = 2 * (B * C * K + B * K * Npad) + 4 * B * C * Npad

    out = pl.pallas_call(
        _toeplitz2d_kernel,
        out_shape=jax.ShapeDtypeStruct((B, C, Npad), jnp.float32),
        grid_spec=pltpu.PrefetchScalarGridSpec(
            num_scalar_prefetch=0,
            grid=(B // Bt, nsplit),
            in_specs=[
                pl.BlockSpec((Bt, C, K), lambda b, n: (b, 0, 0)),
                pl.BlockSpec((Bt, K, Nt), lambda b, n: (b, 0, n)),
            ],
            out_specs=pl.BlockSpec((Bt, C, Nt), lambda b, n: (b, 0, n)),
        ),
        compiler_params=pltpu.CompilerParams(
            dimension_semantics=("parallel", "parallel"),
            vmem_limit_bytes=vmem_limit),
        cost_estimate=pl.CostEstimate(flops=flops, transcendentals=0,
                                      bytes_accessed=bytes_accessed),
    )(x2, T2)
    return out[:, :, :N].reshape(B, C, H, W)


# ----------------- fallback path: W-Toeplitz matmul + aligned H band sum ------------
def _bandsum_kernel(x_ref, t_ref, o_ref, *, C, H, W, kH, Hp_pad, Wl):
    # x_ref: (1, C*Hp_pad, Wp)  bf16   (Hp_pad % 8 == 0 -> sublane-aligned channel bases)
    # t_ref: (1, Wp, kH*Wl)     bf16   (Wl % 128 == 0 -> lane-aligned u-blocks)
    # o_ref: (1, C*H, W)        f32    (one slab store per channel block)
    y = jnp.dot(x_ref[0], t_ref[0], preferred_element_type=jnp.float32)  # (C*Hp_pad, kH*Wl)
    # H-direction band sum: out[c,i,j] = sum_u y[c*Hp_pad + i + u, u*Wl + j]
    # TODO(synk): switch these static unrolled loops to lax.fori_loop(unroll=True)
    # if C*kH grows large enough to hurt compile time / code size.
    for c in range(C):
        base = c * Hp_pad
        acc = y[base:base + H, 0:W]
        for u in range(1, kH):
            acc = acc + y[base + u:base + u + H, u * Wl:u * Wl + W]
        o_ref[0, c * H:(c + 1) * H, :] = acc


def _blur_bandsum(xpad, kernel, H, W):
    B, C, Hp, Wp = xpad.shape
    _, kH, kW = kernel.shape
    Wl = _round_up(W, 128)       # lane-align every kernel-row block of T
    Hp_pad = _round_up(Hp, 8)    # sublane-align per-channel row bases

    EW = np.zeros((kW, Wp, W), np.float32)
    for v in range(kW):
        EW[v, np.arange(W) + v, np.arange(W)] = 1.0
    # TW[b,u,p,j] = kernel[b,u,p-j]  (W-direction Toeplitz per kernel row u)
    TW = jnp.einsum('buv,vpj->bupj', kernel.astype(jnp.float32), jnp.asarray(EW))
    TW = jnp.pad(TW, ((0, 0), (0, 0), (0, 0), (0, Wl - W)))          # (B, kH, Wp, Wl)
    T = TW.transpose(0, 2, 1, 3).reshape(B, Wp, kH * Wl).astype(jnp.bfloat16)

    x2 = jnp.pad(xpad, ((0, 0), (0, 0), (0, Hp_pad - Hp), (0, 0)))
    x2 = x2.reshape(B, C * Hp_pad, Wp).astype(jnp.bfloat16)

    xb = C * Hp_pad * Wp * 2
    tb = Wp * kH * Wl * 2
    ob = C * H * W * 4
    yb = C * Hp_pad * kH * Wl * 4   # in-kernel matmul result held in VMEM
    vmem_limit = int(min(56 * 2 ** 20,
                         max(2 * (xb + tb + ob) + yb + 4 * 2 ** 20, 16 * 2 ** 20)))

    flops = 2 * B * (C * Hp_pad) * Wp * (kH * Wl) + B * C * kH * H * W
    bytes_accessed = B * (xb + tb + ob)

    kern_fn = functools.partial(_bandsum_kernel, C=C, H=H, W=W, kH=kH,
                                Hp_pad=Hp_pad, Wl=Wl)
    out = pl.pallas_call(
        kern_fn,
        out_shape=jax.ShapeDtypeStruct((B, C * H, W), jnp.float32),
        grid_spec=pltpu.PrefetchScalarGridSpec(
            num_scalar_prefetch=0,
            grid=(B,),
            in_specs=[
                pl.BlockSpec((1, C * Hp_pad, Wp), lambda b: (b, 0, 0)),
                pl.BlockSpec((1, Wp, kH * Wl), lambda b: (b, 0, 0)),
            ],
            out_specs=pl.BlockSpec((1, C * H, W), lambda b: (b, 0, 0)),
        ),
        compiler_params=pltpu.CompilerParams(
            dimension_semantics=("parallel",),
            vmem_limit_bytes=vmem_limit),
        cost_estimate=pl.CostEstimate(flops=flops, transcendentals=0,
                                      bytes_accessed=bytes_accessed),
    )(x2, T)
    return out.reshape(B, C, H, W)


# --------------------------------- dispatcher ----------------------------------------
def blur_by_kernel(x, kernel, *, force_path=None):
    """x: (B, C, H, W); kernel: (B, kH, kW). Returns (B, C, H, W) in x.dtype."""
    B, C, H, W = x.shape
    kB, kH, kW = kernel.shape
    assert kB == B
    pt, pb = _reflect_pads(kH)
    pleft, pright = _reflect_pads(kW)
    # NOTE: reflection padding requires pad <= dim - 1 (same constraint as torch).
    xpad = jnp.pad(x.astype(jnp.float32),
                   ((0, 0), (0, 0), (pt, pb), (pleft, pright)), mode='reflect')
    Hp, Wp = H + pt + pb, W + pleft + pright

    # Dense 2D-Toeplitz path only while the per-sample matrix stays VMEM-friendly.
    t2_bytes = Hp * Wp * _round_up(H * W, 128) * 2
    use_t2 = t2_bytes <= 8 * 2 ** 20
    if force_path == "toeplitz2d":
        use_t2 = True
    elif force_path == "bandsum":
        use_t2 = False

    if use_t2:
        res = _blur_toeplitz2d(xpad, kernel, H, W)
    else:
        res = _blur_bandsum(xpad, kernel, H, W)
    return res.astype(x.dtype)


if __name__ == "__main__":
    key = jax.random.PRNGKey(0)

    def reference(x, kern, kH, kW):
        # Plain-JAX mirror of the torch forward (grouped conv).  Operands are
        # bf16-rounded so it is directly comparable with the bf16-operand MXU path
        # (only f32 accumulation-order noise remains).
        B = x.shape[0]
        pt, pb = _reflect_pads(kH)
        plf, prt = _reflect_pads(kW)
        xb = x.astype(jnp.bfloat16).astype(jnp.float32)
        kb = kern.astype(jnp.bfloat16).astype(jnp.float32)
        xpad = jnp.pad(xb, ((0, 0), (0, 0), (pt, pb), (plf, prt)), mode='reflect')
        lhs = jnp.transpose(xpad, (1, 0, 2, 3))          # (C, B, Hp, Wp)
        rhs = kb[:, None, :, :]                          # (B, 1, kH, kW)
        ref = lax.conv_general_dilated(
            lhs, rhs, window_strides=(1, 1), padding='VALID',
            dimension_numbers=('NCHW', 'OIHW', 'NCHW'), feature_group_count=B,
            precision=lax.Precision.HIGHEST)
        return jnp.transpose(ref, (1, 0, 2, 3))          # (B, C, H, W)

    run = jax.jit(blur_by_kernel, static_argnames=("force_path",))

    # 1) Default odd kernel (module default ksize=21) -> 2D-Toeplitz matmul path.
    B, C, H, W, ks = 2, 4, 16, 16, 21
    kx, kk = jax.random.split(key)
    x = jax.random.normal(kx, (B, C, H, W), dtype=jnp.float32)
    kern = jax.random.uniform(kk, (B, ks, ks), dtype=jnp.float32)
    kern = kern / jnp.sum(kern, axis=(1, 2), keepdims=True)   # blur kernel sums to 1

    out = jax.block_until_ready(run(x, kern))
    ref = reference(x, kern, ks, ks)
    assert out.shape == (B, C, H, W)
    assert jnp.allclose(out, ref, atol=2e-3, rtol=2e-3), \
        float(jnp.max(jnp.abs(out - ref)))

    # 2) Same inputs through the aligned band-sum fallback path.
    out_bs = jax.block_until_ready(run(x, kern, force_path="bandsum"))
    assert jnp.allclose(out_bs, ref, atol=2e-3, rtol=2e-3), \
        float(jnp.max(jnp.abs(out_bs - ref)))

    # 3) Even kernel size exercises the asymmetric ReflectionPad2d split.
    ks_e = 4
    ke = jax.random.uniform(jax.random.PRNGKey(1), (B, ks_e, ks_e), dtype=jnp.float32)
    ke = ke / jnp.sum(ke, axis=(1, 2), keepdims=True)
    out_e = jax.block_until_ready(run(x, ke))
    ref_e = reference(x, ke, ks_e, ks_e)
    assert jnp.allclose(out_e, ref_e, atol=2e-3, rtol=2e-3), \
        float(jnp.max(jnp.abs(out_e - ref_e)))

    print("KERNEL_OK")
</pallas_src>

<mosaic_0001>
module attributes {stable_mosaic.version = 11 : i64} {
  func.func @_toeplitz2d_kernel(%arg0: i32, %arg1: i32, %arg2: memref<2x4x1296xbf16, #tpu.memory_space<vmem>>, %arg3: memref<2x1296x128xbf16, #tpu.memory_space<vmem>>, %arg4: memref<2x4x128xf32, #tpu.memory_space<vmem>>) attributes {dimension_semantics = [#tpu.dimension_semantics<parallel>, #tpu.dimension_semantics<parallel>], iteration_bounds = array<i64: 1, 2>, scalar_prefetch = 0 : i64, scratch_operands = 0 : i64, tpu.core_type = #tpu.core_type<tc>, window_params = [{transform_indices = @transform_0, window_bounds = array<i64: 2, 4, 1296>}, {transform_indices = @transform_1, window_bounds = array<i64: 2, 1296, 128>}, {transform_indices = @transform_2, window_bounds = array<i64: 2, 4, 128>}]} {
    %c0 = arith.constant 0 : index
    %c0_0 = arith.constant 0 : index
    %c0_1 = arith.constant 0 : index
    %0 = vector.load %arg2[%c0, %c0_0, %c0_1] : memref<2x4x1296xbf16, #tpu.memory_space<vmem>>, vector<2x4x1296xbf16>
    %c0_2 = arith.constant 0 : index
    %c0_3 = arith.constant 0 : index
    %c0_4 = arith.constant 0 : index
    %1 = vector.load %arg3[%c0_2, %c0_3, %c0_4] : memref<2x1296x128xbf16, #tpu.memory_space<vmem>>, vector<2x1296x128xbf16>
    "tpu.trace_start"() <{level = 10 : i32, message = "bck,bkn->bcn"}> : () -> ()
    %cst = arith.constant dense<0.000000e+00> : vector<2x4x128xf32>
    %2 = tpu.matmul %0, %1, %cst {dimension_numbers = #tpu.dot_dimension_numbers<[2], [1], [1], [2], [0, 0, 0, 1, 1, 2], [0], [0]>} : vector<2x4x1296xbf16>, vector<2x1296x128xbf16>, vector<2x4x128xf32> -> vector<2x4x128xf32>
    "tpu.trace_stop"() : () -> ()
    %c0_5 = arith.constant 0 : index
    %c0_6 = arith.constant 0 : index
    %c0_7 = arith.constant 0 : index
    %3 = vector.load %arg4[%c0_5, %c0_6, %c0_7] : memref<2x4x128xf32, #tpu.memory_space<vmem>>, vector<2x4x128xf32>
    tpu.vector_store %arg4[%c0_5, %c0_6, %c0_7], %2 {strides = array<i32>} : memref<2x4x128xf32, #tpu.memory_space<vmem>>, vector<2x4x128xf32>,
    return
  }
  func.func @transform_0(%arg0: i32, %arg1: i32) -> (i32, i32, i32) {
    %c0_i32 = arith.constant 0 : i32
    %c0_i32_0 = arith.constant 0 : i32
    %c0_i32_1 = arith.constant 0 : i32
    return %arg0, %c0_i32, %c0_i32_0 : i32, i32, i32
  }
  func.func @transform_1(%arg0: i32, %arg1: i32) -> (i32, i32, i32) {
    %c0_i32 = arith.constant 0 : i32
    %c0_i32_0 = arith.constant 0 : i32
    return %arg0, %c0_i32, %arg1 : i32, i32, i32
  }
  func.func @transform_2(%arg0: i32, %arg1: i32) -> (i32, i32, i32) {
    %c0_i32 = arith.constant 0 : i32
    %c0_i32_0 = arith.constant 0 : i32
    return %arg0, %c0_i32, %arg1 : i32, i32, i32
  }
}

</mosaic_0001>

<llo_original>
// kernel: blur_by_kernel.1
$region0: #{blur_by_kernel.1}
  #allocation0 [shape = 'u32[]', space=smem, size = 0x4, offset = 0x4, fixed_abs, tag = 'smem constant byte address 0x4 - core index']
  #allocation1 [shape = 'u32[144,128]{1,0:T(1,128)}', space=vmem, size = 0x12000, scoped, tag = 'internal scratch']
  %s0 = inlined_call_operand.vmem [shape: bf16[2,4,1296], index: 0, kind: input, shape index: {}]
  %s1 = inlined_call_operand.vmem [shape: bf16[2,1296,256], index: 1, kind: input, shape index: {}]
  %s2 = inlined_call_operand.vmem [shape: f32[2,4,256], index: 2, kind: output, shape index: {}]
  %s3 = sld [smem:[#allocation0]]
  $region119: #{blur_by_kernel.1} parent=0
    _
  %s5 = ssub.s32 1, %s3
  %s6 = scalar_select 0, %s5, %s3
  $region1: #{blur_by_kernel.1} parent=0
    #allocation2 [shape = 'u8[1327104]{0}', space=vmem, size = 0x144000, scoped, tag = 'input window, operand 1']
    #allocation3 [shape = 'u8[8192]{0}', space=vmem, size = 0x2000, scoped, tag = 'output window, operand 0']
    loop: start=0, step=1, limit=4
    $region2: #{blur_by_kernel.1} parent=1 // loop_pre_header
      _
    $region3: #{blur_by_kernel.1} parent=1 // loop_header
      %s8 = sphi 0, %s12
      %p9 = scmp.ge.s32.totalorder %s8, 4
      %s15 = sphi 0, %s27
      %s16 = sphi 0, %s23
      %s17 = sphi 0, %s15
      %s18 = sphi 0, %s16
      %s19 = sphi 0, %s17
      %s20 = sphi 0, %s18
      %s30 = sphi 0, %s32
      %s33 = sphi 0, %s30
      %s34 = sphi 0, %s33
      %s50 = sphi 0, %s34
      %s58 = sphi 0, %s60
      %s61 = sphi 0, %s58
      %s62 = sphi 0, %s61
      %s78 = sphi 0, %s62
      %s86 = sphi 0, %s88
      %s89 = sphi 0, %s86
      %s90 = sphi 0, %s89
      %s106 = sphi 0, %s90
    $region4: #{blur_by_kernel.1} parent=1 // loop_header_branch
      %11 = sbr.rel (%p9) target = $region8
    $region5: #{blur_by_kernel.1} parent=1 // loop_body
      %s13 = ssub.s32 %s8, 1
      %s14 = ssub.s32 %s8, 2
      %s21 = sadd.s32 1, %s16
      %p22 = scmp.ge.s32.totalorder %s21, 2
      %s23 = scalar_select %p22, 0, %s21
      %s24 = sadd.s32 1, %s15
      %s25 = scalar_select %p22, %s24, %s15
      %p26 = scmp.ge.s32.totalorder %s25, 1
      %s27 = scalar_select %p26, 0, %s25
      %s28 = ssub.s32 %s15, %s27
      %p29 = scmp.eq.s32.totalorder %s28, 0
      %s31 = sadd.s32 %s30, 1
      %s32 = scalar_select %p29, %s30, %s31
      %p35 = pneg %p29
      %p36 = scmp.eq.s32.totalorder %s8, 1
      %p37 = por %p35, %p36
      %p38 = scmp.ne.s32.totalorder %s30, %s33
      %p39 = scmp.eq.s32.totalorder %s8, 0
      %p40 = por %p38, %p39
      %p41 = scmp.ne.s32.totalorder %s30, %s33
      %p42 = scmp.eq.s32.totalorder %s13, 1
      %p43 = por %p41, %p42
      %p44 = scmp.ne.s32.totalorder %s33, %s34
      %p45 = scmp.eq.s32.totalorder %s13, 0
      %p46 = por %p44, %p45
      %p47 = scmp.ne.s32.totalorder %s33, %s34
      %p48 = scmp.eq.s32.totalorder %s14, 1
      %p49 = por %p47, %p48
      %p51 = scmp.ne.s32.totalorder %s34, %s50
      %p52 = scmp.eq.s32.totalorder %s14, 0
      %p53 = por %p51, %p52
      %s54 = ssub.s32 %s15, %s27
      %s55 = ssub.s32 %s16, %s23
      %s56 = sor.u32 %s54, %s55
      %p57 = scmp.eq.s32.totalorder %s56, 0
      %s59 = sadd.s32 %s58, 1
      %s60 = scalar_select %p57, %s58, %s59
      %p63 = pneg %p57
      %p64 = scmp.eq.s32.totalorder %s8, 1
      %p65 = por %p63, %p64
      %p66 = scmp.ne.s32.totalorder %s58, %s61
      %p67 = scmp.eq.s32.totalorder %s8, 0
      %p68 = por %p66, %p67
      %p69 = scmp.ne.s32.totalorder %s58, %s61
      %p70 = scmp.eq.s32.totalorder %s13, 1
      %p71 = por %p69, %p70
      %p72 = scmp.ne.s32.totalorder %s61, %s62
      %p73 = scmp.eq.s32.totalorder %s13, 0
      %p74 = por %p72, %p73
      %p75 = scmp.ne.s32.totalorder %s61, %s62
      %p76 = scmp.eq.s32.totalorder %s14, 1
      %p77 = por %p75, %p76
      %p79 = scmp.ne.s32.totalorder %s62, %s78
      %p80 = scmp.eq.s32.totalorder %s14, 0
      %p81 = por %p79, %p80
      %s82 = ssub.s32 %s15, %s27
      %s83 = ssub.s32 %s16, %s23
      %s84 = sor.u32 %s82, %s83
      %p85 = scmp.eq.s32.totalorder %s84, 0
      %s87 = sadd.s32 %s86, 1
      %s88 = scalar_select %p85, %s86, %s87
      %p91 = pneg %p85
      %p92 = scmp.eq.s32.totalorder %s8, 1
      %p93 = por %p91, %p92
      %p94 = scmp.ne.s32.totalorder %s86, %s89
      %p95 = scmp.eq.s32.totalorder %s8, 0
      %p96 = por %p94, %p95
      %p97 = scmp.ne.s32.totalorder %s86, %s89
      %p98 = scmp.eq.s32.totalorder %s13, 1
      %p99 = por %p97, %p98
      %p100 = scmp.ne.s32.totalorder %s89, %s90
      %p101 = scmp.eq.s32.totalorder %s13, 0
      %p102 = por %p100, %p101
      %p103 = scmp.ne.s32.totalorder %s89, %s90
      %p104 = scmp.eq.s32.totalorder %s14, 1
      %p105 = por %p103, %p104
      %p107 = scmp.ne.s32.totalorder %s90, %s106
      %p108 = scmp.eq.s32.totalorder %s14, 0
      %p109 = por %p107, %p108
      %p110 = scmp.le.s32.totalorder 1, %s8
      %p111 = scmp.lt.s32.totalorder %s8, 3
      %p112 = pnand %p110, %p111
      %p113 = pneg %p112
      // Predicated region
      $region9: #{blur_by_kernel.1} parent=5 // pred_check
        _
      $region10: #{blur_by_kernel.1} parent=5 // pred_check_branch
        %115 = sbr.rel (%p112) target = $region12
      $region11: #{blur_by_kernel.1} parent=5 // pred_region
        %s116 = ssub.s32 %s8, 1
        // Predicated region
        $region13: #{blur_by_kernel.1} parent=11 // pred_check
          %p117 = pneg %p46
        $region14: #{blur_by_kernel.1} parent=11 // pred_check_branch
          %119 = sbr.rel (%p117) target = $region16
        $region15: #{blur_by_kernel.1} parent=11 // pred_region
          %s120 = smul.u32 2, %s17
          %p121 = scmp.lt.s32.totalorder %s120, 1
          %s122 = scalar_select %p121, %s120, 1
          %s123 = smul.addr %s122, 11
          %s124 = smul.addr %s123, 2
          %s125 = scalar_lea.vmem %s0, %s124
          %s126 = smul.u32 2, %s17
        $region16: #{blur_by_kernel.1} parent=11 // pred_fallthru
          _
      $region12: #{blur_by_kernel.1} parent=5 // pred_fallthru
        _
      %p127 = scmp.lt.s32.totalorder %s8, 2
      // Predicated region
      $region17: #{blur_by_kernel.1} parent=5 // pred_check
        %p128 = pneg %p127
      $region18: #{blur_by_kernel.1} parent=5 // pred_check_branch
        %130 = sbr.rel (%p128) target = $region20
      $region19: #{blur_by_kernel.1} parent=5 // pred_region
        // Predicated region
        $region21: #{blur_by_kernel.1} parent=19 // pred_check
          %p131 = pneg %p68
        $region22: #{blur_by_kernel.1} parent=19 // pred_check_branch
          %133 = sbr.rel (%p131) target = $region24
        $region23: #{blur_by_kernel.1} parent=19 // pred_region
          %s134 = sand.u32 %s58, 1
          %s135 = sand.u32 %s58, 1
          %s136 = smul.addr %s135, 1296
          %s137 = scalar_lea.vmem [#allocation2], %s136
          %s138 = smul.u32 2, %s15
          %s139 = smul.addr %s138, 324
          %s140 = sadd.s32 %s16, %s139
          %s141 = smul.addr %s140, 4
          %s142 = scalar_lea.vmem %s1, %s141
          // Predicated region
          $region25: #{blur_by_kernel.1} parent=23 // pred_check
            _
          $region26: #{blur_by_kernel.1} parent=23 // pred_check_branch
            %144 = sbr.rel (0) target = $region28
          $region27: #{blur_by_kernel.1} parent=23 // pred_region
            // Predicated region
            $region29: #{blur_by_kernel.1} parent=27 // pred_check
              _
            $region30: #{blur_by_kernel.1} parent=27 // pred_check_branch
              %146 = sbr.rel target = $region32
            $region31: #{blur_by_kernel.1} parent=27 // pred_region
              // Predicated region
              $region44: #{blur_by_kernel.1} parent=31 // pred_check
                _
              $region45: #{blur_by_kernel.1} parent=31 // pred_check_branch
                %808 = sbr.rel (0) target = $region47
              $region46: #{blur_by_kernel.1} parent=31 // pred_region
                loop: start=0, step=1, limit=1
                $region48: #{blur_by_kernel.1} parent=46 // loop_pre_header
                  _
                $region49: #{blur_by_kernel.1} parent=46 // loop_header
                  %s810 = sphi 0, %s814
                  %p811 = scmp.ge.s32.totalorder %s810, 1
                  %s815 = sphi %s142, %s142
                  %s816 = sphi %s137, %s137
                $region50: #{blur_by_kernel.1} parent=46 // loop_header_branch
                  %813 = sbr.rel (%p811) target = $region54
                $region51: #{blur_by_kernel.1} parent=46 // loop_body
                  _
                $region52: #{blur_by_kernel.1} parent=46 // loop_footer
                  %s814 = sadd.s32 1, %s810
                $region53: #{blur_by_kernel.1} parent=46 // loop_footer_branch
                  %809 = sbr.rel target = $region49
                $region54: #{blur_by_kernel.1} parent=46 // loop_exit
                  _
                %s818 = ssub.s32 16, 1
                loop: start=0, step=1, limit=1
                $region55: #{blur_by_kernel.1} parent=46 // loop_pre_header
                  _
                $region56: #{blur_by_kernel.1} parent=46 // loop_header
                  %s820 = sphi 0, %s824
                  %p821 = scmp.ge.s32.totalorder %s820, 1
                  %s825 = sphi %s142, %s142
                  %s826 = sphi %s137, %s137
                $region57: #{blur_by_kernel.1} parent=46 // loop_header_branch
                  %823 = sbr.rel (%p821) target = $region61
                $region58: #{blur_by_kernel.1} parent=46 // loop_body
                  %v827 = vld [vmem:[%s825] sm:%s818]
                  %828 = vst [vmem:[%s826] sm:%s818] %v827
                  %v829 = vld [vmem:[%s825 + $0x8] sm:%s818]
                  %830 = vst [vmem:[%s826 + $0x4] sm:%s818] %v829
                  %v831 = vld [vmem:[%s825 + $0x10] sm:%s818]
                  %832 = vst [vmem:[%s826 + $0x8] sm:%s818] %v831
                  %v833 = vld [vmem:[%s825 + $0x18] sm:%s818]
                  %834 = vst [vmem:[%s826 + $0xc] sm:%s818] %v833
                  %v835 = vld [vmem:[%s825 + $0x20] sm:%s818]
                  %836 = vst [vmem:[%s826 + $0x10] sm:%s818] %v835
                  %v837 = vld [vmem:[%s825 + $0x28] sm:%s818]
                  %838 = vst [vmem:[%s826 + $0x14] sm:%s818] %v837
                  %v839 = vld [vmem:[%s825 + $0x30] sm:%s818]
                  %840 = vst [vmem:[%s826 + $0x18] sm:%s818] %v839
                  %v841 = vld [vmem:[%s825 + $0x38] sm:%s818]
                  %842 = vst [vmem:[%s826 + $0x1c] sm:%s818] %v841
                  %v843 = vld [vmem:[%s825 + $0x40] sm:%s818]
                  %844 = vst [vmem:[%s826 + $0x20] sm:%s818] %v843
                  %v845 = vld [vmem:[%s825 + $0x48] sm:%s818]
                  %846 = vst [vmem:[%s826 + $0x24] sm:%s818] %v845
                  %v847 = vld [vmem:[%s825 + $0x50] sm:%s818]
                  %848 = vst [vmem:[%s826 + $0x28] sm:%s818] %v847
                  %v849 = vld [vmem:[%s825 + $0x58] sm:%s818]
                  %850 = vst [vmem:[%s826 + $0x2c] sm:%s818] %v849
                  %v851 = vld [vmem:[%s825 + $0x60] sm:%s818]
                  %852 = vst [vmem:[%s826 + $0x30] sm:%s818] %v851
                  %v853 = vld [vmem:[%s825 + $0x68] sm:%s818]
                  %854 = vst [vmem:[%s826 + $0x34] sm:%s818] %v853
                  %v855 = vld [vmem:[%s825 + $0x70] sm:%s818]
                  %856 = vst [vmem:[%s826 + $0x38] sm:%s818] %v855
                  %v857 = vld [vmem:[%s825 + $0x78] sm:%s818]
                  %858 = vst [vmem:[%s826 + $0x3c] sm:%s818] %v857
                  %v859 = vld [vmem:[%s825 + $0x80] sm:%s818]
                  %860 = vst [vmem:[%s826 + $0x40] sm:%s818] %v859
                  %v861 = vld [vmem:[%s825 + $0x88] sm:%s818]
                  %862 = vst [vmem:[%s826 + $0x44] sm:%s818] %v861
                  %v863 = vld [vmem:[%s825 + $0x90] sm:%s818]
                  %864 = vst [vmem:[%s826 + $0x48] sm:%s818] %v863
                  %v865 = vld [vmem:[%s825 + $0x98] sm:%s818]
                  %866 = vst [vmem:[%s826 + $0x4c] sm:%s818] %v865
                  %v867 = vld [vmem:[%s825 + $0xa0] sm:%s818]
                  %868 = vst [vmem:[%s826 + $0x50] sm:%s818] %v867
                  %v869 = vld [vmem:[%s825 + $0xa8] sm:%s818]
                  %870 = vst [vmem:[%s826 + $0x54] sm:%s818] %v869
                  %v871 = vld [vmem:[%s825 + $0xb0] sm:%s818]
                  %872 = vst [vmem:[%s826 + $0x58] sm:%s818] %v871
                  %v873 = vld [vmem:[%s825 + $0xb8] sm:%s818]
                  %874 = vst [vmem:[%s826 + $0x5c] sm:%s818] %v873
                  %v875 = vld [vmem:[%s825 + $0xc0] sm:%s818]
                  %876 = vst [vmem:[%s826 + $0x60] sm:%s818] %v875
                  %v877 = vld [vmem:[%s825 + $0xc8] sm:%s818]
                  %878 = vst [vmem:[%s826 + $0x64] sm:%s818] %v877
                  %v879 = vld [vmem:[%s825 + $0xd0] sm:%s818]
                  %880 = vst [vmem:[%s826 + $0x68] sm:%s818] %v879
                  %v881 = vld [vmem:[%s825 + $0xd8] sm:%s818]
                  %882 = vst [vmem:[%s826 + $0x6c] sm:%s818] %v881
                  %v883 = vld [vmem:[%s825 + $0xe0] sm:%s818]
                  %884 = vst [vmem:[%s826 + $0x70] sm:%s818] %v883
                  %v885 = vld [vmem:[%s825 + $0xe8] sm:%s818]
                  %886 = vst [vmem:[%s826 + $0x74] sm:%s818] %v885
                  %v887 = vld [vmem:[%s825 + $0xf0] sm:%s818]
                  %888 = vst [vmem:[%s826 + $0x78] sm:%s818] %v887
                  %v889 = vld [vmem:[%s825 + $0xf8] sm:%s818]
                  %890 = vst [vmem:[%s826 + $0x7c] sm:%s818] %v889
                  %v891 = vld [vmem:[%s825 + $0x100] sm:%s818]
                  %892 = vst [vmem:[%s826 + $0x80] sm:%s818] %v891
                  %v893 = vld [vmem:[%s825 + $0x108] sm:%s818]
                  %894 = vst [vmem:[%s826 + $0x84] sm:%s818] %v893
                  %v895 = vld [vmem:[%s825 + $0x110] sm:%s818]
                  %896 = vst [vmem:[%s826 + $0x88] sm:%s818] %v895
                  %v897 = vld [vmem:[%s825 + $0x118] sm:%s818]
                  %898 = vst [vmem:[%s826 + $0x8c] sm:%s818] %v897
                  %v899 = vld [vmem:[%s825 + $0x120] sm:%s818]
                  %900 = vst [vmem:[%s826 + $0x90] sm:%s818] %v899
                  %v901 = vld [vmem:[%s825 + $0x128] sm:%s818]
                  %902 = vst [vmem:[%s826 + $0x94] sm:%s818] %v901
                  %v903 = vld [vmem:[%s825 + $0x130] sm:%s818]
                  %904 = vst [vmem:[%s826 + $0x98] sm:%s818] %v903
                  %v905 = vld [vmem:[%s825 + $0x138] sm:%s818]
                  %906 = vst [vmem:[%s826 + $0x9c] sm:%s818] %v905
                  %v907 = vld [vmem:[%s825 + $0x140] sm:%s818]
                  %908 = vst [vmem:[%s826 + $0xa0] sm:%s818] %v907
                  %v909 = vld [vmem:[%s825 + $0x148] sm:%s818]
                  %910 = vst [vmem:[%s826 + $0xa4] sm:%s818] %v909
                  %v911 = vld [vmem:[%s825 + $0x150] sm:%s818]
                  %912 = vst [vmem:[%s826 + $0xa8] sm:%s818] %v911
                  %v913 = vld [vmem:[%s825 + $0x158] sm:%s818]
                  %914 = vst [vmem:[%s826 + $0xac] sm:%s818] %v913
                  %v915 = vld [vmem:[%s825 + $0x160] sm:%s818]
                  %916 = vst [vmem:[%s826 + $0xb0] sm:%s818] %v915
                  %v917 = vld [vmem:[%s825 + $0x168] sm:%s818]
                  %918 = vst [vmem:[%s826 + $0xb4] sm:%s818] %v917
                  %v919 = vld [vmem:[%s825 + $0x170] sm:%s818]
                  %920 = vst [vmem:[%s826 + $0xb8] sm:%s818] %v919
                  %v921 = vld [vmem:[%s825 + $0x178] sm:%s818]
                  %922 = vst [vmem:[%s826 + $0xbc] sm:%s818] %v921
                  %v923 = vld [vmem:[%s825 + $0x180] sm:%s818]
                  %924 = vst [vmem:[%s826 + $0xc0] sm:%s818] %v923
                  %v925 = vld [vmem:[%s825 + $0x188] sm:%s818]
                  %926 = vst [vmem:[%s826 + $0xc4] sm:%s818] %v925
                  %v927 = vld [vmem:[%s825 + $0x190] sm:%s818]
                  %928 = vst [vmem:[%s826 + $0xc8] sm:%s818] %v927
                  %v929 = vld [vmem:[%s825 + $0x198] sm:%s818]
                  %930 = vst [vmem:[%s826 + $0xcc] sm:%s818] %v929
                  %v931 = vld [vmem:[%s825 + $0x1a0] sm:%s818]
                  %932 = vst [vmem:[%s826 + $0xd0] sm:%s818] %v931
                  %v933 = vld [vmem:[%s825 + $0x1a8] sm:%s818]
                  %934 = vst [vmem:[%s826 + $0xd4] sm:%s818] %v933
                  %v935 = vld [vmem:[%s825 + $0x1b0] sm:%s818]
                  %936 = vst [vmem:[%s826 + $0xd8] sm:%s818] %v935
                  %v937 = vld [vmem:[%s825 + $0x1b8] sm:%s818]
                  %938 = vst [vmem:[%s826 + $0xdc] sm:%s818] %v937
                  %v939 = vld [vmem:[%s825 + $0x1c0] sm:%s818]
                  %940 = vst [vmem:[%s826 + $0xe0] sm:%s818] %v939
                  %v941 = vld [vmem:[%s825 + $0x1c8] sm:%s818]
                  %942 = vst [vmem:[%s826 + $0xe4] sm:%s818] %v941
                  %v943 = vld [vmem:[%s825 + $0x1d0] sm:%s818]
                  %944 = vst [vmem:[%s826 + $0xe8] sm:%s818] %v943
                  %v945 = vld [vmem:[%s825 + $0x1d8] sm:%s818]
                  %946 = vst [vmem:[%s826 + $0xec] sm:%s818] %v945
                  %v947 = vld [vmem:[%s825 + $0x1e0] sm:%s818]
                  %948 = vst [vmem:[%s826 + $0xf0] sm:%s818] %v947
                  %v949 = vld [vmem:[%s825 + $0x1e8] sm:%s818]
                  %950 = vst [vmem:[%s826 + $0xf4] sm:%s818] %v949
                  %v951 = vld [vmem:[%s825 + $0x1f0] sm:%s818]
                  %952 = vst [vmem:[%s826 + $0xf8] sm:%s818] %v951
                  %v953 = vld [vmem:[%s825 + $0x1f8] sm:%s818]
                  %954 = vst [vmem:[%s826 + $0xfc] sm:%s818] %v953
                  %v955 = vld [vmem:[%s825 + $0x200] sm:%s818]
                  %956 = vst [vmem:[%s826 + $0x100] sm:%s818] %v955
                  %v957 = vld [vmem:[%s825 + $0x208] sm:%s818]
                  %958 = vst [vmem:[%s826 + $0x104] sm:%s818] %v957
                  %v959 = vld [vmem:[%s825 + $0x210] sm:%s818]
                  %960 = vst [vmem:[%s826 + $0x108] sm:%s818] %v959
                  %v961 = vld [vmem:[%s825 + $0x218] sm:%s818]
                  %962 = vst [vmem:[%s826 + $0x10c] sm:%s818] %v961
                  %v963 = vld [vmem:[%s825 + $0x220] sm:%s818]
                  %964 = vst [vmem:[%s826 + $0x110] sm:%s818] %v963
                  %v965 = vld [vmem:[%s825 + $0x228] sm:%s818]
                  %966 = vst [vmem:[%s826 + $0x114] sm:%s818] %v965
                  %v967 = vld [vmem:[%s825 + $0x230] sm:%s818]
                  %968 = vst [vmem:[%s826 + $0x118] sm:%s818] %v967
                  %v969 = vld [vmem:[%s825 + $0x238] sm:%s818]
                  %970 = vst [vmem:[%s826 + $0x11c] sm:%s818] %v969
                  %v971 = vld [vmem:[%s825 + $0x240] sm:%s818]
                  %972 = vst [vmem:[%s826 + $0x120] sm:%s818] %v971
                  %v973 = vld [vmem:[%s825 + $0x248] sm:%s818]
                  %974 = vst [vmem:[%s826 + $0x124] sm:%s818] %v973
                  %v975 = vld [vmem:[%s825 + $0x250] sm:%s818]
                  %976 = vst [vmem:[%s826 + $0x128] sm:%s818] %v975
                  %v977 = vld [vmem:[%s825 + $0x258] sm:%s818]
                  %978 = vst [vmem:[%s826 + $0x12c] sm:%s818] %v977
                  %v979 = vld [vmem:[%s825 + $0x260] sm:%s818]
                  %980 = vst [vmem:[%s826 + $0x130] sm:%s818] %v979
                  %v981 = vld [vmem:[%s825 + $0x268] sm:%s818]
                  %982 = vst [vmem:[%s826 + $0x134] sm:%s818] %v981
                  %v983 = vld [vmem:[%s825 + $0x270] sm:%s818]
                  %984 = vst [vmem:[%s826 + $0x138] sm:%s818] %v983
                  %v985 = vld [vmem:[%s825 + $0x278] sm:%s818]
                  %986 = vst [vmem:[%s826 + $0x13c] sm:%s818] %v985
                  %v987 = vld [vmem:[%s825 + $0x280] sm:%s818]
                  %988 = vst [vmem:[%s826 + $0x140] sm:%s818] %v987
                  %v989 = vld [vmem:[%s825 + $0x288] sm:%s818]
                  %990 = vst [vmem:[%s826 + $0x144] sm:%s818] %v989
                  %v991 = vld [vmem:[%s825 + $0x290] sm:%s818]
                  %992 = vst [vmem:[%s826 + $0x148] sm:%s818] %v991
                  %v993 = vld [vmem:[%s825 + $0x298] sm:%s818]
                  %994 = vst [vmem:[%s826 + $0x14c] sm:%s818] %v993
                  %v995 = vld [vmem:[%s825 + $0x2a0] sm:%s818]
                  %996 = vst [vmem:[%s826 + $0x150] sm:%s818] %v995
                  %v997 = vld [vmem:[%s825 + $0x2a8] sm:%s818]
                  %998 = vst [vmem:[%s826 + $0x154] sm:%s818] %v997
                  %v999 = vld [vmem:[%s825 + $0x2b0] sm:%s818]
                  %1000 = vst [vmem:[%s826 + $0x158] sm:%s818] %v999
                  %v1001 = vld [vmem:[%s825 + $0x2b8] sm:%s818]
                  %1002 = vst [vmem:[%s826 + $0x15c] sm:%s818] %v1001
                  %v1003 = vld [vmem:[%s825 + $0x2c0] sm:%s818]
                  %1004 = vst [vmem:[%s826 + $0x160] sm:%s818] %v1003
                  %v1005 = vld [vmem:[%s825 + $0x2c8] sm:%s818]
                  %1006 = vst [vmem:[%s826 + $0x164] sm:%s818] %v1005
                  %v1007 = vld [vmem:[%s825 + $0x2d0] sm:%s818]
                  %1008 = vst [vmem:[%s826 + $0x168] sm:%s818] %v1007
                  %v1009 = vld [vmem:[%s825 + $0x2d8] sm:%s818]
                  %1010 = vst [vmem:[%s826 + $0x16c] sm:%s818] %v1009
                  %v1011 = vld [vmem:[%s825 + $0x2e0] sm:%s818]
                  %1012 = vst [vmem:[%s826 + $0x170] sm:%s818] %v1011
                  %v1013 = vld [vmem:[%s825 + $0x2e8] sm:%s818]
                  %1014 = vst [vmem:[%s826 + $0x174] sm:%s818] %v1013
                  %v1015 = vld [vmem:[%s825 + $0x2f0] sm:%s818]
                  %1016 = vst [vmem:[%s826 + $0x178] sm:%s818] %v1015
                  %v1017 = vld [vmem:[%s825 + $0x2f8] sm:%s818]
                  %1018 = vst [vmem:[%s826 + $0x17c] sm:%s818] %v1017
                  %v1019 = vld [vmem:[%s825 + $0x300] sm:%s818]
                  %1020 = vst [vmem:[%s826 + $0x180] sm:%s818] %v1019
                  %v1021 = vld [vmem:[%s825 + $0x308] sm:%s818]
                  %1022 = vst [vmem:[%s826 + $0x184] sm:%s818] %v1021
                  %v1023 = vld [vmem:[%s825 + $0x310] sm:%s818]
                  %1024 = vst [vmem:[%s826 + $0x188] sm:%s818] %v1023
                  %v1025 = vld [vmem:[%s825 + $0x318] sm:%s818]
                  %1026 = vst [vmem:[%s826 + $0x18c] sm:%s818] %v1025
                  %v1027 = vld [vmem:[%s825 + $0x320] sm:%s818]
                  %1028 = vst [vmem:[%s826 + $0x190] sm:%s818] %v1027
                  %v1029 = vld [vmem:[%s825 + $0x328] sm:%s818]
                  %1030 = vst [vmem:[%s826 + $0x194] sm:%s818] %v1029
                  %v1031 = vld [vmem:[%s825 + $0x330] sm:%s818]
                  %1032 = vst [vmem:[%s826 + $0x198] sm:%s818] %v1031
                  %v1033 = vld [vmem:[%s825 + $0x338] sm:%s818]
                  %1034 = vst [vmem:[%s826 + $0x19c] sm:%s818] %v1033
                  %v1035 = vld [vmem:[%s825 + $0x340] sm:%s818]
                  %1036 = vst [vmem:[%s826 + $0x1a0] sm:%s818] %v1035
                  %v1037 = vld [vmem:[%s825 + $0x348] sm:%s818]
                  %1038 = vst [vmem:[%s826 + $0x1a4] sm:%s818] %v1037
                  %v1039 = vld [vmem:[%s825 + $0x350] sm:%s818]
                  %1040 = vst [vmem:[%s826 + $0x1a8] sm:%s818] %v1039
                  %v1041 = vld [vmem:[%s825 + $0x358] sm:%s818]
                  %1042 = vst [vmem:[%s826 + $0x1ac] sm:%s818] %v1041
                  %v1043 = vld [vmem:[%s825 + $0x360] sm:%s818]
                  %1044 = vst [vmem:[%s826 + $0x1b0] sm:%s818] %v1043
                  %v1045 = vld [vmem:[%s825 + $0x368] sm:%s818]
                  %1046 = vst [vmem:[%s826 + $0x1b4] sm:%s818] %v1045
                  %v1047 = vld [vmem:[%s825 + $0x370] sm:%s818]
                  %1048 = vst [vmem:[%s826 + $0x1b8] sm:%s818] %v1047
                  %v1049 = vld [vmem:[%s825 + $0x378] sm:%s818]
                  %1050 = vst [vmem:[%s826 + $0x1bc] sm:%s818] %v1049
                  %v1051 = vld [vmem:[%s825 + $0x380] sm:%s818]
                  %1052 = vst [vmem:[%s826 + $0x1c0] sm:%s818] %v1051
                  %v1053 = vld [vmem:[%s825 + $0x388] sm:%s818]
                  %1054 = vst [vmem:[%s826 + $0x1c4] sm:%s818] %v1053
                  %v1055 = vld [vmem:[%s825 + $0x390] sm:%s818]
                  %1056 = vst [vmem:[%s826 + $0x1c8] sm:%s818] %v1055
                  %v1057 = vld [vmem:[%s825 + $0x398] sm:%s818]
                  %1058 = vst [vmem:[%s826 + $0x1cc] sm:%s818] %v1057
                  %v1059 = vld [vmem:[%s825 + $0x3a0] sm:%s818]
                  %1060 = vst [vmem:[%s826 + $0x1d0] sm:%s818] %v1059
                  %v1061 = vld [vmem:[%s825 + $0x3a8] sm:%s818]
                  %1062 = vst [vmem:[%s826 + $0x1d4] sm:%s818] %v1061
                  %v1063 = vld [vmem:[%s825 + $0x3b0] sm:%s818]
                  %1064 = vst [vmem:[%s826 + $0x1d8] sm:%s818] %v1063
                  %v1065 = vld [vmem:[%s825 + $0x3b8] sm:%s818]
                  %1066 = vst [vmem:[%s826 + $0x1dc] sm:%s818] %v1065
                  %v1067 = vld [vmem:[%s825 + $0x3c0] sm:%s818]
                  %1068 = vst [vmem:[%s826 + $0x1e0] sm:%s818] %v1067
                  %v1069 = vld [vmem:[%s825 + $0x3c8] sm:%s818]
                  %1070 = vst [vmem:[%s826 + $0x1e4] sm:%s818] %v1069
                  %v1071 = vld [vmem:[%s825 + $0x3d0] sm:%s818]
                  %1072 = vst [vmem:[%s826 + $0x1e8] sm:%s818] %v1071
                  %v1073 = vld [vmem:[%s825 + $0x3d8] sm:%s818]
                  %1074 = vst [vmem:[%s826 + $0x1ec] sm:%s818] %v1073
                  %v1075 = vld [vmem:[%s825 + $0x3e0] sm:%s818]
                  %1076 = vst [vmem:[%s826 + $0x1f0] sm:%s818] %v1075
                  %v1077 = vld [vmem:[%s825 + $0x3e8] sm:%s818]
                  %1078 = vst [vmem:[%s826 + $0x1f4] sm:%s818] %v1077
                  %v1079 = vld [vmem:[%s825 + $0x3f0] sm:%s818]
                  %1080 = vst [vmem:[%s826 + $0x1f8] sm:%s818] %v1079
                  %v1081 = vld [vmem:[%s825 + $0x3f8] sm:%s818]
                  %1082 = vst [vmem:[%s826 + $0x1fc] sm:%s818] %v1081
                  %v1083 = vld [vmem:[%s825 + $0x400] sm:%s818]
                  %1084 = vst [vmem:[%s826 + $0x200] sm:%s818] %v1083
                  %v1085 = vld [vmem:[%s825 + $0x408] sm:%s818]
                  %1086 = vst [vmem:[%s826 + $0x204] sm:%s818] %v1085
                  %v1087 = vld [vmem:[%s825 + $0x410] sm:%s818]
                  %1088 = vst [vmem:[%s826 + $0x208] sm:%s818] %v1087
                  %v1089 = vld [vmem:[%s825 + $0x418] sm:%s818]
                  %1090 = vst [vmem:[%s826 + $0x20c] sm:%s818] %v1089
                  %v1091 = vld [vmem:[%s825 + $0x420] sm:%s818]
                  %1092 = vst [vmem:[%s826 + $0x210] sm:%s818] %v1091
                  %v1093 = vld [vmem:[%s825 + $0x428] sm:%s818]
                  %1094 = vst [vmem:[%s826 + $0x214] sm:%s818] %v1093
                  %v1095 = vld [vmem:[%s825 + $0x430] sm:%s818]
                  %1096 = vst [vmem:[%s826 + $0x218] sm:%s818] %v1095
                  %v1097 = vld [vmem:[%s825 + $0x438] sm:%s818]
                  %1098 = vst [vmem:[%s826 + $0x21c] sm:%s818] %v1097
                  %v1099 = vld [vmem:[%s825 + $0x440] sm:%s818]
                  %1100 = vst [vmem:[%s826 + $0x220] sm:%s818] %v1099
                  %v1101 = vld [vmem:[%s825 + $0x448] sm:%s818]
                  %1102 = vst [vmem:[%s826 + $0x224] sm:%s818] %v1101
                  %v1103 = vld [vmem:[%s825 + $0x450] sm:%s818]
                  %1104 = vst [vmem:[%s826 + $0x228] sm:%s818] %v1103
                  %v1105 = vld [vmem:[%s825 + $0x458] sm:%s818]
                  %1106 = vst [vmem:[%s826 + $0x22c] sm:%s818] %v1105
                  %v1107 = vld [vmem:[%s825 + $0x460] sm:%s818]
                  %1108 = vst [vmem:[%s826 + $0x230] sm:%s818] %v1107
                  %v1109 = vld [vmem:[%s825 + $0x468] sm:%s818]
                  %1110 = vst [vmem:[%s826 + $0x234] sm:%s818] %v1109
                  %v1111 = vld [vmem:[%s825 + $0x470] sm:%s818]
                  %1112 = vst [vmem:[%s826 + $0x238] sm:%s818] %v1111
                  %v1113 = vld [vmem:[%s825 + $0x478] sm:%s818]
                  %1114 = vst [vmem:[%s826 + $0x23c] sm:%s818] %v1113
                  %v1115 = vld [vmem:[%s825 + $0x480] sm:%s818]
                  %1116 = vst [vmem:[%s826 + $0x240] sm:%s818] %v1115
                  %v1117 = vld [vmem:[%s825 + $0x488] sm:%s818]
                  %1118 = vst [vmem:[%s826 + $0x244] sm:%s818] %v1117
                  %v1119 = vld [vmem:[%s825 + $0x490] sm:%s818]
                  %1120 = vst [vmem:[%s826 + $0x248] sm:%s818] %v1119
                  %v1121 = vld [vmem:[%s825 + $0x498] sm:%s818]
                  %1122 = vst [vmem:[%s826 + $0x24c] sm:%s818] %v1121
                  %v1123 = vld [vmem:[%s825 + $0x4a0] sm:%s818]
                  %1124 = vst [vmem:[%s826 + $0x250] sm:%s818] %v1123
                  %v1125 = vld [vmem:[%s825 + $0x4a8] sm:%s818]
                  %1126 = vst [vmem:[%s826 + $0x254] sm:%s818] %v1125
                  %v1127 = vld [vmem:[%s825 + $0x4b0] sm:%s818]
                  %1128 = vst [vmem:[%s826 + $0x258] sm:%s818] %v1127
                  %v1129 = vld [vmem:[%s825 + $0x4b8] sm:%s818]
                  %1130 = vst [vmem:[%s826 + $0x25c] sm:%s818] %v1129
                  %v1131 = vld [vmem:[%s825 + $0x4c0] sm:%s818]
                  %1132 = vst [vmem:[%s826 + $0x260] sm:%s818] %v1131
                  %v1133 = vld [vmem:[%s825 + $0x4c8] sm:%s818]
                  %1134 = vst [vmem:[%s826 + $0x264] sm:%s818] %v1133
                  %v1135 = vld [vmem:[%s825 + $0x4d0] sm:%s818]
                  %1136 = vst [vmem:[%s826 + $0x268] sm:%s818] %v1135
                  %v1137 = vld [vmem:[%s825 + $0x4d8] sm:%s818]
                  %1138 = vst [vmem:[%s826 + $0x26c] sm:%s818] %v1137
                  %v1139 = vld [vmem:[%s825 + $0x4e0] sm:%s818]
                  %1140 = vst [vmem:[%s826 + $0x270] sm:%s818] %v1139
                  %v1141 = vld [vmem:[%s825 + $0x4e8] sm:%s818]
                  %1142 = vst [vmem:[%s826 + $0x274] sm:%s818] %v1141
                  %v1143 = vld [vmem:[%s825 + $0x4f0] sm:%s818]
                  %1144 = vst [vmem:[%s826 + $0x278] sm:%s818] %v1143
                  %v1145 = vld [vmem:[%s825 + $0x4f8] sm:%s818]
                  %1146 = vst [vmem:[%s826 + $0x27c] sm:%s818] %v1145
                  %v1147 = vld [vmem:[%s825 + $0x500] sm:%s818]
                  %1148 = vst [vmem:[%s826 + $0x280] sm:%s818] %v1147
                  %v1149 = vld [vmem:[%s825 + $0x508] sm:%s818]
                  %1150 = vst [vmem:[%s826 + $0x284] sm:%s818] %v1149
                  %v1151 = vld [vmem:[%s825 + $0x510] sm:%s818]
                  %1152 = vst [vmem:[%s826 + $0x288] sm:%s818] %v1151
                  %v1153 = vld [vmem:[%s825 + $0x518] sm:%s818]
                  %1154 = vst [vmem:[%s826 + $0x28c] sm:%s818] %v1153
                  %v1155 = vld [vmem:[%s825 + $0x520] sm:%s818]
                  %1156 = vst [vmem:[%s826 + $0x290] sm:%s818] %v1155
                  %v1157 = vld [vmem:[%s825 + $0x528] sm:%s818]
                  %1158 = vst [vmem:[%s826 + $0x294] sm:%s818] %v1157
                  %v1159 = vld [vmem:[%s825 + $0x530] sm:%s818]
                  %1160 = vst [vmem:[%s826 + $0x298] sm:%s818] %v1159
                  %v1161 = vld [vmem:[%s825 + $0x538] sm:%s818]
                  %1162 = vst [vmem:[%s826 + $0x29c] sm:%s818] %v1161
                  %v1163 = vld [vmem:[%s825 + $0x540] sm:%s818]
                  %1164 = vst [vmem:[%s826 + $0x2a0] sm:%s818] %v1163
                  %v1165 = vld [vmem:[%s825 + $0x548] sm:%s818]
                  %1166 = vst [vmem:[%s826 + $0x2a4] sm:%s818] %v1165
                  %v1167 = vld [vmem:[%s825 + $0x550] sm:%s818]
                  %1168 = vst [vmem:[%s826 + $0x2a8] sm:%s818] %v1167
                  %v1169 = vld [vmem:[%s825 + $0x558] sm:%s818]
                  %1170 = vst [vmem:[%s826 + $0x2ac] sm:%s818] %v1169
                  %v1171 = vld [vmem:[%s825 + $0x560] sm:%s818]
                  %1172 = vst [vmem:[%s826 + $0x2b0] sm:%s818] %v1171
                  %v1173 = vld [vmem:[%s825 + $0x568] sm:%s818]
                  %1174 = vst [vmem:[%s826 + $0x2b4] sm:%s818] %v1173
                  %v1175 = vld [vmem:[%s825 + $0x570] sm:%s818]
                  %1176 = vst [vmem:[%s826 + $0x2b8] sm:%s818] %v1175
                  %v1177 = vld [vmem:[%s825 + $0x578] sm:%s818]
                  %1178 = vst [vmem:[%s826 + $0x2bc] sm:%s818] %v1177
                  %v1179 = vld [vmem:[%s825 + $0x580] sm:%s818]
                  %1180 = vst [vmem:[%s826 + $0x2c0] sm:%s818] %v1179
                  %v1181 = vld [vmem:[%s825 + $0x588] sm:%s818]
                  %1182 = vst [vmem:[%s826 + $0x2c4] sm:%s818] %v1181
                  %v1183 = vld [vmem:[%s825 + $0x590] sm:%s818]
                  %1184 = vst [vmem:[%s826 + $0x2c8] sm:%s818] %v1183
                  %v1185 = vld [vmem:[%s825 + $0x598] sm:%s818]
                  %1186 = vst [vmem:[%s826 + $0x2cc] sm:%s818] %v1185
                  %v1187 = vld [vmem:[%s825 + $0x5a0] sm:%s818]
                  %1188 = vst [vmem:[%s826 + $0x2d0] sm:%s818] %v1187
                  %v1189 = vld [vmem:[%s825 + $0x5a8] sm:%s818]
                  %1190 = vst [vmem:[%s826 + $0x2d4] sm:%s818] %v1189
                  %v1191 = vld [vmem:[%s825 + $0x5b0] sm:%s818]
                  %1192 = vst [vmem:[%s826 + $0x2d8] sm:%s818] %v1191
                  %v1193 = vld [vmem:[%s825 + $0x5b8] sm:%s818]
                  %1194 = vst [vmem:[%s826 + $0x2dc] sm:%s818] %v1193
                  %v1195 = vld [vmem:[%s825 + $0x5c0] sm:%s818]
                  %1196 = vst [vmem:[%s826 + $0x2e0] sm:%s818] %v1195
                  %v1197 = vld [vmem:[%s825 + $0x5c8] sm:%s818]
                  %1198 = vst [vmem:[%s826 + $0x2e4] sm:%s818] %v1197
                  %v1199 = vld [vmem:[%s825 + $0x5d0] sm:%s818]
                  %1200 = vst [vmem:[%s826 + $0x2e8] sm:%s818] %v1199
                  %v1201 = vld [vmem:[%s825 + $0x5d8] sm:%s818]
                  %1202 = vst [vmem:[%s826 + $0x2ec] sm:%s818] %v1201
                  %v1203 = vld [vmem:[%s825 + $0x5e0] sm:%s818]
                  %1204 = vst [vmem:[%s826 + $0x2f0] sm:%s818] %v1203
                  %v1205 = vld [vmem:[%s825 + $0x5e8] sm:%s818]
                  %1206 = vst [vmem:[%s826 + $0x2f4] sm:%s818] %v1205
                  %v1207 = vld [vmem:[%s825 + $0x5f0] sm:%s818]
                  %1208 = vst [vmem:[%s826 + $0x2f8] sm:%s818] %v1207
                  %v1209 = vld [vmem:[%s825 + $0x5f8] sm:%s818]
                  %1210 = vst [vmem:[%s826 + $0x2fc] sm:%s818] %v1209
                  %v1211 = vld [vmem:[%s825 + $0x600] sm:%s818]
                  %1212 = vst [vmem:[%s826 + $0x300] sm:%s818] %v1211
                  %v1213 = vld [vmem:[%s825 + $0x608] sm:%s818]
                  %1214 = vst [vmem:[%s826 + $0x304] sm:%s818] %v1213
                  %v1215 = vld [vmem:[%s825 + $0x610] sm:%s818]
                  %1216 = vst [vmem:[%s826 + $0x308] sm:%s818] %v1215
                  %v1217 = vld [vmem:[%s825 + $0x618] sm:%s818]
                  %1218 = vst [vmem:[%s826 + $0x30c] sm:%s818] %v1217
                  %v1219 = vld [vmem:[%s825 + $0x620] sm:%s818]
                  %1220 = vst [vmem:[%s826 + $0x310] sm:%s818] %v1219
                  %v1221 = vld [vmem:[%s825 + $0x628] sm:%s818]
                  %1222 = vst [vmem:[%s826 + $0x314] sm:%s818] %v1221
                  %v1223 = vld [vmem:[%s825 + $0x630] sm:%s818]
                  %1224 = vst [vmem:[%s826 + $0x318] sm:%s818] %v1223
                  %v1225 = vld [vmem:[%s825 + $0x638] sm:%s818]
                  %1226 = vst [vmem:[%s826 + $0x31c] sm:%s818] %v1225
                  %v1227 = vld [vmem:[%s825 + $0x640] sm:%s818]
                  %1228 = vst [vmem:[%s826 + $0x320] sm:%s818] %v1227
                  %v1229 = vld [vmem:[%s825 + $0x648] sm:%s818]
                  %1230 = vst [vmem:[%s826 + $0x324] sm:%s818] %v1229
                  %v1231 = vld [vmem:[%s825 + $0x650] sm:%s818]
                  %1232 = vst [vmem:[%s826 + $0x328] sm:%s818] %v1231
                  %v1233 = vld [vmem:[%s825 + $0x658] sm:%s818]
                  %1234 = vst [vmem:[%s826 + $0x32c] sm:%s818] %v1233
                  %v1235 = vld [vmem:[%s825 + $0x660] sm:%s818]
                  %1236 = vst [vmem:[%s826 + $0x330] sm:%s818] %v1235
                  %v1237 = vld [vmem:[%s825 + $0x668] sm:%s818]
                  %1238 = vst [vmem:[%s826 + $0x334] sm:%s818] %v1237
                  %v1239 = vld [vmem:[%s825 + $0x670] sm:%s818]
                  %1240 = vst [vmem:[%s826 + $0x338] sm:%s818] %v1239
                  %v1241 = vld [vmem:[%s825 + $0x678] sm:%s818]
                  %1242 = vst [vmem:[%s826 + $0x33c] sm:%s818] %v1241
                  %v1243 = vld [vmem:[%s825 + $0x680] sm:%s818]
                  %1244 = vst [vmem:[%s826 + $0x340] sm:%s818] %v1243
                  %v1245 = vld [vmem:[%s825 + $0x688] sm:%s818]
                  %1246 = vst [vmem:[%s826 + $0x344] sm:%s818] %v1245
                  %v1247 = vld [vmem:[%s825 + $0x690] sm:%s818]
                  %1248 = vst [vmem:[%s826 + $0x348] sm:%s818] %v1247
                  %v1249 = vld [vmem:[%s825 + $0x698] sm:%s818]
                  %1250 = vst [vmem:[%s826 + $0x34c] sm:%s818] %v1249
                  %v1251 = vld [vmem:[%s825 + $0x6a0] sm:%s818]
                  %1252 = vst [vmem:[%s826 + $0x350] sm:%s818] %v1251
                  %v1253 = vld [vmem:[%s825 + $0x6a8] sm:%s818]
                  %1254 = vst [vmem:[%s826 + $0x354] sm:%s818] %v1253
                  %v1255 = vld [vmem:[%s825 + $0x6b0] sm:%s818]
                  %1256 = vst [vmem:[%s826 + $0x358] sm:%s818] %v1255
                  %v1257 = vld [vmem:[%s825 + $0x6b8] sm:%s818]
                  %1258 = vst [vmem:[%s826 + $0x35c] sm:%s818] %v1257
                  %v1259 = vld [vmem:[%s825 + $0x6c0] sm:%s818]
                  %1260 = vst [vmem:[%s826 + $0x360] sm:%s818] %v1259
                  %v1261 = vld [vmem:[%s825 + $0x6c8] sm:%s818]
                  %1262 = vst [vmem:[%s826 + $0x364] sm:%s818] %v1261
                  %v1263 = vld [vmem:[%s825 + $0x6d0] sm:%s818]
                  %1264 = vst [vmem:[%s826 + $0x368] sm:%s818] %v1263
                  %v1265 = vld [vmem:[%s825 + $0x6d8] sm:%s818]
                  %1266 = vst [vmem:[%s826 + $0x36c] sm:%s818] %v1265
                  %v1267 = vld [vmem:[%s825 + $0x6e0] sm:%s818]
                  %1268 = vst [vmem:[%s826 + $0x370] sm:%s818] %v1267
                  %v1269 = vld [vmem:[%s825 + $0x6e8] sm:%s818]
                  %1270 = vst [vmem:[%s826 + $0x374] sm:%s818] %v1269
                  %v1271 = vld [vmem:[%s825 + $0x6f0] sm:%s818]
                  %1272 = vst [vmem:[%s826 + $0x378] sm:%s818] %v1271
                  %v1273 = vld [vmem:[%s825 + $0x6f8] sm:%s818]
                  %1274 = vst [vmem:[%s826 + $0x37c] sm:%s818] %v1273
                  %v1275 = vld [vmem:[%s825 + $0x700] sm:%s818]
                  %1276 = vst [vmem:[%s826 + $0x380] sm:%s818] %v1275
                  %v1277 = vld [vmem:[%s825 + $0x708] sm:%s818]
                  %1278 = vst [vmem:[%s826 + $0x384] sm:%s818] %v1277
                  %v1279 = vld [vmem:[%s825 + $0x710] sm:%s818]
                  %1280 = vst [vmem:[%s826 + $0x388] sm:%s818] %v1279
                  %v1281 = vld [vmem:[%s825 + $0x718] sm:%s818]
                  %1282 = vst [vmem:[%s826 + $0x38c] sm:%s818] %v1281
                  %v1283 = vld [vmem:[%s825 + $0x720] sm:%s818]
                  %1284 = vst [vmem:[%s826 + $0x390] sm:%s818] %v1283
                  %v1285 = vld [vmem:[%s825 + $0x728] sm:%s818]
                  %1286 = vst [vmem:[%s826 + $0x394] sm:%s818] %v1285
                  %v1287 = vld [vmem:[%s825 + $0x730] sm:%s818]
                  %1288 = vst [vmem:[%s826 + $0x398] sm:%s818] %v1287
                  %v1289 = vld [vmem:[%s825 + $0x738] sm:%s818]
                  %1290 = vst [vmem:[%s826 + $0x39c] sm:%s818] %v1289
                  %v1291 = vld [vmem:[%s825 + $0x740] sm:%s818]
                  %1292 = vst [vmem:[%s826 + $0x3a0] sm:%s818] %v1291
                  %v1293 = vld [vmem:[%s825 + $0x748] sm:%s818]
                  %1294 = vst [vmem:[%s826 + $0x3a4] sm:%s818] %v1293
                  %v1295 = vld [vmem:[%s825 + $0x750] sm:%s818]
                  %1296 = vst [vmem:[%s826 + $0x3a8] sm:%s818] %v1295
                  %v1297 = vld [vmem:[%s825 + $0x758] sm:%s818]
                  %1298 = vst [vmem:[%s826 + $0x3ac] sm:%s818] %v1297
                  %v1299 = vld [vmem:[%s825 + $0x760] sm:%s818]
                  %1300 = vst [vmem:[%s826 + $0x3b0] sm:%s818] %v1299
                  %v1301 = vld [vmem:[%s825 + $0x768] sm:%s818]
                  %1302 = vst [vmem:[%s826 + $0x3b4] sm:%s818] %v1301
                  %v1303 = vld [vmem:[%s825 + $0x770] sm:%s818]
                  %1304 = vst [vmem:[%s826 + $0x3b8] sm:%s818] %v1303
                  %v1305 = vld [vmem:[%s825 + $0x778] sm:%s818]
                  %1306 = vst [vmem:[%s826 + $0x3bc] sm:%s818] %v1305
                  %v1307 = vld [vmem:[%s825 + $0x780] sm:%s818]
                  %1308 = vst [vmem:[%s826 + $0x3c0] sm:%s818] %v1307
                  %v1309 = vld [vmem:[%s825 + $0x788] sm:%s818]
                  %1310 = vst [vmem:[%s826 + $0x3c4] sm:%s818] %v1309
                  %v1311 = vld [vmem:[%s825 + $0x790] sm:%s818]
                  %1312 = vst [vmem:[%s826 + $0x3c8] sm:%s818] %v1311
                  %v1313 = vld [vmem:[%s825 + $0x798] sm:%s818]
                  %1314 = vst [vmem:[%s826 + $0x3cc] sm:%s818] %v1313
                  %v1315 = vld [vmem:[%s825 + $0x7a0] sm:%s818]
                  %1316 = vst [vmem:[%s826 + $0x3d0] sm:%s818] %v1315
                  %v1317 = vld [vmem:[%s825 + $0x7a8] sm:%s818]
                  %1318 = vst [vmem:[%s826 + $0x3d4] sm:%s818] %v1317
                  %v1319 = vld [vmem:[%s825 + $0x7b0] sm:%s818]
                  %1320 = vst [vmem:[%s826 + $0x3d8] sm:%s818] %v1319
                  %v1321 = vld [vmem:[%s825 + $0x7b8] sm:%s818]
                  %1322 = vst [vmem:[%s826 + $0x3dc] sm:%s818] %v1321
                  %v1323 = vld [vmem:[%s825 + $0x7c0] sm:%s818]
                  %1324 = vst [vmem:[%s826 + $0x3e0] sm:%s818] %v1323
                  %v1325 = vld [vmem:[%s825 + $0x7c8] sm:%s818]
                  %1326 = vst [vmem:[%s826 + $0x3e4] sm:%s818] %v1325
                  %v1327 = vld [vmem:[%s825 + $0x7d0] sm:%s818]
                  %1328 = vst [vmem:[%s826 + $0x3e8] sm:%s818] %v1327
                  %v1329 = vld [vmem:[%s825 + $0x7d8] sm:%s818]
                  %1330 = vst [vmem:[%s826 + $0x3ec] sm:%s818] %v1329
                  %v1331 = vld [vmem:[%s825 + $0x7e0] sm:%s818]
                  %1332 = vst [vmem:[%s826 + $0x3f0] sm:%s818] %v1331
                  %v1333 = vld [vmem:[%s825 + $0x7e8] sm:%s818]
                  %1334 = vst [vmem:[%s826 + $0x3f4] sm:%s818] %v1333
                  %v1335 = vld [vmem:[%s825 + $0x7f0] sm:%s818]
                  %1336 = vst [vmem:[%s826 + $0x3f8] sm:%s818] %v1335
                  %v1337 = vld [vmem:[%s825 + $0x7f8] sm:%s818]
                  %1338 = vst [vmem:[%s826 + $0x3fc] sm:%s818] %v1337
                  %v1339 = vld [vmem:[%s825 + $0x800] sm:%s818]
                  %1340 = vst [vmem:[%s826 + $0x400] sm:%s818] %v1339
                  %v1341 = vld [vmem:[%s825 + $0x808] sm:%s818]
                  %1342 = vst [vmem:[%s826 + $0x404] sm:%s818] %v1341
                  %v1343 = vld [vmem:[%s825 + $0x810] sm:%s818]
                  %1344 = vst [vmem:[%s826 + $0x408] sm:%s818] %v1343
                  %v1345 = vld [vmem:[%s825 + $0x818] sm:%s818]
                  %1346 = vst [vmem:[%s826 + $0x40c] sm:%s818] %v1345
                  %v1347 = vld [vmem:[%s825 + $0x820] sm:%s818]
                  %1348 = vst [vmem:[%s826 + $0x410] sm:%s818] %v1347
                  %v1349 = vld [vmem:[%s825 + $0x828] sm:%s818]
                  %1350 = vst [vmem:[%s826 + $0x414] sm:%s818] %v1349
                  %v1351 = vld [vmem:[%s825 + $0x830] sm:%s818]
                  %1352 = vst [vmem:[%s826 + $0x418] sm:%s818] %v1351
                  %v1353 = vld [vmem:[%s825 + $0x838] sm:%s818]
                  %1354 = vst [vmem:[%s826 + $0x41c] sm:%s818] %v1353
                  %v1355 = vld [vmem:[%s825 + $0x840] sm:%s818]
                  %1356 = vst [vmem:[%s826 + $0x420] sm:%s818] %v1355
                  %v1357 = vld [vmem:[%s825 + $0x848] sm:%s818]
                  %1358 = vst [vmem:[%s826 + $0x424] sm:%s818] %v1357
                  %v1359 = vld [vmem:[%s825 + $0x850] sm:%s818]
                  %1360 = vst [vmem:[%s826 + $0x428] sm:%s818] %v1359
                  %v1361 = vld [vmem:[%s825 + $0x858] sm:%s818]
                  %1362 = vst [vmem:[%s826 + $0x42c] sm:%s818] %v1361
                  %v1363 = vld [vmem:[%s825 + $0x860] sm:%s818]
                  %1364 = vst [vmem:[%s826 + $0x430] sm:%s818] %v1363
                  %v1365 = vld [vmem:[%s825 + $0x868] sm:%s818]
                  %1366 = vst [vmem:[%s826 + $0x434] sm:%s818] %v1365
                  %v1367 = vld [vmem:[%s825 + $0x870] sm:%s818]
                  %1368 = vst [vmem:[%s826 + $0x438] sm:%s818] %v1367
                  %v1369 = vld [vmem:[%s825 + $0x878] sm:%s818]
                  %1370 = vst [vmem:[%s826 + $0x43c] sm:%s818] %v1369
                  %v1371 = vld [vmem:[%s825 + $0x880] sm:%s818]
                  %1372 = vst [vmem:[%s826 + $0x440] sm:%s818] %v1371
                  %v1373 = vld [vmem:[%s825 + $0x888] sm:%s818]
                  %1374 = vst [vmem:[%s826 + $0x444] sm:%s818] %v1373
                  %v1375 = vld [vmem:[%s825 + $0x890] sm:%s818]
                  %1376 = vst [vmem:[%s826 + $0x448] sm:%s818] %v1375
                  %v1377 = vld [vmem:[%s825 + $0x898] sm:%s818]
                  %1378 = vst [vmem:[%s826 + $0x44c] sm:%s818] %v1377
                  %v1379 = vld [vmem:[%s825 + $0x8a0] sm:%s818]
                  %1380 = vst [vmem:[%s826 + $0x450] sm:%s818] %v1379
                  %v1381 = vld [vmem:[%s825 + $0x8a8] sm:%s818]
                  %1382 = vst [vmem:[%s826 + $0x454] sm:%s818] %v1381
                  %v1383 = vld [vmem:[%s825 + $0x8b0] sm:%s818]
                  %1384 = vst [vmem:[%s826 + $0x458] sm:%s818] %v1383
                  %v1385 = vld [vmem:[%s825 + $0x8b8] sm:%s818]
                  %1386 = vst [vmem:[%s826 + $0x45c] sm:%s818] %v1385
                  %v1387 = vld [vmem:[%s825 + $0x8c0] sm:%s818]
                  %1388 = vst [vmem:[%s826 + $0x460] sm:%s818] %v1387
                  %v1389 = vld [vmem:[%s825 + $0x8c8] sm:%s818]
                  %1390 = vst [vmem:[%s826 + $0x464] sm:%s818] %v1389
                  %v1391 = vld [vmem:[%s825 + $0x8d0] sm:%s818]
                  %1392 = vst [vmem:[%s826 + $0x468] sm:%s818] %v1391
                  %v1393 = vld [vmem:[%s825 + $0x8d8] sm:%s818]
                  %1394 = vst [vmem:[%s826 + $0x46c] sm:%s818] %v1393
                  %v1395 = vld [vmem:[%s825 + $0x8e0] sm:%s818]
                  %1396 = vst [vmem:[%s826 + $0x470] sm:%s818] %v1395
                  %v1397 = vld [vmem:[%s825 + $0x8e8] sm:%s818]
                  %1398 = vst [vmem:[%s826 + $0x474] sm:%s818] %v1397
                  %v1399 = vld [vmem:[%s825 + $0x8f0] sm:%s818]
                  %1400 = vst [vmem:[%s826 + $0x478] sm:%s818] %v1399
                  %v1401 = vld [vmem:[%s825 + $0x8f8] sm:%s818]
                  %1402 = vst [vmem:[%s826 + $0x47c] sm:%s818] %v1401
                  %v1403 = vld [vmem:[%s825 + $0x900] sm:%s818]
                  %1404 = vst [vmem:[%s826 + $0x480] sm:%s818] %v1403
                  %v1405 = vld [vmem:[%s825 + $0x908] sm:%s818]
                  %1406 = vst [vmem:[%s826 + $0x484] sm:%s818] %v1405
                  %v1407 = vld [vmem:[%s825 + $0x910] sm:%s818]
                  %1408 = vst [vmem:[%s826 + $0x488] sm:%s818] %v1407
                  %v1409 = vld [vmem:[%s825 + $0x918] sm:%s818]
                  %1410 = vst [vmem:[%s826 + $0x48c] sm:%s818] %v1409
                  %v1411 = vld [vmem:[%s825 + $0x920] sm:%s818]
                  %1412 = vst [vmem:[%s826 + $0x490] sm:%s818] %v1411
                  %v1413 = vld [vmem:[%s825 + $0x928] sm:%s818]
                  %1414 = vst [vmem:[%s826 + $0x494] sm:%s818] %v1413
                  %v1415 = vld [vmem:[%s825 + $0x930] sm:%s818]
                  %1416 = vst [vmem:[%s826 + $0x498] sm:%s818] %v1415
                  %v1417 = vld [vmem:[%s825 + $0x938] sm:%s818]
                  %1418 = vst [vmem:[%s826 + $0x49c] sm:%s818] %v1417
                  %v1419 = vld [vmem:[%s825 + $0x940] sm:%s818]
                  %1420 = vst [vmem:[%s826 + $0x4a0] sm:%s818] %v1419
                  %v1421 = vld [vmem:[%s825 + $0x948] sm:%s818]
                  %1422 = vst [vmem:[%s826 + $0x4a4] sm:%s818] %v1421
                  %v1423 = vld [vmem:[%s825 + $0x950] sm:%s818]
                  %1424 = vst [vmem:[%s826 + $0x4a8] sm:%s818] %v1423
                  %v1425 = vld [vmem:[%s825 + $0x958] sm:%s818]
                  %1426 = vst [vmem:[%s826 + $0x4ac] sm:%s818] %v1425
                  %v1427 = vld [vmem:[%s825 + $0x960] sm:%s818]
                  %1428 = vst [vmem:[%s826 + $0x4b0] sm:%s818] %v1427
                  %v1429 = vld [vmem:[%s825 + $0x968] sm:%s818]
                  %1430 = vst [vmem:[%s826 + $0x4b4] sm:%s818] %v1429
                  %v1431 = vld [vmem:[%s825 + $0x970] sm:%s818]
                  %1432 = vst [vmem:[%s826 + $0x4b8] sm:%s818] %v1431
                  %v1433 = vld [vmem:[%s825 + $0x978] sm:%s818]
                  %1434 = vst [vmem:[%s826 + $0x4bc] sm:%s818] %v1433
                  %v1435 = vld [vmem:[%s825 + $0x980] sm:%s818]
                  %1436 = vst [vmem:[%s826 + $0x4c0] sm:%s818] %v1435
                  %v1437 = vld [vmem:[%s825 + $0x988] sm:%s818]
                  %1438 = vst [vmem:[%s826 + $0x4c4] sm:%s818] %v1437
                  %v1439 = vld [vmem:[%s825 + $0x990] sm:%s818]
                  %1440 = vst [vmem:[%s826 + $0x4c8] sm:%s818] %v1439
                  %v1441 = vld [vmem:[%s825 + $0x998] sm:%s818]
                  %1442 = vst [vmem:[%s826 + $0x4cc] sm:%s818] %v1441
                  %v1443 = vld [vmem:[%s825 + $0x9a0] sm:%s818]
                  %1444 = vst [vmem:[%s826 + $0x4d0] sm:%s818] %v1443
                  %v1445 = vld [vmem:[%s825 + $0x9a8] sm:%s818]
                  %1446 = vst [vmem:[%s826 + $0x4d4] sm:%s818] %v1445
                  %v1447 = vld [vmem:[%s825 + $0x9b0] sm:%s818]
                  %1448 = vst [vmem:[%s826 + $0x4d8] sm:%s818] %v1447
                  %v1449 = vld [vmem:[%s825 + $0x9b8] sm:%s818]
                  %1450 = vst [vmem:[%s826 + $0x4dc] sm:%s818] %v1449
                  %v1451 = vld [vmem:[%s825 + $0x9c0] sm:%s818]
                  %1452 = vst [vmem:[%s826 + $0x4e0] sm:%s818] %v1451
                  %v1453 = vld [vmem:[%s825 + $0x9c8] sm:%s818]
                  %1454 = vst [vmem:[%s826 + $0x4e4] sm:%s818] %v1453
                  %v1455 = vld [vmem:[%s825 + $0x9d0] sm:%s818]
                  %1456 = vst [vmem:[%s826 + $0x4e8] sm:%s818] %v1455
                  %v1457 = vld [vmem:[%s825 + $0x9d8] sm:%s818]
                  %1458 = vst [vmem:[%s826 + $0x4ec] sm:%s818] %v1457
                  %v1459 = vld [vmem:[%s825 + $0x9e0] sm:%s818]
                  %1460 = vst [vmem:[%s826 + $0x4f0] sm:%s818] %v1459
                  %v1461 = vld [vmem:[%s825 + $0x9e8] sm:%s818]
                  %1462 = vst [vmem:[%s826 + $0x4f4] sm:%s818] %v1461
                  %v1463 = vld [vmem:[%s825 + $0x9f0] sm:%s818]
                  %1464 = vst [vmem:[%s826 + $0x4f8] sm:%s818] %v1463
                  %v1465 = vld [vmem:[%s825 + $0x9f8] sm:%s818]
                  %1466 = vst [vmem:[%s826 + $0x4fc] sm:%s818] %v1465
                  %v1467 = vld [vmem:[%s825 + $0xa00] sm:%s818]
                  %1468 = vst [vmem:[%s826 + $0x500] sm:%s818] %v1467
                  %v1469 = vld [vmem:[%s825 + $0xa08] sm:%s818]
                  %1470 = vst [vmem:[%s826 + $0x504] sm:%s818] %v1469
                  %v1471 = vld [vmem:[%s825 + $0xa10] sm:%s818]
                  %1472 = vst [vmem:[%s826 + $0x508] sm:%s818] %v1471
                  %v1473 = vld [vmem:[%s825 + $0xa18] sm:%s818]
                  %1474 = vst [vmem:[%s826 + $0x50c] sm:%s818] %v1473
                $region59: #{blur_by_kernel.1} parent=46 // loop_footer
                  %s824 = sadd.s32 1, %s820
                $region60: #{blur_by_kernel.1} parent=46 // loop_footer_branch
                  %819 = sbr.rel target = $region56
                $region61: #{blur_by_kernel.1} parent=46 // loop_exit
                  _
              $region47: #{blur_by_kernel.1} parent=31 // pred_fallthru
                _
            $region32: #{blur_by_kernel.1} parent=27 // pred_fallthru
              _
            // Predicated region
            $region33: #{blur_by_kernel.1} parent=27 // pred_check
              _
            $region34: #{blur_by_kernel.1} parent=27 // pred_check_branch
              %148 = sbr.rel (0) target = $region36
            $region35: #{blur_by_kernel.1} parent=27 // pred_region
              %s150 = ssub.s32 16, 1
              loop: start=0, step=1, limit=1
              $region37: #{blur_by_kernel.1} parent=35 // loop_pre_header
                _
              $region38: #{blur_by_kernel.1} parent=35 // loop_header
                %s152 = sphi 0, %s156
                %p153 = scmp.ge.s32.totalorder %s152, 1
                %s157 = sphi %s142, %s142
                %s158 = sphi %s137, %s137
              $region39: #{blur_by_kernel.1} parent=35 // loop_header_branch
                %155 = sbr.rel (%p153) target = $region43
              $region40: #{blur_by_kernel.1} parent=35 // loop_body
                %v159 = vld [vmem:[%s157] sm:%s150]
                %160 = vst [vmem:[%s158] sm:%s150] %v159
                %v161 = vld [vmem:[%s157 + $0x8] sm:%s150]
                %162 = vst [vmem:[%s158 + $0x4] sm:%s150] %v161
                %v163 = vld [vmem:[%s157 + $0x10] sm:%s150]
                %164 = vst [vmem:[%s158 + $0x8] sm:%s150] %v163
                %v165 = vld [vmem:[%s157 + $0x18] sm:%s150]
                %166 = vst [vmem:[%s158 + $0xc] sm:%s150] %v165
                %v167 = vld [vmem:[%s157 + $0x20] sm:%s150]
                %168 = vst [vmem:[%s158 + $0x10] sm:%s150] %v167
                %v169 = vld [vmem:[%s157 + $0x28] sm:%s150]
                %170 = vst [vmem:[%s158 + $0x14] sm:%s150] %v169
                %v171 = vld [vmem:[%s157 + $0x30] sm:%s150]
                %172 = vst [vmem:[%s158 + $0x18] sm:%s150] %v171
                %v173 = vld [vmem:[%s157 + $0x38] sm:%s150]
                %174 = vst [vmem:[%s158 + $0x1c] sm:%s150] %v173
                %v175 = vld [vmem:[%s157 + $0x40] sm:%s150]
                %176 = vst [vmem:[%s158 + $0x20] sm:%s150] %v175
                %v177 = vld [vmem:[%s157 + $0x48] sm:%s150]
                %178 = vst [vmem:[%s158 + $0x24] sm:%s150] %v177
                %v179 = vld [vmem:[%s157 + $0x50] sm:%s150]
                %180 = vst [vmem:[%s158 + $0x28] sm:%s150] %v179
                %v181 = vld [vmem:[%s157 + $0x58] sm:%s150]
                %182 = vst [vmem:[%s158 + $0x2c] sm:%s150] %v181
                %v183 = vld [vmem:[%s157 + $0x60] sm:%s150]
                %184 = vst [vmem:[%s158 + $0x30] sm:%s150] %v183
                %v185 = vld [vmem:[%s157 + $0x68] sm:%s150]
                %186 = vst [vmem:[%s158 + $0x34] sm:%s150] %v185
                %v187 = vld [vmem:[%s157 + $0x70] sm:%s150]
                %188 = vst [vmem:[%s158 + $0x38] sm:%s150] %v187
                %v189 = vld [vmem:[%s157 + $0x78] sm:%s150]
                %190 = vst [vmem:[%s158 + $0x3c] sm:%s150] %v189
                %v191 = vld [vmem:[%s157 + $0x80] sm:%s150]
                %192 = vst [vmem:[%s158 + $0x40] sm:%s150] %v191
                %v193 = vld [vmem:[%s157 + $0x88] sm:%s150]
                %194 = vst [vmem:[%s158 + $0x44] sm:%s150] %v193
                %v195 = vld [vmem:[%s157 + $0x90] sm:%s150]
                %196 = vst [vmem:[%s158 + $0x48] sm:%s150] %v195
                %v197 = vld [vmem:[%s157 + $0x98] sm:%s150]
                %198 = vst [vmem:[%s158 + $0x4c] sm:%s150] %v197
                %v199 = vld [vmem:[%s157 + $0xa0] sm:%s150]
                %200 = vst [vmem:[%s158 + $0x50] sm:%s150] %v199
                %v201 = vld [vmem:[%s157 + $0xa8] sm:%s150]
                %202 = vst [vmem:[%s158 + $0x54] sm:%s150] %v201
                %v203 = vld [vmem:[%s157 + $0xb0] sm:%s150]
                %204 = vst [vmem:[%s158 + $0x58] sm:%s150] %v203
                %v205 = vld [vmem:[%s157 + $0xb8] sm:%s150]
                %206 = vst [vmem:[%s158 + $0x5c] sm:%s150] %v205
                %v207 = vld [vmem:[%s157 + $0xc0] sm:%s150]
                %208 = vst [vmem:[%s158 + $0x60] sm:%s150] %v207
                %v209 = vld [vmem:[%s157 + $0xc8] sm:%s150]
                %210 = vst [vmem:[%s158 + $0x64] sm:%s150] %v209
                %v211 = vld [vmem:[%s157 + $0xd0] sm:%s150]
                %212 = vst [vmem:[%s158 + $0x68] sm:%s150] %v211
                %v213 = vld [vmem:[%s157 + $0xd8] sm:%s150]
                %214 = vst [vmem:[%s158 + $0x6c] sm:%s150] %v213
                %v215 = vld [vmem:[%s157 + $0xe0] sm:%s150]
                %216 = vst [vmem:[%s158 + $0x70] sm:%s150] %v215
                %v217 = vld [vmem:[%s157 + $0xe8] sm:%s150]
                %218 = vst [vmem:[%s158 + $0x74] sm:%s150] %v217
                %v219 = vld [vmem:[%s157 + $0xf0] sm:%s150]
                %220 = vst [vmem:[%s158 + $0x78] sm:%s150] %v219
                %v221 = vld [vmem:[%s157 + $0xf8] sm:%s150]
                %222 = vst [vmem:[%s158 + $0x7c] sm:%s150] %v221
                %v223 = vld [vmem:[%s157 + $0x100] sm:%s150]
                %224 = vst [vmem:[%s158 + $0x80] sm:%s150] %v223
                %v225 = vld [vmem:[%s157 + $0x108] sm:%s150]
                %226 = vst [vmem:[%s158 + $0x84] sm:%s150] %v225
                %v227 = vld [vmem:[%s157 + $0x110] sm:%s150]
                %228 = vst [vmem:[%s158 + $0x88] sm:%s150] %v227
                %v229 = vld [vmem:[%s157 + $0x118] sm:%s150]
                %230 = vst [vmem:[%s158 + $0x8c] sm:%s150] %v229
                %v231 = vld [vmem:[%s157 + $0x120] sm:%s150]
                %232 = vst [vmem:[%s158 + $0x90] sm:%s150] %v231
                %v233 = vld [vmem:[%s157 + $0x128] sm:%s150]
                %234 = vst [vmem:[%s158 + $0x94] sm:%s150] %v233
                %v235 = vld [vmem:[%s157 + $0x130] sm:%s150]
                %236 = vst [vmem:[%s158 + $0x98] sm:%s150] %v235
                %v237 = vld [vmem:[%s157 + $0x138] sm:%s150]
                %238 = vst [vmem:[%s158 + $0x9c] sm:%s150] %v237
                %v239 = vld [vmem:[%s157 + $0x140] sm:%s150]
                %240 = vst [vmem:[%s158 + $0xa0] sm:%s150] %v239
                %v241 = vld [vmem:[%s157 + $0x148] sm:%s150]
                %242 = vst [vmem:[%s158 + $0xa4] sm:%s150] %v241
                %v243 = vld [vmem:[%s157 + $0x150] sm:%s150]
                %244 = vst [vmem:[%s158 + $0xa8] sm:%s150] %v243
                %v245 = vld [vmem:[%s157 + $0x158] sm:%s150]
                %246 = vst [vmem:[%s158 + $0xac] sm:%s150] %v245
                %v247 = vld [vmem:[%s157 + $0x160] sm:%s150]
                %248 = vst [vmem:[%s158 + $0xb0] sm:%s150] %v247
                %v249 = vld [vmem:[%s157 + $0x168] sm:%s150]
                %250 = vst [vmem:[%s158 + $0xb4] sm:%s150] %v249
                %v251 = vld [vmem:[%s157 + $0x170] sm:%s150]
                %252 = vst [vmem:[%s158 + $0xb8] sm:%s150] %v251
                %v253 = vld [vmem:[%s157 + $0x178] sm:%s150]
                %254 = vst [vmem:[%s158 + $0xbc] sm:%s150] %v253
                %v255 = vld [vmem:[%s157 + $0x180] sm:%s150]
                %256 = vst [vmem:[%s158 + $0xc0] sm:%s150] %v255
                %v257 = vld [vmem:[%s157 + $0x188] sm:%s150]
                %258 = vst [vmem:[%s158 + $0xc4] sm:%s150] %v257
                %v259 = vld [vmem:[%s157 + $0x190] sm:%s150]
                %260 = vst [vmem:[%s158 + $0xc8] sm:%s150] %v259
                %v261 = vld [vmem:[%s157 + $0x198] sm:%s150]
                %262 = vst [vmem:[%s158 + $0xcc] sm:%s150] %v261
                %v263 = vld [vmem:[%s157 + $0x1a0] sm:%s150]
                %264 = vst [vmem:[%s158 + $0xd0] sm:%s150] %v263
                %v265 = vld [vmem:[%s157 + $0x1a8] sm:%s150]
                %266 = vst [vmem:[%s158 + $0xd4] sm:%s150] %v265
                %v267 = vld [vmem:[%s157 + $0x1b0] sm:%s150]
                %268 = vst [vmem:[%s158 + $0xd8] sm:%s150] %v267
                %v269 = vld [vmem:[%s157 + $0x1b8] sm:%s150]
                %270 = vst [vmem:[%s158 + $0xdc] sm:%s150] %v269
                %v271 = vld [vmem:[%s157 + $0x1c0] sm:%s150]
                %272 = vst [vmem:[%s158 + $0xe0] sm:%s150] %v271
                %v273 = vld [vmem:[%s157 + $0x1c8] sm:%s150]
                %274 = vst [vmem:[%s158 + $0xe4] sm:%s150] %v273
                %v275 = vld [vmem:[%s157 + $0x1d0] sm:%s150]
                %276 = vst [vmem:[%s158 + $0xe8] sm:%s150] %v275
                %v277 = vld [vmem:[%s157 + $0x1d8] sm:%s150]
                %278 = vst [vmem:[%s158 + $0xec] sm:%s150] %v277
                %v279 = vld [vmem:[%s157 + $0x1e0] sm:%s150]
                %280 = vst [vmem:[%s158 + $0xf0] sm:%s150] %v279
                %v281 = vld [vmem:[%s157 + $0x1e8] sm:%s150]
                %282 = vst [vmem:[%s158 + $0xf4] sm:%s150] %v281
                %v283 = vld [vmem:[%s157 + $0x1f0] sm:%s150]
                %284 = vst [vmem:[%s158 + $0xf8] sm:%s150] %v283
                %v285 = vld [vmem:[%s157 + $0x1f8] sm:%s150]
                %286 = vst [vmem:[%s158 + $0xfc] sm:%s150] %v285
                %v287 = vld [vmem:[%s157 + $0x200] sm:%s150]
                %288 = vst [vmem:[%s158 + $0x100] sm:%s150] %v287
                %v289 = vld [vmem:[%s157 + $0x208] sm:%s150]
                %290 = vst [vmem:[%s158 + $0x104] sm:%s150] %v289
                %v291 = vld [vmem:[%s157 + $0x210] sm:%s150]
                %292 = vst [vmem:[%s158 + $0x108] sm:%s150] %v291
                %v293 = vld [vmem:[%s157 + $0x218] sm:%s150]
                %294 = vst [vmem:[%s158 + $0x10c] sm:%s150] %v293
                %v295 = vld [vmem:[%s157 + $0x220] sm:%s150]
                %296 = vst [vmem:[%s158 + $0x110] sm:%s150] %v295
                %v297 = vld [vmem:[%s157 + $0x228] sm:%s150]
                %298 = vst [vmem:[%s158 + $0x114] sm:%s150] %v297
                %v299 = vld [vmem:[%s157 + $0x230] sm:%s150]
                %300 = vst [vmem:[%s158 + $0x118] sm:%s150] %v299
                %v301 = vld [vmem:[%s157 + $0x238] sm:%s150]
                %302 = vst [vmem:[%s158 + $0x11c] sm:%s150] %v301
                %v303 = vld [vmem:[%s157 + $0x240] sm:%s150]
                %304 = vst [vmem:[%s158 + $0x120] sm:%s150] %v303
                %v305 = vld [vmem:[%s157 + $0x248] sm:%s150]
                %306 = vst [vmem:[%s158 + $0x124] sm:%s150] %v305
                %v307 = vld [vmem:[%s157 + $0x250] sm:%s150]
                %308 = vst [vmem:[%s158 + $0x128] sm:%s150] %v307
                %v309 = vld [vmem:[%s157 + $0x258] sm:%s150]
                %310 = vst [vmem:[%s158 + $0x12c] sm:%s150] %v309
                %v311 = vld [vmem:[%s157 + $0x260] sm:%s150]
                %312 = vst [vmem:[%s158 + $0x130] sm:%s150] %v311
                %v313 = vld [vmem:[%s157 + $0x268] sm:%s150]
                %314 = vst [vmem:[%s158 + $0x134] sm:%s150] %v313
                %v315 = vld [vmem:[%s157 + $0x270] sm:%s150]
                %316 = vst [vmem:[%s158 + $0x138] sm:%s150] %v315
                %v317 = vld [vmem:[%s157 + $0x278] sm:%s150]
                %318 = vst [vmem:[%s158 + $0x13c] sm:%s150] %v317
                %v319 = vld [vmem:[%s157 + $0x280] sm:%s150]
                %320 = vst [vmem:[%s158 + $0x140] sm:%s150] %v319
                %v321 = vld [vmem:[%s157 + $0x288] sm:%s150]
                %322 = vst [vmem:[%s158 + $0x144] sm:%s150] %v321
                %v323 = vld [vmem:[%s157 + $0x290] sm:%s150]
                %324 = vst [vmem:[%s158 + $0x148] sm:%s150] %v323
                %v325 = vld [vmem:[%s157 + $0x298] sm:%s150]
                %326 = vst [vmem:[%s158 + $0x14c] sm:%s150] %v325
                %v327 = vld [vmem:[%s157 + $0x2a0] sm:%s150]
                %328 = vst [vmem:[%s158 + $0x150] sm:%s150] %v327
                %v329 = vld [vmem:[%s157 + $0x2a8] sm:%s150]
                %330 = vst [vmem:[%s158 + $0x154] sm:%s150] %v329
                %v331 = vld [vmem:[%s157 + $0x2b0] sm:%s150]
                %332 = vst [vmem:[%s158 + $0x158] sm:%s150] %v331
                %v333 = vld [vmem:[%s157 + $0x2b8] sm:%s150]
                %334 = vst [vmem:[%s158 + $0x15c] sm:%s150] %v333
                %v335 = vld [vmem:[%s157 + $0x2c0] sm:%s150]
                %336 = vst [vmem:[%s158 + $0x160] sm:%s150] %v335
                %v337 = vld [vmem:[%s157 + $0x2c8] sm:%s150]
                %338 = vst [vmem:[%s158 + $0x164] sm:%s150] %v337
                %v339 = vld [vmem:[%s157 + $0x2d0] sm:%s150]
                %340 = vst [vmem:[%s158 + $0x168] sm:%s150] %v339
                %v341 = vld [vmem:[%s157 + $0x2d8] sm:%s150]
                %342 = vst [vmem:[%s158 + $0x16c] sm:%s150] %v341
                %v343 = vld [vmem:[%s157 + $0x2e0] sm:%s150]
                %344 = vst [vmem:[%s158 + $0x170] sm:%s150] %v343
                %v345 = vld [vmem:[%s157 + $0x2e8] sm:%s150]
                %346 = vst [vmem:[%s158 + $0x174] sm:%s150] %v345
                %v347 = vld [vmem:[%s157 + $0x2f0] sm:%s150]
                %348 = vst [vmem:[%s158 + $0x178] sm:%s150] %v347
                %v349 = vld [vmem:[%s157 + $0x2f8] sm:%s150]
                %350 = vst [vmem:[%s158 + $0x17c] sm:%s150] %v349
                %v351 = vld [vmem:[%s157 + $0x300] sm:%s150]
                %352 = vst [vmem:[%s158 + $0x180] sm:%s150] %v351
                %v353 = vld [vmem:[%s157 + $0x308] sm:%s150]
                %354 = vst [vmem:[%s158 + $0x184] sm:%s150] %v353
                %v355 = vld [vmem:[%s157 + $0x310] sm:%s150]
                %356 = vst [vmem:[%s158 + $0x188] sm:%s150] %v355
                %v357 = vld [vmem:[%s157 + $0x318] sm:%s150]
                %358 = vst [vmem:[%s158 + $0x18c] sm:%s150] %v357
                %v359 = vld [vmem:[%s157 + $0x320] sm:%s150]
                %360 = vst [vmem:[%s158 + $0x190] sm:%s150] %v359
                %v361 = vld [vmem:[%s157 + $0x328] sm:%s150]
                %362 = vst [vmem:[%s158 + $0x194] sm:%s150] %v361
                %v363 = vld [vmem:[%s157 + $0x330] sm:%s150]
                %364 = vst [vmem:[%s158 + $0x198] sm:%s150] %v363
                %v365 = vld [vmem:[%s157 + $0x338] sm:%s150]
                %366 = vst [vmem:[%s158 + $0x19c] sm:%s150] %v365
                %v367 = vld [vmem:[%s157 + $0x340] sm:%s150]
                %368 = vst [vmem:[%s158 + $0x1a0] sm:%s150] %v367
                %v369 = vld [vmem:[%s157 + $0x348] sm:%s150]
                %370 = vst [vmem:[%s158 + $0x1a4] sm:%s150] %v369
                %v371 = vld [vmem:[%s157 + $0x350] sm:%s150]
                %372 = vst [vmem:[%s158 + $0x1a8] sm:%s150] %v371
                %v373 = vld [vmem:[%s157 + $0x358] sm:%s150]
                %374 = vst [vmem:[%s158 + $0x1ac] sm:%s150] %v373
                %v375 = vld [vmem:[%s157 + $0x360] sm:%s150]
                %376 = vst [vmem:[%s158 + $0x1b0] sm:%s150] %v375
                %v377 = vld [vmem:[%s157 + $0x368] sm:%s150]
                %378 = vst [vmem:[%s158 + $0x1b4] sm:%s150] %v377
                %v379 = vld [vmem:[%s157 + $0x370] sm:%s150]
                %380 = vst [vmem:[%s158 + $0x1b8] sm:%s150] %v379
                %v381 = vld [vmem:[%s157 + $0x378] sm:%s150]
                %382 = vst [vmem:[%s158 + $0x1bc] sm:%s150] %v381
                %v383 = vld [vmem:[%s157 + $0x380] sm:%s150]
                %384 = vst [vmem:[%s158 + $0x1c0] sm:%s150] %v383
                %v385 = vld [vmem:[%s157 + $0x388] sm:%s150]
                %386 = vst [vmem:[%s158 + $0x1c4] sm:%s150] %v385
                %v387 = vld [vmem:[%s157 + $0x390] sm:%s150]
                %388 = vst [vmem:[%s158 + $0x1c8] sm:%s150] %v387
                %v389 = vld [vmem:[%s157 + $0x398] sm:%s150]
                %390 = vst [vmem:[%s158 + $0x1cc] sm:%s150] %v389
                %v391 = vld [vmem:[%s157 + $0x3a0] sm:%s150]
                %392 = vst [vmem:[%s158 + $0x1d0] sm:%s150] %v391
                %v393 = vld [vmem:[%s157 + $0x3a8] sm:%s150]
                %394 = vst [vmem:[%s158 + $0x1d4] sm:%s150] %v393
                %v395 = vld [vmem:[%s157 + $0x3b0] sm:%s150]
                %396 = vst [vmem:[%s158 + $0x1d8] sm:%s150] %v395
                %v397 = vld [vmem:[%s157 + $0x3b8] sm:%s150]
                %398 = vst [vmem:[%s158 + $0x1dc] sm:%s150] %v397
                %v399 = vld [vmem:[%s157 + $0x3c0] sm:%s150]
                %400 = vst [vmem:[%s158 + $0x1e0] sm:%s150] %v399
                %v401 = vld [vmem:[%s157 + $0x3c8] sm:%s150]
                %402 = vst [vmem:[%s158 + $0x1e4] sm:%s150] %v401
                %v403 = vld [vmem:[%s157 + $0x3d0] sm:%s150]
                %404 = vst [vmem:[%s158 + $0x1e8] sm:%s150] %v403
                %v405 = vld [vmem:[%s157 + $0x3d8] sm:%s150]
                %406 = vst [vmem:[%s158 + $0x1ec] sm:%s150] %v405
                %v407 = vld [vmem:[%s157 + $0x3e0] sm:%s150]
                %408 = vst [vmem:[%s158 + $0x1f0] sm:%s150] %v407
                %v409 = vld [vmem:[%s157 + $0x3e8] sm:%s150]
                %410 = vst [vmem:[%s158 + $0x1f4] sm:%s150] %v409
                %v411 = vld [vmem:[%s157 + $0x3f0] sm:%s150]
                %412 = vst [vmem:[%s158 + $0x1f8] sm:%s150] %v411
                %v413 = vld [vmem:[%s157 + $0x3f8] sm:%s150]
                %414 = vst [vmem:[%s158 + $0x1fc] sm:%s150] %v413
                %v415 = vld [vmem:[%s157 + $0x400] sm:%s150]
                %416 = vst [vmem:[%s158 + $0x200] sm:%s150] %v415
                %v417 = vld [vmem:[%s157 + $0x408] sm:%s150]
                %418 = vst [vmem:[%s158 + $0x204] sm:%s150] %v417
                %v419 = vld [vmem:[%s157 + $0x410] sm:%s150]
                %420 = vst [vmem:[%s158 + $0x208] sm:%s150] %v419
                %v421 = vld [vmem:[%s157 + $0x418] sm:%s150]
                %422 = vst [vmem:[%s158 + $0x20c] sm:%s150] %v421
                %v423 = vld [vmem:[%s157 + $0x420] sm:%s150]
                %424 = vst [vmem:[%s158 + $0x210] sm:%s150] %v423
                %v425 = vld [vmem:[%s157 + $0x428] sm:%s150]
                %426 = vst [vmem:[%s158 + $0x214] sm:%s150] %v425
                %v427 = vld [vmem:[%s157 + $0x430] sm:%s150]
                %428 = vst [vmem:[%s158 + $0x218] sm:%s150] %v427
                %v429 = vld [vmem:[%s157 + $0x438] sm:%s150]
                %430 = vst [vmem:[%s158 + $0x21c] sm:%s150] %v429
                %v431 = vld [vmem:[%s157 + $0x440] sm:%s150]
                %432 = vst [vmem:[%s158 + $0x220] sm:%s150] %v431
                %v433 = vld [vmem:[%s157 + $0x448] sm:%s150]
                %434 = vst [vmem:[%s158 + $0x224] sm:%s150] %v433
                %v435 = vld [vmem:[%s157 + $0x450] sm:%s150]
                %436 = vst [vmem:[%s158 + $0x228] sm:%s150] %v435
                %v437 = vld [vmem:[%s157 + $0x458] sm:%s150]
                %438 = vst [vmem:[%s158 + $0x22c] sm:%s150] %v437
                %v439 = vld [vmem:[%s157 + $0x460] sm:%s150]
                %440 = vst [vmem:[%s158 + $0x230] sm:%s150] %v439
                %v441 = vld [vmem:[%s157 + $0x468] sm:%s150]
                %442 = vst [vmem:[%s158 + $0x234] sm:%s150] %v441
                %v443 = vld [vmem:[%s157 + $0x470] sm:%s150]
                %444 = vst [vmem:[%s158 + $0x238] sm:%s150] %v443
                %v445 = vld [vmem:[%s157 + $0x478] sm:%s150]
                %446 = vst [vmem:[%s158 + $0x23c] sm:%s150] %v445
                %v447 = vld [vmem:[%s157 + $0x480] sm:%s150]
                %448 = vst [vmem:[%s158 + $0x240] sm:%s150] %v447
                %v449 = vld [vmem:[%s157 + $0x488] sm:%s150]
                %450 = vst [vmem:[%s158 + $0x244] sm:%s150] %v449
                %v451 = vld [vmem:[%s157 + $0x490] sm:%s150]
                %452 = vst [vmem:[%s158 + $0x248] sm:%s150] %v451
                %v453 = vld [vmem:[%s157 + $0x498] sm:%s150]
                %454 = vst [vmem:[%s158 + $0x24c] sm:%s150] %v453
                %v455 = vld [vmem:[%s157 + $0x4a0] sm:%s150]
                %456 = vst [vmem:[%s158 + $0x250] sm:%s150] %v455
                %v457 = vld [vmem:[%s157 + $0x4a8] sm:%s150]
                %458 = vst [vmem:[%s158 + $0x254] sm:%s150] %v457
                %v459 = vld [vmem:[%s157 + $0x4b0] sm:%s150]
                %460 = vst [vmem:[%s158 + $0x258] sm:%s150] %v459
                %v461 = vld [vmem:[%s157 + $0x4b8] sm:%s150]
                %462 = vst [vmem:[%s158 + $0x25c] sm:%s150] %v461
                %v463 = vld [vmem:[%s157 + $0x4c0] sm:%s150]
                %464 = vst [vmem:[%s158 + $0x260] sm:%s150] %v463
                %v465 = vld [vmem:[%s157 + $0x4c8] sm:%s150]
                %466 = vst [vmem:[%s158 + $0x264] sm:%s150] %v465
                %v467 = vld [vmem:[%s157 + $0x4d0] sm:%s150]
                %468 = vst [vmem:[%s158 + $0x268] sm:%s150] %v467
                %v469 = vld [vmem:[%s157 + $0x4d8] sm:%s150]
                %470 = vst [vmem:[%s158 + $0x26c] sm:%s150] %v469
                %v471 = vld [vmem:[%s157 + $0x4e0] sm:%s150]
                %472 = vst [vmem:[%s158 + $0x270] sm:%s150] %v471
                %v473 = vld [vmem:[%s157 + $0x4e8] sm:%s150]
                %474 = vst [vmem:[%s158 + $0x274] sm:%s150] %v473
                %v475 = vld [vmem:[%s157 + $0x4f0] sm:%s150]
                %476 = vst [vmem:[%s158 + $0x278] sm:%s150] %v475
                %v477 = vld [vmem:[%s157 + $0x4f8] sm:%s150]
                %478 = vst [vmem:[%s158 + $0x27c] sm:%s150] %v477
                %v479 = vld [vmem:[%s157 + $0x500] sm:%s150]
                %480 = vst [vmem:[%s158 + $0x280] sm:%s150] %v479
                %v481 = vld [vmem:[%s157 + $0x508] sm:%s150]
                %482 = vst [vmem:[%s158 + $0x284] sm:%s150] %v481
                %v483 = vld [vmem:[%s157 + $0x510] sm:%s150]
                %484 = vst [vmem:[%s158 + $0x288] sm:%s150] %v483
                %v485 = vld [vmem:[%s157 + $0x518] sm:%s150]
                %486 = vst [vmem:[%s158 + $0x28c] sm:%s150] %v485
                %v487 = vld [vmem:[%s157 + $0x520] sm:%s150]
                %488 = vst [vmem:[%s158 + $0x290] sm:%s150] %v487
                %v489 = vld [vmem:[%s157 + $0x528] sm:%s150]
                %490 = vst [vmem:[%s158 + $0x294] sm:%s150] %v489
                %v491 = vld [vmem:[%s157 + $0x530] sm:%s150]
                %492 = vst [vmem:[%s158 + $0x298] sm:%s150] %v491
                %v493 = vld [vmem:[%s157 + $0x538] sm:%s150]
                %494 = vst [vmem:[%s158 + $0x29c] sm:%s150] %v493
                %v495 = vld [vmem:[%s157 + $0x540] sm:%s150]
                %496 = vst [vmem:[%s158 + $0x2a0] sm:%s150] %v495
                %v497 = vld [vmem:[%s157 + $0x548] sm:%s150]
                %498 = vst [vmem:[%s158 + $0x2a4] sm:%s150] %v497
                %v499 = vld [vmem:[%s157 + $0x550] sm:%s150]
                %500 = vst [vmem:[%s158 + $0x2a8] sm:%s150] %v499
                %v501 = vld [vmem:[%s157 + $0x558] sm:%s150]
                %502 = vst [vmem:[%s158 + $0x2ac] sm:%s150] %v501
                %v503 = vld [vmem:[%s157 + $0x560] sm:%s150]
                %504 = vst [vmem:[%s158 + $0x2b0] sm:%s150] %v503
                %v505 = vld [vmem:[%s157 + $0x568] sm:%s150]
                %506 = vst [vmem:[%s158 + $0x2b4] sm:%s150] %v505
                %v507 = vld [vmem:[%s157 + $0x570] sm:%s150]
                %508 = vst [vmem:[%s158 + $0x2b8] sm:%s150] %v507
                %v509 = vld [vmem:[%s157 + $0x578] sm:%s150]
                %510 = vst [vmem:[%s158 + $0x2bc] sm:%s150] %v509
                %v511 = vld [vmem:[%s157 + $0x580] sm:%s150]
                %512 = vst [vmem:[%s158 + $0x2c0] sm:%s150] %v511
                %v513 = vld [vmem:[%s157 + $0x588] sm:%s150]
                %514 = vst [vmem:[%s158 + $0x2c4] sm:%s150] %v513
                %v515 = vld [vmem:[%s157 + $0x590] sm:%s150]
                %516 = vst [vmem:[%s158 + $0x2c8] sm:%s150] %v515
                %v517 = vld [vmem:[%s157 + $0x598] sm:%s150]
                %518 = vst [vmem:[%s158 + $0x2cc] sm:%s150] %v517
                %v519 = vld [vmem:[%s157 + $0x5a0] sm:%s150]
                %520 = vst [vmem:[%s158 + $0x2d0] sm:%s150] %v519
                %v521 = vld [vmem:[%s157 + $0x5a8] sm:%s150]
                %522 = vst [vmem:[%s158 + $0x2d4] sm:%s150] %v521
                %v523 = vld [vmem:[%s157 + $0x5b0] sm:%s150]
                %524 = vst [vmem:[%s158 + $0x2d8] sm:%s150] %v523
                %v525 = vld [vmem:[%s157 + $0x5b8] sm:%s150]
                %526 = vst [vmem:[%s158 + $0x2dc] sm:%s150] %v525
                %v527 = vld [vmem:[%s157 + $0x5c0] sm:%s150]
                %528 = vst [vmem:[%s158 + $0x2e0] sm:%s150] %v527
                %v529 = vld [vmem:[%s157 + $0x5c8] sm:%s150]
                %530 = vst [vmem:[%s158 + $0x2e4] sm:%s150] %v529
                %v531 = vld [vmem:[%s157 + $0x5d0] sm:%s150]
                %532 = vst [vmem:[%s158 + $0x2e8] sm:%s150] %v531
                %v533 = vld [vmem:[%s157 + $0x5d8] sm:%s150]
                %534 = vst [vmem:[%s158 + $0x2ec] sm:%s150] %v533
                %v535 = vld [vmem:[%s157 + $0x5e0] sm:%s150]
                %536 = vst [vmem:[%s158 + $0x2f0] sm:%s150] %v535
                %v537 = vld [vmem:[%s157 + $0x5e8] sm:%s150]
                %538 = vst [vmem:[%s158 + $0x2f4] sm:%s150] %v537
                %v539 = vld [vmem:[%s157 + $0x5f0] sm:%s150]
                %540 = vst [vmem:[%s158 + $0x2f8] sm:%s150] %v539
                %v541 = vld [vmem:[%s157 + $0x5f8] sm:%s150]
                %542 = vst [vmem:[%s158 + $0x2fc] sm:%s150] %v541
                %v543 = vld [vmem:[%s157 + $0x600] sm:%s150]
                %544 = vst [vmem:[%s158 + $0x300] sm:%s150] %v543
                %v545 = vld [vmem:[%s157 + $0x608] sm:%s150]
                %546 = vst [vmem:[%s158 + $0x304] sm:%s150] %v545
                %v547 = vld [vmem:[%s157 + $0x610] sm:%s150]
                %548 = vst [vmem:[%s158 + $0x308] sm:%s150] %v547
                %v549 = vld [vmem:[%s157 + $0x618] sm:%s150]
                %550 = vst [vmem:[%s158 + $0x30c] sm:%s150] %v549
                %v551 = vld [vmem:[%s157 + $0x620] sm:%s150]
                %552 = vst [vmem:[%s158 + $0x310] sm:%s150] %v551
                %v553 = vld [vmem:[%s157 + $0x628] sm:%s150]
                %554 = vst [vmem:[%s158 + $0x314] sm:%s150] %v553
                %v555 = vld [vmem:[%s157 + $0x630] sm:%s150]
                %556 = vst [vmem:[%s158 + $0x318] sm:%s150] %v555
                %v557 = vld [vmem:[%s157 + $0x638] sm:%s150]
                %558 = vst [vmem:[%s158 + $0x31c] sm:%s150] %v557
                %v559 = vld [vmem:[%s157 + $0x640] sm:%s150]
                %560 = vst [vmem:[%s158 + $0x320] sm:%s150] %v559
                %v561 = vld [vmem:[%s157 + $0x648] sm:%s150]
                %562 = vst [vmem:[%s158 + $0x324] sm:%s150] %v561
                %v563 = vld [vmem:[%s157 + $0x650] sm:%s150]
                %564 = vst [vmem:[%s158 + $0x328] sm:%s150] %v563
                %v565 = vld [vmem:[%s157 + $0x658] sm:%s150]
                %566 = vst [vmem:[%s158 + $0x32c] sm:%s150] %v565
                %v567 = vld [vmem:[%s157 + $0x660] sm:%s150]
                %568 = vst [vmem:[%s158 + $0x330] sm:%s150] %v567
                %v569 = vld [vmem:[%s157 + $0x668] sm:%s150]
                %570 = vst [vmem:[%s158 + $0x334] sm:%s150] %v569
                %v571 = vld [vmem:[%s157 + $0x670] sm:%s150]
                %572 = vst [vmem:[%s158 + $0x338] sm:%s150] %v571
                %v573 = vld [vmem:[%s157 + $0x678] sm:%s150]
                %574 = vst [vmem:[%s158 + $0x33c] sm:%s150] %v573
                %v575 = vld [vmem:[%s157 + $0x680] sm:%s150]
                %576 = vst [vmem:[%s158 + $0x340] sm:%s150] %v575
                %v577 = vld [vmem:[%s157 + $0x688] sm:%s150]
                %578 = vst [vmem:[%s158 + $0x344] sm:%s150] %v577
                %v579 = vld [vmem:[%s157 + $0x690] sm:%s150]
                %580 = vst [vmem:[%s158 + $0x348] sm:%s150] %v579
                %v581 = vld [vmem:[%s157 + $0x698] sm:%s150]
                %582 = vst [vmem:[%s158 + $0x34c] sm:%s150] %v581
                %v583 = vld [vmem:[%s157 + $0x6a0] sm:%s150]
                %584 = vst [vmem:[%s158 + $0x350] sm:%s150] %v583
                %v585 = vld [vmem:[%s157 + $0x6a8] sm:%s150]
                %586 = vst [vmem:[%s158 + $0x354] sm:%s150] %v585
                %v587 = vld [vmem:[%s157 + $0x6b0] sm:%s150]
                %588 = vst [vmem:[%s158 + $0x358] sm:%s150] %v587
                %v589 = vld [vmem:[%s157 + $0x6b8] sm:%s150]
                %590 = vst [vmem:[%s158 + $0x35c] sm:%s150] %v589
                %v591 = vld [vmem:[%s157 + $0x6c0] sm:%s150]
                %592 = vst [vmem:[%s158 + $0x360] sm:%s150] %v591
                %v593 = vld [vmem:[%s157 + $0x6c8] sm:%s150]
                %594 = vst [vmem:[%s158 + $0x364] sm:%s150] %v593
                %v595 = vld [vmem:[%s157 + $0x6d0] sm:%s150]
                %596 = vst [vmem:[%s158 + $0x368] sm:%s150] %v595
                %v597 = vld [vmem:[%s157 + $0x6d8] sm:%s150]
                %598 = vst [vmem:[%s158 + $0x36c] sm:%s150] %v597
                %v599 = vld [vmem:[%s157 + $0x6e0] sm:%s150]
                %600 = vst [vmem:[%s158 + $0x370] sm:%s150] %v599
                %v601 = vld [vmem:[%s157 + $0x6e8] sm:%s150]
                %602 = vst [vmem:[%s158 + $0x374] sm:%s150] %v601
                %v603 = vld [vmem:[%s157 + $0x6f0] sm:%s150]
                %604 = vst [vmem:[%s158 + $0x378] sm:%s150] %v603
                %v605 = vld [vmem:[%s157 + $0x6f8] sm:%s150]
                %606 = vst [vmem:[%s158 + $0x37c] sm:%s150] %v605
                %v607 = vld [vmem:[%s157 + $0x700] sm:%s150]
                %608 = vst [vmem:[%s158 + $0x380] sm:%s150] %v607
                %v609 = vld [vmem:[%s157 + $0x708] sm:%s150]
                %610 = vst [vmem:[%s158 + $0x384] sm:%s150] %v609
                %v611 = vld [vmem:[%s157 + $0x710] sm:%s150]
                %612 = vst [vmem:[%s158 + $0x388] sm:%s150] %v611
                %v613 = vld [vmem:[%s157 + $0x718] sm:%s150]
                %614 = vst [vmem:[%s158 + $0x38c] sm:%s150] %v613
                %v615 = vld [vmem:[%s157 + $0x720] sm:%s150]
                %616 = vst [vmem:[%s158 + $0x390] sm:%s150] %v615
                %v617 = vld [vmem:[%s157 + $0x728] sm:%s150]
                %618 = vst [vmem:[%s158 + $0x394] sm:%s150] %v617
                %v619 = vld [vmem:[%s157 + $0x730] sm:%s150]
                %620 = vst [vmem:[%s158 + $0x398] sm:%s150] %v619
                %v621 = vld [vmem:[%s157 + $0x738] sm:%s150]
                %622 = vst [vmem:[%s158 + $0x39c] sm:%s150] %v621
                %v623 = vld [vmem:[%s157 + $0x740] sm:%s150]
                %624 = vst [vmem:[%s158 + $0x3a0] sm:%s150] %v623
                %v625 = vld [vmem:[%s157 + $0x748] sm:%s150]
                %626 = vst [vmem:[%s158 + $0x3a4] sm:%s150] %v625
                %v627 = vld [vmem:[%s157 + $0x750] sm:%s150]
                %628 = vst [vmem:[%s158 + $0x3a8] sm:%s150] %v627
                %v629 = vld [vmem:[%s157 + $0x758] sm:%s150]
                %630 = vst [vmem:[%s158 + $0x3ac] sm:%s150] %v629
                %v631 = vld [vmem:[%s157 + $0x760] sm:%s150]
                %632 = vst [vmem:[%s158 + $0x3b0] sm:%s150] %v631
                %v633 = vld [vmem:[%s157 + $0x768] sm:%s150]
                %634 = vst [vmem:[%s158 + $0x3b4] sm:%s150] %v633
                %v635 = vld [vmem:[%s157 + $0x770] sm:%s150]
                %636 = vst [vmem:[%s158 + $0x3b8] sm:%s150] %v635
                %v637 = vld [vmem:[%s157 + $0x778] sm:%s150]
                %638 = vst [vmem:[%s158 + $0x3bc] sm:%s150] %v637
                %v639 = vld [vmem:[%s157 + $0x780] sm:%s150]
                %640 = vst [vmem:[%s158 + $0x3c0] sm:%s150] %v639
                %v641 = vld [vmem:[%s157 + $0x788] sm:%s150]
                %642 = vst [vmem:[%s158 + $0x3c4] sm:%s150] %v641
                %v643 = vld [vmem:[%s157 + $0x790] sm:%s150]
                %644 = vst [vmem:[%s158 + $0x3c8] sm:%s150] %v643
                %v645 = vld [vmem:[%s157 + $0x798] sm:%s150]
                %646 = vst [vmem:[%s158 + $0x3cc] sm:%s150] %v645
                %v647 = vld [vmem:[%s157 + $0x7a0] sm:%s150]
                %648 = vst [vmem:[%s158 + $0x3d0] sm:%s150] %v647
                %v649 = vld [vmem:[%s157 + $0x7a8] sm:%s150]
                %650 = vst [vmem:[%s158 + $0x3d4] sm:%s150] %v649
                %v651 = vld [vmem:[%s157 + $0x7b0] sm:%s150]
                %652 = vst [vmem:[%s158 + $0x3d8] sm:%s150] %v651
                %v653 = vld [vmem:[%s157 + $0x7b8] sm:%s150]
                %654 = vst [vmem:[%s158 + $0x3dc] sm:%s150] %v653
                %v655 = vld [vmem:[%s157 + $0x7c0] sm:%s150]
                %656 = vst [vmem:[%s158 + $0x3e0] sm:%s150] %v655
                %v657 = vld [vmem:[%s157 + $0x7c8] sm:%s150]
                %658 = vst [vmem:[%s158 + $0x3e4] sm:%s150] %v657
                %v659 = vld [vmem:[%s157 + $0x7d0] sm:%s150]
                %660 = vst [vmem:[%s158 + $0x3e8] sm:%s150] %v659
                %v661 = vld [vmem:[%s157 + $0x7d8] sm:%s150]
                %662 = vst [vmem:[%s158 + $0x3ec] sm:%s150] %v661
                %v663 = vld [vmem:[%s157 + $0x7e0] sm:%s150]
                %664 = vst [vmem:[%s158 + $0x3f0] sm:%s150] %v663
                %v665 = vld [vmem:[%s157 + $0x7e8] sm:%s150]
                %666 = vst [vmem:[%s158 + $0x3f4] sm:%s150] %v665
                %v667 = vld [vmem:[%s157 + $0x7f0] sm:%s150]
                %668 = vst [vmem:[%s158 + $0x3f8] sm:%s150] %v667
                %v669 = vld [vmem:[%s157 + $0x7f8] sm:%s150]
                %670 = vst [vmem:[%s158 + $0x3fc] sm:%s150] %v669
                %v671 = vld [vmem:[%s157 + $0x800] sm:%s150]
                %672 = vst [vmem:[%s158 + $0x400] sm:%s150] %v671
                %v673 = vld [vmem:[%s157 + $0x808] sm:%s150]
                %674 = vst [vmem:[%s158 + $0x404] sm:%s150] %v673
                %v675 = vld [vmem:[%s157 + $0x810] sm:%s150]
                %676 = vst [vmem:[%s158 + $0x408] sm:%s150] %v675
                %v677 = vld [vmem:[%s157 + $0x818] sm:%s150]
                %678 = vst [vmem:[%s158 + $0x40c] sm:%s150] %v677
                %v679 = vld [vmem:[%s157 + $0x820] sm:%s150]
                %680 = vst [vmem:[%s158 + $0x410] sm:%s150] %v679
                %v681 = vld [vmem:[%s157 + $0x828] sm:%s150]
                %682 = vst [vmem:[%s158 + $0x414] sm:%s150] %v681
                %v683 = vld [vmem:[%s157 + $0x830] sm:%s150]
                %684 = vst [vmem:[%s158 + $0x418] sm:%s150] %v683
                %v685 = vld [vmem:[%s157 + $0x838] sm:%s150]
                %686 = vst [vmem:[%s158 + $0x41c] sm:%s150] %v685
                %v687 = vld [vmem:[%s157 + $0x840] sm:%s150]
                %688 = vst [vmem:[%s158 + $0x420] sm:%s150] %v687
                %v689 = vld [vmem:[%s157 + $0x848] sm:%s150]
                %690 = vst [vmem:[%s158 + $0x424] sm:%s150] %v689
                %v691 = vld [vmem:[%s157 + $0x850] sm:%s150]
                %692 = vst [vmem:[%s158 + $0x428] sm:%s150] %v691
                %v693 = vld [vmem:[%s157 + $0x858] sm:%s150]
                %694 = vst [vmem:[%s158 + $0x42c] sm:%s150] %v693
                %v695 = vld [vmem:[%s157 + $0x860] sm:%s150]
                %696 = vst [vmem:[%s158 + $0x430] sm:%s150] %v695
                %v697 = vld [vmem:[%s157 + $0x868] sm:%s150]
                %698 = vst [vmem:[%s158 + $0x434] sm:%s150] %v697
                %v699 = vld [vmem:[%s157 + $0x870] sm:%s150]
                %700 = vst [vmem:[%s158 + $0x438] sm:%s150] %v699
                %v701 = vld [vmem:[%s157 + $0x878] sm:%s150]
                %702 = vst [vmem:[%s158 + $0x43c] sm:%s150] %v701
                %v703 = vld [vmem:[%s157 + $0x880] sm:%s150]
                %704 = vst [vmem:[%s158 + $0x440] sm:%s150] %v703
                %v705 = vld [vmem:[%s157 + $0x888] sm:%s150]
                %706 = vst [vmem:[%s158 + $0x444] sm:%s150] %v705
                %v707 = vld [vmem:[%s157 + $0x890] sm:%s150]
                %708 = vst [vmem:[%s158 + $0x448] sm:%s150] %v707
                %v709 = vld [vmem:[%s157 + $0x898] sm:%s150]
                %710 = vst [vmem:[%s158 + $0x44c] sm:%s150] %v709
                %v711 = vld [vmem:[%s157 + $0x8a0] sm:%s150]
                %712 = vst [vmem:[%s158 + $0x450] sm:%s150] %v711
                %v713 = vld [vmem:[%s157 + $0x8a8] sm:%s150]
                %714 = vst [vmem:[%s158 + $0x454] sm:%s150] %v713
                %v715 = vld [vmem:[%s157 + $0x8b0] sm:%s150]
                %716 = vst [vmem:[%s158 + $0x458] sm:%s150] %v715
                %v717 = vld [vmem:[%s157 + $0x8b8] sm:%s150]
                %718 = vst [vmem:[%s158 + $0x45c] sm:%s150] %v717
                %v719 = vld [vmem:[%s157 + $0x8c0] sm:%s150]
                %720 = vst [vmem:[%s158 + $0x460] sm:%s150] %v719
                %v721 = vld [vmem:[%s157 + $0x8c8] sm:%s150]
                %722 = vst [vmem:[%s158 + $0x464] sm:%s150] %v721
                %v723 = vld [vmem:[%s157 + $0x8d0] sm:%s150]
                %724 = vst [vmem:[%s158 + $0x468] sm:%s150] %v723
                %v725 = vld [vmem:[%s157 + $0x8d8] sm:%s150]
                %726 = vst [vmem:[%s158 + $0x46c] sm:%s150] %v725
                %v727 = vld [vmem:[%s157 + $0x8e0] sm:%s150]
                %728 = vst [vmem:[%s158 + $0x470] sm:%s150] %v727
                %v729 = vld [vmem:[%s157 + $0x8e8] sm:%s150]
                %730 = vst [vmem:[%s158 + $0x474] sm:%s150] %v729
                %v731 = vld [vmem:[%s157 + $0x8f0] sm:%s150]
                %732 = vst [vmem:[%s158 + $0x478] sm:%s150] %v731
                %v733 = vld [vmem:[%s157 + $0x8f8] sm:%s150]
                %734 = vst [vmem:[%s158 + $0x47c] sm:%s150] %v733
                %v735 = vld [vmem:[%s157 + $0x900] sm:%s150]
                %736 = vst [vmem:[%s158 + $0x480] sm:%s150] %v735
                %v737 = vld [vmem:[%s157 + $0x908] sm:%s150]
                %738 = vst [vmem:[%s158 + $0x484] sm:%s150] %v737
                %v739 = vld [vmem:[%s157 + $0x910] sm:%s150]
                %740 = vst [vmem:[%s158 + $0x488] sm:%s150] %v739
                %v741 = vld [vmem:[%s157 + $0x918] sm:%s150]
                %742 = vst [vmem:[%s158 + $0x48c] sm:%s150] %v741
                %v743 = vld [vmem:[%s157 + $0x920] sm:%s150]
                %744 = vst [vmem:[%s158 + $0x490] sm:%s150] %v743
                %v745 = vld [vmem:[%s157 + $0x928] sm:%s150]
                %746 = vst [vmem:[%s158 + $0x494] sm:%s150] %v745
                %v747 = vld [vmem:[%s157 + $0x930] sm:%s150]
                %748 = vst [vmem:[%s158 + $0x498] sm:%s150] %v747
                %v749 = vld [vmem:[%s157 + $0x938] sm:%s150]
                %750 = vst [vmem:[%s158 + $0x49c] sm:%s150] %v749
                %v751 = vld [vmem:[%s157 + $0x940] sm:%s150]
                %752 = vst [vmem:[%s158 + $0x4a0] sm:%s150] %v751
                %v753 = vld [vmem:[%s157 + $0x948] sm:%s150]
                %754 = vst [vmem:[%s158 + $0x4a4] sm:%s150] %v753
                %v755 = vld [vmem:[%s157 + $0x950] sm:%s150]
                %756 = vst [vmem:[%s158 + $0x4a8] sm:%s150] %v755
                %v757 = vld [vmem:[%s157 + $0x958] sm:%s150]
                %758 = vst [vmem:[%s158 + $0x4ac] sm:%s150] %v757
                %v759 = vld [vmem:[%s157 + $0x960] sm:%s150]
                %760 = vst [vmem:[%s158 + $0x4b0] sm:%s150] %v759
                %v761 = vld [vmem:[%s157 + $0x968] sm:%s150]
                %762 = vst [vmem:[%s158 + $0x4b4] sm:%s150] %v761
                %v763 = vld [vmem:[%s157 + $0x970] sm:%s150]
                %764 = vst [vmem:[%s158 + $0x4b8] sm:%s150] %v763
                %v765 = vld [vmem:[%s157 + $0x978] sm:%s150]
                %766 = vst [vmem:[%s158 + $0x4bc] sm:%s150] %v765
                %v767 = vld [vmem:[%s157 + $0x980] sm:%s150]
                %768 = vst [vmem:[%s158 + $0x4c0] sm:%s150] %v767
                %v769 = vld [vmem:[%s157 + $0x988] sm:%s150]
                %770 = vst [vmem:[%s158 + $0x4c4] sm:%s150] %v769
                %v771 = vld [vmem:[%s157 + $0x990] sm:%s150]
                %772 = vst [vmem:[%s158 + $0x4c8] sm:%s150] %v771
                %v773 = vld [vmem:[%s157 + $0x998] sm:%s150]
                %774 = vst [vmem:[%s158 + $0x4cc] sm:%s150] %v773
                %v775 = vld [vmem:[%s157 + $0x9a0] sm:%s150]
                %776 = vst [vmem:[%s158 + $0x4d0] sm:%s150] %v775
                %v777 = vld [vmem:[%s157 + $0x9a8] sm:%s150]
                %778 = vst [vmem:[%s158 + $0x4d4] sm:%s150] %v777
                %v779 = vld [vmem:[%s157 + $0x9b0] sm:%s150]
                %780 = vst [vmem:[%s158 + $0x4d8] sm:%s150] %v779
                %v781 = vld [vmem:[%s157 + $0x9b8] sm:%s150]
                %782 = vst [vmem:[%s158 + $0x4dc] sm:%s150] %v781
                %v783 = vld [vmem:[%s157 + $0x9c0] sm:%s150]
                %784 = vst [vmem:[%s158 + $0x4e0] sm:%s150] %v783
                %v785 = vld [vmem:[%s157 + $0x9c8] sm:%s150]
                %786 = vst [vmem:[%s158 + $0x4e4] sm:%s150] %v785
                %v787 = vld [vmem:[%s157 + $0x9d0] sm:%s150]
                %788 = vst [vmem:[%s158 + $0x4e8] sm:%s150] %v787
                %v789 = vld [vmem:[%s157 + $0x9d8] sm:%s150]
                %790 = vst [vmem:[%s158 + $0x4ec] sm:%s150] %v789
                %v791 = vld [vmem:[%s157 + $0x9e0] sm:%s150]
                %792 = vst [vmem:[%s158 + $0x4f0] sm:%s150] %v791
                %v793 = vld [vmem:[%s157 + $0x9e8] sm:%s150]
                %794 = vst [vmem:[%s158 + $0x4f4] sm:%s150] %v793
                %v795 = vld [vmem:[%s157 + $0x9f0] sm:%s150]
                %796 = vst [vmem:[%s158 + $0x4f8] sm:%s150] %v795
                %v797 = vld [vmem:[%s157 + $0x9f8] sm:%s150]
                %798 = vst [vmem:[%s158 + $0x4fc] sm:%s150] %v797
                %v799 = vld [vmem:[%s157 + $0xa00] sm:%s150]
                %800 = vst [vmem:[%s158 + $0x500] sm:%s150] %v799
                %v801 = vld [vmem:[%s157 + $0xa08] sm:%s150]
                %802 = vst [vmem:[%s158 + $0x504] sm:%s150] %v801
                %v803 = vld [vmem:[%s157 + $0xa10] sm:%s150]
                %804 = vst [vmem:[%s158 + $0x508] sm:%s150] %v803
                %v805 = vld [vmem:[%s157 + $0xa18] sm:%s150]
                %806 = vst [vmem:[%s158 + $0x50c] sm:%s150] %v805
              $region41: #{blur_by_kernel.1} parent=35 // loop_footer
                %s156 = sadd.s32 1, %s152
              $region42: #{blur_by_kernel.1} parent=35 // loop_footer_branch
                %151 = sbr.rel target = $region38
              $region43: #{blur_by_kernel.1} parent=35 // loop_exit
                _
            $region36: #{blur_by_kernel.1} parent=27 // pred_fallthru
              _
          $region28: #{blur_by_kernel.1} parent=23 // pred_fallthru
            _
          %1475 = vnop
        $region24: #{blur_by_kernel.1} parent=19 // pred_fallthru
          _
      $region20: #{blur_by_kernel.1} parent=5 // pred_fallthru
        _
      %p1476 = scmp.le.s32.totalorder 1, %s8
      %p1477 = scmp.lt.s32.totalorder %s8, 3
      %p1478 = pnand %p1476, %p1477
      %p1479 = pneg %p1478
      // Predicated region
      $region62: #{blur_by_kernel.1} parent=5 // pred_check
        _
      $region63: #{blur_by_kernel.1} parent=5 // pred_check_branch
        %1481 = sbr.rel (%p1478) target = $region65
      $region64: #{blur_by_kernel.1} parent=5 // pred_region
        %s1482 = ssub.s32 %s8, 1
        %s1483 = sand.u32 %s61, 1
        %s1484 = sand.u32 %s61, 1
        %s1485 = smul.addr %s1484, 1296
        %s1486 = scalar_lea.vmem [#allocation2], %s1485
        // Predicated region
        $region66: #{blur_by_kernel.1} parent=64 // pred_check
          %p1487 = pneg %p74
        $region67: #{blur_by_kernel.1} parent=64 // pred_check_branch
          %1489 = sbr.rel (%p1487) target = $region69
        $region68: #{blur_by_kernel.1} parent=64 // pred_region
          _
        $region69: #{blur_by_kernel.1} parent=64 // pred_fallthru
          _
        %s1490 = smul.u32 2, %s17
        %p1491 = scmp.lt.s32.totalorder %s1490, 1
        %s1492 = scalar_select %p1491, %s1490, 1
        %s1493 = smul.addr %s1492, 11
        %s1494 = smul.addr %s1493, 2
        %s1495 = scalar_lea.vmem %s0, %s1494
        %p1496 = pneg %p46
        %p1497 = pneg %p43
        %s1498 = sand.u32 %s61, 1
        %s1499 = sand.u32 %s61, 1
        %s1500 = smul.addr %s1499, 1296
        %s1501 = scalar_lea.vmem [#allocation2], %s1500
        %p1502 = pneg %p74
        %p1503 = pneg %p71
        %p1504 = pneg %p102
        %p1505 = pneg %p99
        %s1506 = sand.u32 %s89, 1
        %s1507 = sand.u32 %s89, 1
        %s1508 = smul.addr %s1507, 8
        %s1509 = scalar_lea.vmem [#allocation3], %s1508
        %s1510 = smul.u32 2, %s17
        %p1511 = scmp.lt.s32.totalorder %s1510, 1
        %s1512 = scalar_select %p1511, %s1510, 1
        %s1513 = smul.addr %s1512, 11
        %s1514 = smul.addr %s1513, 2
        %s1515 = scalar_lea.vmem %s0, %s1514
        %s1516 = smul.u32 2, %s17
        %s1517 = smul.u32 2, %s17
        %s1518 = smul.u32 2, %s17
        %v1520 = vld [vmem:[%s1515] sm:$0xff]
        %v1521 = vld [vmem:[%s1515 + $0x8] sm:$0xff]
        %v1522 = vld [vmem:[%s1515 + $0x10] sm:$0x3f]
        %v1523 = vld [vmem:[%s1515 + $0x16] sm:$0xff]
        %v1524 = vld [vmem:[%s1515 + $0x1e] sm:$0xff]
        %v1525 = vld [vmem:[%s1515 + $0x26] sm:$0x3f]
        %v1526 = vld [vmem:[%s1486] sm:$0xf]
        %v1527 = vld [vmem:[%s1486 + $0x4] sm:$0xf]
        %v1528 = vld [vmem:[%s1486 + $0x8] sm:$0xf]
        %v1529 = vld [vmem:[%s1486 + $0xc] sm:$0xf]
        %v1530 = vld [vmem:[%s1486 + $0x10] sm:$0xf]
        %v1531 = vld [vmem:[%s1486 + $0x14] sm:$0xf]
        %v1532 = vld [vmem:[%s1486 + $0x18] sm:$0xf]
        %v1533 = vld [vmem:[%s1486 + $0x1c] sm:$0xf]
        %v1534 = vld [vmem:[%s1486 + $0x20] sm:$0xf]
        %v1535 = vld [vmem:[%s1486 + $0x24] sm:$0xf]
        %v1536 = vld [vmem:[%s1486 + $0x28] sm:$0xf]
        %v1537 = vld [vmem:[%s1486 + $0x2c] sm:$0xf]
        %v1538 = vld [vmem:[%s1486 + $0x30] sm:$0xf]
        %v1539 = vld [vmem:[%s1486 + $0x34] sm:$0xf]
        %v1540 = vld [vmem:[%s1486 + $0x38] sm:$0xf]
        %v1541 = vld [vmem:[%s1486 + $0x3c] sm:$0xf]
        %v1542 = vld [vmem:[%s1486 + $0x40] sm:$0xf]
        %v1543 = vld [vmem:[%s1486 + $0x44] sm:$0xf]
        %v1544 = vld [vmem:[%s1486 + $0x48] sm:$0xf]
        %v1545 = vld [vmem:[%s1486 + $0x4c] sm:$0xf]
        %v1546 = vld [vmem:[%s1486 + $0x50] sm:$0xf]
        %v1547 = vld [vmem:[%s1486 + $0x54] sm:$0xf]
        %v1548 = vld [vmem:[%s1486 + $0x58] sm:$0xf]
        %v1549 = vld [vmem:[%s1486 + $0x5c] sm:$0xf]
        %v1550 = vld [vmem:[%s1486 + $0x60] sm:$0xf]
        %v1551 = vld [vmem:[%s1486 + $0x64] sm:$0xf]
        %v1552 = vld [vmem:[%s1486 + $0x68] sm:$0xf]
        %v1553 = vld [vmem:[%s1486 + $0x6c] sm:$0xf]
        %v1554 = vld [vmem:[%s1486 + $0x70] sm:$0xf]
        %v1555 = vld [vmem:[%s1486 + $0x74] sm:$0xf]
        %v1556 = vld [vmem:[%s1486 + $0x78] sm:$0xf]
        %v1557 = vld [vmem:[%s1486 + $0x7c] sm:$0xf]
        %v1558 = vld [vmem:[%s1486 + $0x80] sm:$0xf]
        %v1559 = vld [vmem:[%s1486 + $0x84] sm:$0xf]
        %v1560 = vld [vmem:[%s1486 + $0x88] sm:$0xf]
        %v1561 = vld [vmem:[%s1486 + $0x8c] sm:$0xf]
        %v1562 = vld [vmem:[%s1486 + $0x90] sm:$0xf]
        %v1563 = vld [vmem:[%s1486 + $0x94] sm:$0xf]
        %v1564 = vld [vmem:[%s1486 + $0x98] sm:$0xf]
        %v1565 = vld [vmem:[%s1486 + $0x9c] sm:$0xf]
        %v1566 = vld [vmem:[%s1486 + $0xa0] sm:$0xf]
        %v1567 = vld [vmem:[%s1486 + $0xa4] sm:$0xf]
        %v1568 = vld [vmem:[%s1486 + $0xa8] sm:$0xf]
        %v1569 = vld [vmem:[%s1486 + $0xac] sm:$0xf]
        %v1570 = vld [vmem:[%s1486 + $0xb0] sm:$0xf]
        %v1571 = vld [vmem:[%s1486 + $0xb4] sm:$0xf]
        %v1572 = vld [vmem:[%s1486 + $0xb8] sm:$0xf]
        %v1573 = vld [vmem:[%s1486 + $0xbc] sm:$0xf]
        %v1574 = vld [vmem:[%s1486 + $0xc0] sm:$0xf]
        %v1575 = vld [vmem:[%s1486 + $0xc4] sm:$0xf]
        %v1576 = vld [vmem:[%s1486 + $0xc8] sm:$0xf]
        %v1577 = vld [vmem:[%s1486 + $0xcc] sm:$0xf]
        %v1578 = vld [vmem:[%s1486 + $0xd0] sm:$0xf]
        %v1579 = vld [vmem:[%s1486 + $0xd4] sm:$0xf]
        %v1580 = vld [vmem:[%s1486 + $0xd8] sm:$0xf]
        %v1581 = vld [vmem:[%s1486 + $0xdc] sm:$0xf]
        %v1582 = vld [vmem:[%s1486 + $0xe0] sm:$0xf]
        %v1583 = vld [vmem:[%s1486 + $0xe4] sm:$0xf]
        %v1584 = vld [vmem:[%s1486 + $0xe8] sm:$0xf]
        %v1585 = vld [vmem:[%s1486 + $0xec] sm:$0xf]
        %v1586 = vld [vmem:[%s1486 + $0xf0] sm:$0xf]
        %v1587 = vld [vmem:[%s1486 + $0xf4] sm:$0xf]
        %v1588 = vld [vmem:[%s1486 + $0xf8] sm:$0xf]
        %v1589 = vld [vmem:[%s1486 + $0xfc] sm:$0xf]
        %v1590 = vld [vmem:[%s1486 + $0x100] sm:$0xf]
        %v1591 = vld [vmem:[%s1486 + $0x104] sm:$0xf]
        %v1592 = vld [vmem:[%s1486 + $0x108] sm:$0xf]
        %v1593 = vld [vmem:[%s1486 + $0x10c] sm:$0xf]
        %v1594 = vld [vmem:[%s1486 + $0x110] sm:$0xf]
        %v1595 = vld [vmem:[%s1486 + $0x114] sm:$0xf]
        %v1596 = vld [vmem:[%s1486 + $0x118] sm:$0xf]
        %v1597 = vld [vmem:[%s1486 + $0x11c] sm:$0xf]
        %v1598 = vld [vmem:[%s1486 + $0x120] sm:$0xf]
        %v1599 = vld [vmem:[%s1486 + $0x124] sm:$0xf]
        %v1600 = vld [vmem:[%s1486 + $0x128] sm:$0xf]
        %v1601 = vld [vmem:[%s1486 + $0x12c] sm:$0xf]
        %v1602 = vld [vmem:[%s1486 + $0x130] sm:$0xf]
        %v1603 = vld [vmem:[%s1486 + $0x134] sm:$0xf]
        %v1604 = vld [vmem:[%s1486 + $0x138] sm:$0xf]
        %v1605 = vld [vmem:[%s1486 + $0x13c] sm:$0xf]
        %v1606 = vld [vmem:[%s1486 + $0x140] sm:$0xf]
        %v1607 = vld [vmem:[%s1486 + $0x144] sm:$0xf]
        %v1608 = vld [vmem:[%s1486 + $0x148] sm:$0xf]
        %v1609 = vld [vmem:[%s1486 + $0x14c] sm:$0xf]
        %v1610 = vld [vmem:[%s1486 + $0x150] sm:$0xf]
        %v1611 = vld [vmem:[%s1486 + $0x154] sm:$0xf]
        %v1612 = vld [vmem:[%s1486 + $0x158] sm:$0xf]
        %v1613 = vld [vmem:[%s1486 + $0x15c] sm:$0xf]
        %v1614 = vld [vmem:[%s1486 + $0x160] sm:$0xf]
        %v1615 = vld [vmem:[%s1486 + $0x164] sm:$0xf]
        %v1616 = vld [vmem:[%s1486 + $0x168] sm:$0xf]
        %v1617 = vld [vmem:[%s1486 + $0x16c] sm:$0xf]
        %v1618 = vld [vmem:[%s1486 + $0x170] sm:$0xf]
        %v1619 = vld [vmem:[%s1486 + $0x174] sm:$0xf]
        %v1620 = vld [vmem:[%s1486 + $0x178] sm:$0xf]
        %v1621 = vld [vmem:[%s1486 + $0x17c] sm:$0xf]
        %v1622 = vld [vmem:[%s1486 + $0x180] sm:$0xf]
        %v1623 = vld [vmem:[%s1486 + $0x184] sm:$0xf]
        %v1624 = vld [vmem:[%s1486 + $0x188] sm:$0xf]
        %v1625 = vld [vmem:[%s1486 + $0x18c] sm:$0xf]
        %v1626 = vld [vmem:[%s1486 + $0x190] sm:$0xf]
        %v1627 = vld [vmem:[%s1486 + $0x194] sm:$0xf]
        %v1628 = vld [vmem:[%s1486 + $0x198] sm:$0xf]
        %v1629 = vld [vmem:[%s1486 + $0x19c] sm:$0xf]
        %v1630 = vld [vmem:[%s1486 + $0x1a0] sm:$0xf]
        %v1631 = vld [vmem:[%s1486 + $0x1a4] sm:$0xf]
        %v1632 = vld [vmem:[%s1486 + $0x1a8] sm:$0xf]
        %v1633 = vld [vmem:[%s1486 + $0x1ac] sm:$0xf]
        %v1634 = vld [vmem:[%s1486 + $0x1b0] sm:$0xf]
        %v1635 = vld [vmem:[%s1486 + $0x1b4] sm:$0xf]
        %v1636 = vld [vmem:[%s1486 + $0x1b8] sm:$0xf]
        %v1637 = vld [vmem:[%s1486 + $0x1bc] sm:$0xf]
        %v1638 = vld [vmem:[%s1486 + $0x1c0] sm:$0xf]
        %v1639 = vld [vmem:[%s1486 + $0x1c4] sm:$0xf]
        %v1640 = vld [vmem:[%s1486 + $0x1c8] sm:$0xf]
        %v1641 = vld [vmem:[%s1486 + $0x1cc] sm:$0xf]
        %v1642 = vld [vmem:[%s1486 + $0x1d0] sm:$0xf]
        %v1643 = vld [vmem:[%s1486 + $0x1d4] sm:$0xf]
        %v1644 = vld [vmem:[%s1486 + $0x1d8] sm:$0xf]
        %v1645 = vld [vmem:[%s1486 + $0x1dc] sm:$0xf]
        %v1646 = vld [vmem:[%s1486 + $0x1e0] sm:$0xf]
        %v1647 = vld [vmem:[%s1486 + $0x1e4] sm:$0xf]
        %v1648 = vld [vmem:[%s1486 + $0x1e8] sm:$0xf]
        %v1649 = vld [vmem:[%s1486 + $0x1ec] sm:$0xf]
        %v1650 = vld [vmem:[%s1486 + $0x1f0] sm:$0xf]
        %v1651 = vld [vmem:[%s1486 + $0x1f4] sm:$0xf]
        %v1652 = vld [vmem:[%s1486 + $0x1f8] sm:$0xf]
        %v1653 = vld [vmem:[%s1486 + $0x1fc] sm:$0xf]
        %v1654 = vld [vmem:[%s1486 + $0x200] sm:$0xf]
        %v1655 = vld [vmem:[%s1486 + $0x204] sm:$0xf]
        %v1656 = vld [vmem:[%s1486 + $0x208] sm:$0xf]
        %v1657 = vld [vmem:[%s1486 + $0x20c] sm:$0xf]
        %v1658 = vld [vmem:[%s1486 + $0x210] sm:$0xf]
        %v1659 = vld [vmem:[%s1486 + $0x214] sm:$0xf]
        %v1660 = vld [vmem:[%s1486 + $0x218] sm:$0xf]
        %v1661 = vld [vmem:[%s1486 + $0x21c] sm:$0xf]
        %v1662 = vld [vmem:[%s1486 + $0x220] sm:$0xf]
        %v1663 = vld [vmem:[%s1486 + $0x224] sm:$0xf]
        %v1664 = vld [vmem:[%s1486 + $0x228] sm:$0xf]
        %v1665 = vld [vmem:[%s1486 + $0x22c] sm:$0xf]
        %v1666 = vld [vmem:[%s1486 + $0x230] sm:$0xf]
        %v1667 = vld [vmem:[%s1486 + $0x234] sm:$0xf]
        %v1668 = vld [vmem:[%s1486 + $0x238] sm:$0xf]
        %v1669 = vld [vmem:[%s1486 + $0x23c] sm:$0xf]
        %v1670 = vld [vmem:[%s1486 + $0x240] sm:$0xf]
        %v1671 = vld [vmem:[%s1486 + $0x244] sm:$0xf]
        %v1672 = vld [vmem:[%s1486 + $0x248] sm:$0xf]
        %v1673 = vld [vmem:[%s1486 + $0x24c] sm:$0xf]
        %v1674 = vld [vmem:[%s1486 + $0x250] sm:$0xf]
        %v1675 = vld [vmem:[%s1486 + $0x254] sm:$0xf]
        %v1676 = vld [vmem:[%s1486 + $0x258] sm:$0xf]
        %v1677 = vld [vmem:[%s1486 + $0x25c] sm:$0xf]
        %v1678 = vld [vmem:[%s1486 + $0x260] sm:$0xf]
        %v1679 = vld [vmem:[%s1486 + $0x264] sm:$0xf]
        %v1680 = vld [vmem:[%s1486 + $0x268] sm:$0xf]
        %v1681 = vld [vmem:[%s1486 + $0x26c] sm:$0xf]
        %v1682 = vld [vmem:[%s1486 + $0x270] sm:$0xf]
        %v1683 = vld [vmem:[%s1486 + $0x274] sm:$0xf]
        %v1684 = vld [vmem:[%s1486 + $0x278] sm:$0xf]
        %v1685 = vld [vmem:[%s1486 + $0x27c] sm:$0xf]
        %v1686 = vld [vmem:[%s1486 + $0x280] sm:$0xf]
        %v1687 = vld [vmem:[%s1486 + $0x284] sm:$0xf]
        %v1688 = vld [vmem:[%s1486 + $0x288] sm:$0xf]
        %v1689 = vld [vmem:[%s1486 + $0x28c] sm:$0xf]
        %v1690 = vld [vmem:[%s1486 + $0x290] sm:$0xf]
        %v1691 = vld [vmem:[%s1486 + $0x294] sm:$0xf]
        %v1692 = vld [vmem:[%s1486 + $0x298] sm:$0xf]
        %v1693 = vld [vmem:[%s1486 + $0x29c] sm:$0xf]
        %v1694 = vld [vmem:[%s1486 + $0x2a0] sm:$0xf]
        %v1695 = vld [vmem:[%s1486 + $0x2a4] sm:$0xf]
        %v1696 = vld [vmem:[%s1486 + $0x2a8] sm:$0xf]
        %v1697 = vld [vmem:[%s1486 + $0x2ac] sm:$0xf]
        %v1698 = vld [vmem:[%s1486 + $0x2b0] sm:$0xf]
        %v1699 = vld [vmem:[%s1486 + $0x2b4] sm:$0xf]
        %v1700 = vld [vmem:[%s1486 + $0x2b8] sm:$0xf]
        %v1701 = vld [vmem:[%s1486 + $0x2bc] sm:$0xf]
        %v1702 = vld [vmem:[%s1486 + $0x2c0] sm:$0xf]
        %v1703 = vld [vmem:[%s1486 + $0x2c4] sm:$0xf]
        %v1704 = vld [vmem:[%s1486 + $0x2c8] sm:$0xf]
        %v1705 = vld [vmem:[%s1486 + $0x2cc] sm:$0xf]
        %v1706 = vld [vmem:[%s1486 + $0x2d0] sm:$0xf]
        %v1707 = vld [vmem:[%s1486 + $0x2d4] sm:$0xf]
        %v1708 = vld [vmem:[%s1486 + $0x2d8] sm:$0xf]
        %v1709 = vld [vmem:[%s1486 + $0x2dc] sm:$0xf]
        %v1710 = vld [vmem:[%s1486 + $0x2e0] sm:$0xf]
        %v1711 = vld [vmem:[%s1486 + $0x2e4] sm:$0xf]
        %v1712 = vld [vmem:[%s1486 + $0x2e8] sm:$0xf]
        %v1713 = vld [vmem:[%s1486 + $0x2ec] sm:$0xf]
        %v1714 = vld [vmem:[%s1486 + $0x2f0] sm:$0xf]
        %v1715 = vld [vmem:[%s1486 + $0x2f4] sm:$0xf]
        %v1716 = vld [vmem:[%s1486 + $0x2f8] sm:$0xf]
        %v1717 = vld [vmem:[%s1486 + $0x2fc] sm:$0xf]
        %v1718 = vld [vmem:[%s1486 + $0x300] sm:$0xf]
        %v1719 = vld [vmem:[%s1486 + $0x304] sm:$0xf]
        %v1720 = vld [vmem:[%s1486 + $0x308] sm:$0xf]
        %v1721 = vld [vmem:[%s1486 + $0x30c] sm:$0xf]
        %v1722 = vld [vmem:[%s1486 + $0x310] sm:$0xf]
        %v1723 = vld [vmem:[%s1486 + $0x314] sm:$0xf]
        %v1724 = vld [vmem:[%s1486 + $0x318] sm:$0xf]
        %v1725 = vld [vmem:[%s1486 + $0x31c] sm:$0xf]
        %v1726 = vld [vmem:[%s1486 + $0x320] sm:$0xf]
        %v1727 = vld [vmem:[%s1486 + $0x324] sm:$0xf]
        %v1728 = vld [vmem:[%s1486 + $0x328] sm:$0xf]
        %v1729 = vld [vmem:[%s1486 + $0x32c] sm:$0xf]
        %v1730 = vld [vmem:[%s1486 + $0x330] sm:$0xf]
        %v1731 = vld [vmem:[%s1486 + $0x334] sm:$0xf]
        %v1732 = vld [vmem:[%s1486 + $0x338] sm:$0xf]
        %v1733 = vld [vmem:[%s1486 + $0x33c] sm:$0xf]
        %v1734 = vld [vmem:[%s1486 + $0x340] sm:$0xf]
        %v1735 = vld [vmem:[%s1486 + $0x344] sm:$0xf]
        %v1736 = vld [vmem:[%s1486 + $0x348] sm:$0xf]
        %v1737 = vld [vmem:[%s1486 + $0x34c] sm:$0xf]
        %v1738 = vld [vmem:[%s1486 + $0x350] sm:$0xf]
        %v1739 = vld [vmem:[%s1486 + $0x354] sm:$0xf]
        %v1740 = vld [vmem:[%s1486 + $0x358] sm:$0xf]
        %v1741 = vld [vmem:[%s1486 + $0x35c] sm:$0xf]
        %v1742 = vld [vmem:[%s1486 + $0x360] sm:$0xf]
        %v1743 = vld [vmem:[%s1486 + $0x364] sm:$0xf]
        %v1744 = vld [vmem:[%s1486 + $0x368] sm:$0xf]
        %v1745 = vld [vmem:[%s1486 + $0x36c] sm:$0xf]
        %v1746 = vld [vmem:[%s1486 + $0x370] sm:$0xf]
        %v1747 = vld [vmem:[%s1486 + $0x374] sm:$0xf]
        %v1748 = vld [vmem:[%s1486 + $0x378] sm:$0xf]
        %v1749 = vld [vmem:[%s1486 + $0x37c] sm:$0xf]
        %v1750 = vld [vmem:[%s1486 + $0x380] sm:$0xf]
        %v1751 = vld [vmem:[%s1486 + $0x384] sm:$0xf]
        %v1752 = vld [vmem:[%s1486 + $0x388] sm:$0xf]
        %v1753 = vld [vmem:[%s1486 + $0x38c] sm:$0xf]
        %v1754 = vld [vmem:[%s1486 + $0x390] sm:$0xf]
        %v1755 = vld [vmem:[%s1486 + $0x394] sm:$0xf]
        %v1756 = vld [vmem:[%s1486 + $0x398] sm:$0xf]
        %v1757 = vld [vmem:[%s1486 + $0x39c] sm:$0xf]
        %v1758 = vld [vmem:[%s1486 + $0x3a0] sm:$0xf]
        %v1759 = vld [vmem:[%s1486 + $0x3a4] sm:$0xf]
        %v1760 = vld [vmem:[%s1486 + $0x3a8] sm:$0xf]
        %v1761 = vld [vmem:[%s1486 + $0x3ac] sm:$0xf]
        %v1762 = vld [vmem:[%s1486 + $0x3b0] sm:$0xf]
        %v1763 = vld [vmem:[%s1486 + $0x3b4] sm:$0xf]
        %v1764 = vld [vmem:[%s1486 + $0x3b8] sm:$0xf]
        %v1765 = vld [vmem:[%s1486 + $0x3bc] sm:$0xf]
        %v1766 = vld [vmem:[%s1486 + $0x3c0] sm:$0xf]
        %v1767 = vld [vmem:[%s1486 + $0x3c4] sm:$0xf]
        %v1768 = vld [vmem:[%s1486 + $0x3c8] sm:$0xf]
        %v1769 = vld [vmem:[%s1486 + $0x3cc] sm:$0xf]
        %v1770 = vld [vmem:[%s1486 + $0x3d0] sm:$0xf]
        %v1771 = vld [vmem:[%s1486 + $0x3d4] sm:$0xf]
        %v1772 = vld [vmem:[%s1486 + $0x3d8] sm:$0xf]
        %v1773 = vld [vmem:[%s1486 + $0x3dc] sm:$0xf]
        %v1774 = vld [vmem:[%s1486 + $0x3e0] sm:$0xf]
        %v1775 = vld [vmem:[%s1486 + $0x3e4] sm:$0xf]
        %v1776 = vld [vmem:[%s1486 + $0x3e8] sm:$0xf]
        %v1777 = vld [vmem:[%s1486 + $0x3ec] sm:$0xf]
        %v1778 = vld [vmem:[%s1486 + $0x3f0] sm:$0xf]
        %v1779 = vld [vmem:[%s1486 + $0x3f4] sm:$0xf]
        %v1780 = vld [vmem:[%s1486 + $0x3f8] sm:$0xf]
        %v1781 = vld [vmem:[%s1486 + $0x3fc] sm:$0xf]
        %v1782 = vld [vmem:[%s1486 + $0x400] sm:$0xf]
        %v1783 = vld [vmem:[%s1486 + $0x404] sm:$0xf]
        %v1784 = vld [vmem:[%s1486 + $0x408] sm:$0xf]
        %v1785 = vld [vmem:[%s1486 + $0x40c] sm:$0xf]
        %v1786 = vld [vmem:[%s1486 + $0x410] sm:$0xf]
        %v1787 = vld [vmem:[%s1486 + $0x414] sm:$0xf]
        %v1788 = vld [vmem:[%s1486 + $0x418] sm:$0xf]
        %v1789 = vld [vmem:[%s1486 + $0x41c] sm:$0xf]
        %v1790 = vld [vmem:[%s1486 + $0x420] sm:$0xf]
        %v1791 = vld [vmem:[%s1486 + $0x424] sm:$0xf]
        %v1792 = vld [vmem:[%s1486 + $0x428] sm:$0xf]
        %v1793 = vld [vmem:[%s1486 + $0x42c] sm:$0xf]
        %v1794 = vld [vmem:[%s1486 + $0x430] sm:$0xf]
        %v1795 = vld [vmem:[%s1486 + $0x434] sm:$0xf]
        %v1796 = vld [vmem:[%s1486 + $0x438] sm:$0xf]
        %v1797 = vld [vmem:[%s1486 + $0x43c] sm:$0xf]
        %v1798 = vld [vmem:[%s1486 + $0x440] sm:$0xf]
        %v1799 = vld [vmem:[%s1486 + $0x444] sm:$0xf]
        %v1800 = vld [vmem:[%s1486 + $0x448] sm:$0xf]
        %v1801 = vld [vmem:[%s1486 + $0x44c] sm:$0xf]
        %v1802 = vld [vmem:[%s1486 + $0x450] sm:$0xf]
        %v1803 = vld [vmem:[%s1486 + $0x454] sm:$0xf]
        %v1804 = vld [vmem:[%s1486 + $0x458] sm:$0xf]
        %v1805 = vld [vmem:[%s1486 + $0x45c] sm:$0xf]
        %v1806 = vld [vmem:[%s1486 + $0x460] sm:$0xf]
        %v1807 = vld [vmem:[%s1486 + $0x464] sm:$0xf]
        %v1808 = vld [vmem:[%s1486 + $0x468] sm:$0xf]
        %v1809 = vld [vmem:[%s1486 + $0x46c] sm:$0xf]
        %v1810 = vld [vmem:[%s1486 + $0x470] sm:$0xf]
        %v1811 = vld [vmem:[%s1486 + $0x474] sm:$0xf]
        %v1812 = vld [vmem:[%s1486 + $0x478] sm:$0xf]
        %v1813 = vld [vmem:[%s1486 + $0x47c] sm:$0xf]
        %v1814 = vld [vmem:[%s1486 + $0x480] sm:$0xf]
        %v1815 = vld [vmem:[%s1486 + $0x484] sm:$0xf]
        %v1816 = vld [vmem:[%s1486 + $0x488] sm:$0xf]
        %v1817 = vld [vmem:[%s1486 + $0x48c] sm:$0xf]
        %v1818 = vld [vmem:[%s1486 + $0x490] sm:$0xf]
        %v1819 = vld [vmem:[%s1486 + $0x494] sm:$0xf]
        %v1820 = vld [vmem:[%s1486 + $0x498] sm:$0xf]
        %v1821 = vld [vmem:[%s1486 + $0x49c] sm:$0xf]
        %v1822 = vld [vmem:[%s1486 + $0x4a0] sm:$0xf]
        %v1823 = vld [vmem:[%s1486 + $0x4a4] sm:$0xf]
        %v1824 = vld [vmem:[%s1486 + $0x4a8] sm:$0xf]
        %v1825 = vld [vmem:[%s1486 + $0x4ac] sm:$0xf]
        %v1826 = vld [vmem:[%s1486 + $0x4b0] sm:$0xf]
        %v1827 = vld [vmem:[%s1486 + $0x4b4] sm:$0xf]
        %v1828 = vld [vmem:[%s1486 + $0x4b8] sm:$0xf]
        %v1829 = vld [vmem:[%s1486 + $0x4bc] sm:$0xf]
        %v1830 = vld [vmem:[%s1486 + $0x4c0] sm:$0xf]
        %v1831 = vld [vmem:[%s1486 + $0x4c4] sm:$0xf]
        %v1832 = vld [vmem:[%s1486 + $0x4c8] sm:$0xf]
        %v1833 = vld [vmem:[%s1486 + $0x4cc] sm:$0xf]
        %v1834 = vld [vmem:[%s1486 + $0x4d0] sm:$0xf]
        %v1835 = vld [vmem:[%s1486 + $0x4d4] sm:$0xf]
        %v1836 = vld [vmem:[%s1486 + $0x4d8] sm:$0xf]
        %v1837 = vld [vmem:[%s1486 + $0x4dc] sm:$0xf]
        %v1838 = vld [vmem:[%s1486 + $0x4e0] sm:$0xf]
        %v1839 = vld [vmem:[%s1486 + $0x4e4] sm:$0xf]
        %v1840 = vld [vmem:[%s1486 + $0x4e8] sm:$0xf]
        %v1841 = vld [vmem:[%s1486 + $0x4ec] sm:$0xf]
        %v1842 = vld [vmem:[%s1486 + $0x4f0] sm:$0xf]
        %v1843 = vld [vmem:[%s1486 + $0x4f4] sm:$0xf]
        %v1844 = vld [vmem:[%s1486 + $0x4f8] sm:$0xf]
        %v1845 = vld [vmem:[%s1486 + $0x4fc] sm:$0xf]
        %v1846 = vld [vmem:[%s1486 + $0x500] sm:$0xf]
        %v1847 = vld [vmem:[%s1486 + $0x504] sm:$0xf]
        %v1848 = vld [vmem:[%s1486 + $0x508] sm:$0xf]
        %v1849 = vld [vmem:[%s1486 + $0x50c] sm:$0xf]
        %v1853 = vcombine.high %v1520, %v1520
        %v1855 = vunpack.c.l.s4 1983009808
        %v1856 = vunpack.c.0.s8 %v1855
        %v1857 = vlaneseq
        %v1858 = vshrl.u32 %v1857, 7
        %v1859 = vsub.s32 %v1856, %v1858
        %v1860 = vrot.slane %v1520, %v1859
        %v1862 = vunpack.c.l.s4 1983009808
        %v1863 = vunpack.c.0.s8 %v1862
        %v1864 = vlaneseq
        %v1865 = vshrl.u32 %v1864, 7
        %v1866 = vsub.s32 %v1863, %v1865
        %v1867 = vrot.slane %v1853, %v1866
        %v1868 = vcombine.high %v1860, %v1860
        %v1869 = vcombine.high %v1867, %v1867
        %v1870 = vcombine.high %v1521, %v1521
        %v1872 = vunpack.c.l.s4 1983009808
        %v1873 = vunpack.c.0.s8 %v1872
        %v1874 = vlaneseq
        %v1875 = vshrl.u32 %v1874, 7
        %v1876 = vsub.s32 %v1873, %v1875
        %v1877 = vrot.slane %v1521, %v1876
        %v1879 = vunpack.c.l.s4 1983009808
        %v1880 = vunpack.c.0.s8 %v1879
        %v1881 = vlaneseq
        %v1882 = vshrl.u32 %v1881, 7
        %v1883 = vsub.s32 %v1880, %v1882
        %v1884 = vrot.slane %v1870, %v1883
        %v1885 = vcombine.high %v1877, %v1877
        %v1886 = vcombine.high %v1884, %v1884
        %v1887 = vcombine.high %v1522, %v1522
        %v1889 = vunpack.c.l.s4 1983009808
        %v1890 = vunpack.c.0.s8 %v1889
        %v1891 = vlaneseq
        %v1892 = vshrl.u32 %v1891, 7
        %v1893 = vsub.s32 %v1890, %v1892
        %v1894 = vrot.slane %v1522, %v1893
        %v1896 = vunpack.c.l.s4 1983009808
        %v1897 = vunpack.c.0.s8 %v1896
        %v1898 = vlaneseq
        %v1899 = vshrl.u32 %v1898, 7
        %v1900 = vsub.s32 %v1897, %v1899
        %v1901 = vrot.slane %v1887, %v1900
        %v1902 = vcombine.high %v1894, %v1894
        %v2075 = vunpack.c.l.b16 %v1526
        %v2076 = vunpack.c.l.b16 %v1527
        %v2077 = vunpack.c.l.b16 %v1528
        %v2078 = vunpack.c.l.b16 %v1529
        %v2079 = vunpack.c.l.b16 %v1530
        %v2080 = vunpack.c.l.b16 %v1531
        %v2081 = vunpack.c.l.b16 %v1532
        %v2082 = vunpack.c.l.b16 %v1533
        %v2083 = vunpack.c.l.b16 %v1534
        %v2084 = vunpack.c.l.b16 %v1535
        %v2085 = vunpack.c.l.b16 %v1536
        %v2086 = vunpack.c.l.b16 %v1537
        %v2087 = vunpack.c.l.b16 %v1538
        %v2088 = vunpack.c.l.b16 %v1539
        %v2089 = vunpack.c.l.b16 %v1540
        %v2090 = vunpack.c.l.b16 %v1541
        %v2091 = vunpack.c.l.b16 %v1542
        %v2092 = vunpack.c.l.b16 %v1543
        %v2093 = vunpack.c.l.b16 %v1544
        %v2094 = vunpack.c.l.b16 %v1545
        %v2095 = vunpack.c.l.b16 %v1546
        %v2096 = vunpack.c.l.b16 %v1547
        %v2097 = vunpack.c.l.b16 %v1548
        %v2098 = vunpack.c.l.b16 %v1549
        %v2099 = vunpack.c.l.b16 %v1550
        %v2100 = vunpack.c.l.b16 %v1551
        %v2101 = vunpack.c.l.b16 %v1552
        %v2102 = vunpack.c.l.b16 %v1553
        %v2103 = vunpack.c.l.b16 %v1554
        %v2104 = vunpack.c.l.b16 %v1555
        %v2105 = vunpack.c.l.b16 %v1556
        %v2106 = vunpack.c.l.b16 %v1557
        %v2107 = vunpack.c.l.b16 %v1558
        %v2108 = vunpack.c.l.b16 %v1559
        %v2109 = vunpack.c.l.b16 %v1560
        %v2110 = vunpack.c.l.b16 %v1561
        %v2111 = vunpack.c.l.b16 %v1562
        %v2112 = vunpack.c.l.b16 %v1563
        %v2113 = vunpack.c.l.b16 %v1564
        %v2114 = vunpack.c.l.b16 %v1565
        %v2115 = vunpack.c.l.b16 %v1566
        %v2116 = vunpack.c.l.b16 %v1567
        %v2117 = vunpack.c.l.b16 %v1568
        %v2118 = vunpack.c.l.b16 %v1569
        %v2119 = vunpack.c.l.b16 %v1570
        %v2120 = vunpack.c.l.b16 %v1571
        %v2121 = vunpack.c.l.b16 %v1572
        %v2122 = vunpack.c.l.b16 %v1573
        %v2123 = vunpack.c.l.b16 %v1574
        %v2124 = vunpack.c.l.b16 %v1575
        %v2125 = vunpack.c.l.b16 %v1576
        %v2126 = vunpack.c.l.b16 %v1577
        %v2127 = vunpack.c.l.b16 %v1578
        %v2128 = vunpack.c.l.b16 %v1579
        %v2129 = vunpack.c.l.b16 %v1580
        %v2130 = vunpack.c.l.b16 %v1581
        %v2131 = vunpack.c.l.b16 %v1582
        %v2132 = vunpack.c.l.b16 %v1583
        %v2133 = vunpack.c.l.b16 %v1584
        %v2134 = vunpack.c.l.b16 %v1585
        %v2135 = vunpack.c.l.b16 %v1586
        %v2136 = vunpack.c.l.b16 %v1587
        %v2137 = vunpack.c.l.b16 %v1588
        %v2138 = vunpack.c.l.b16 %v1589
        %v2139 = vunpack.c.l.b16 %v1590
        %v2140 = vunpack.c.l.b16 %v1591
        %v2141 = vunpack.c.l.b16 %v1592
        %v2142 = vunpack.c.l.b16 %v1593
        %v2143 = vunpack.c.l.b16 %v1594
        %v2144 = vunpack.c.l.b16 %v1595
        %v2145 = vunpack.c.l.b16 %v1596
        %v2146 = vunpack.c.l.b16 %v1597
        %v2147 = vunpack.c.l.b16 %v1598
        %v2148 = vunpack.c.l.b16 %v1599
        %v2149 = vunpack.c.l.b16 %v1600
        %v2150 = vunpack.c.l.b16 %v1601
        %v2151 = vunpack.c.l.b16 %v1602
        %v2152 = vunpack.c.l.b16 %v1603
        %v2153 = vunpack.c.l.b16 %v1604
        %v2154 = vunpack.c.l.b16 %v1605
        %v2155 = vunpack.c.l.b16 %v1606
        %v2156 = vunpack.c.l.b16 %v1607
        %v2157 = vunpack.c.l.b16 %v1608
        %v2158 = vunpack.c.l.b16 %v1609
        %v2159 = vunpack.c.l.b16 %v1610
        %v2160 = vunpack.c.l.b16 %v1611
        %v2161 = vunpack.c.l.b16 %v1612
        %v2162 = vunpack.c.l.b16 %v1613
        %v2163 = vunpack.c.l.b16 %v1614
        %v2164 = vunpack.c.l.b16 %v1615
        %v2165 = vunpack.c.l.b16 %v1616
        %v2166 = vunpack.c.l.b16 %v1617
        %v2167 = vunpack.c.l.b16 %v1618
        %v2168 = vunpack.c.l.b16 %v1619
        %v2169 = vunpack.c.l.b16 %v1620
        %v2170 = vunpack.c.l.b16 %v1621
        %v2171 = vunpack.c.l.b16 %v1622
        %v2172 = vunpack.c.l.b16 %v1623
        %v2173 = vunpack.c.l.b16 %v1624
        %v2174 = vunpack.c.l.b16 %v1625
        %v2175 = vunpack.c.l.b16 %v1626
        %v2176 = vunpack.c.l.b16 %v1627
        %v2177 = vunpack.c.l.b16 %v1628
        %v2178 = vunpack.c.l.b16 %v1629
        %v2179 = vunpack.c.l.b16 %v1630
        %v2180 = vunpack.c.l.b16 %v1631
        %v2181 = vunpack.c.l.b16 %v1632
        %v2182 = vunpack.c.l.b16 %v1633
        %v2183 = vunpack.c.l.b16 %v1634
        %v2184 = vunpack.c.l.b16 %v1635
        %v2185 = vunpack.c.l.b16 %v1636
        %v2186 = vunpack.c.l.b16 %v1637
        %v2187 = vunpack.c.l.b16 %v1638
        %v2188 = vunpack.c.l.b16 %v1639
        %v2189 = vunpack.c.l.b16 %v1640
        %v2190 = vunpack.c.l.b16 %v1641
        %v2191 = vunpack.c.l.b16 %v1642
        %v2192 = vunpack.c.l.b16 %v1643
        %v2193 = vunpack.c.l.b16 %v1644
        %v2194 = vunpack.c.l.b16 %v1645
        %v2195 = vunpack.c.l.b16 %v1646
        %v2196 = vunpack.c.l.b16 %v1647
        %v2197 = vunpack.c.l.b16 %v1648
        %v2198 = vunpack.c.l.b16 %v1649
        %v2199 = vunpack.c.l.b16 %v1650
        %v2200 = vunpack.c.l.b16 %v1651
        %v2201 = vunpack.c.l.b16 %v1652
        %v2202 = vunpack.c.l.b16 %v1653
        %v2203 = vunpack.c.l.b16 %v1654
        %v2204 = vunpack.c.l.b16 %v1655
        %v2205 = vunpack.c.l.b16 %v1656
        %v2206 = vunpack.c.l.b16 %v1657
        %v2207 = vunpack.c.l.b16 %v1658
        %v2208 = vunpack.c.l.b16 %v1659
        %v2209 = vunpack.c.l.b16 %v1660
        %v2210 = vunpack.c.l.b16 %v1661
        %v2211 = vunpack.c.l.b16 %v1662
        %v2212 = vunpack.c.l.b16 %v1663
        %v2213 = vunpack.c.l.b16 %v1664
        %v2214 = vunpack.c.l.b16 %v1665
        %v2215 = vunpack.c.l.b16 %v1666
        %v2216 = vunpack.c.l.b16 %v1667
        %v2217 = vunpack.c.l.b16 %v1668
        %v2218 = vunpack.c.l.b16 %v1669
        %v2219 = vunpack.c.l.b16 %v1670
        %v2220 = vunpack.c.l.b16 %v1671
        %v2221 = vunpack.c.l.b16 %v1672
        %v2222 = vunpack.c.l.b16 %v1673
        %v2223 = vunpack.c.l.b16 %v1674
        %v2224 = vunpack.c.l.b16 %v1675
        %v2225 = vunpack.c.l.b16 %v1676
        %v2226 = vunpack.c.l.b16 %v1677
        %v2227 = vunpack.c.l.b16 %v1678
        %v2228 = vunpack.c.l.b16 %v1679
        %v2229 = vunpack.c.l.b16 %v1680
        %v2230 = vunpack.c.l.b16 %v1681
        %v2231 = vunpack.c.l.b16 %v1682
        %v2232 = vunpack.c.l.b16 %v1683
        %v2233 = vunpack.c.l.b16 %v1684
        %v2234 = vunpack.c.l.b16 %v1685
        %v2235 = vunpack.c.l.b16 %v1686
        %v2236 = vunpack.c.l.b16 %v1687
        %v2237 = vpack.c.b16 %v2076, %v2075
        %v2238 = vpack.c.b16 %v2078, %v2077
        %v2239 = vpack.c.b16 %v2080, %v2079
        %v2240 = vpack.c.b16 %v2082, %v2081
        %v2241 = vpack.c.b16 %v2084, %v2083
        %v2242 = vpack.c.b16 %v2086, %v2085
        %v2243 = vpack.c.b16 %v2088, %v2087
        %v2244 = vpack.c.b16 %v2090, %v2089
        %v2245 = vpack.c.b16 %v2092, %v2091
        %v2246 = vpack.c.b16 %v2094, %v2093
        %v2247 = vpack.c.b16 %v2096, %v2095
        %v2248 = vpack.c.b16 %v2098, %v2097
        %v2249 = vpack.c.b16 %v2100, %v2099
        %v2250 = vpack.c.b16 %v2102, %v2101
        %v2251 = vpack.c.b16 %v2104, %v2103
        %v2252 = vpack.c.b16 %v2106, %v2105
        %v2253 = vpack.c.b16 %v2108, %v2107
        %v2254 = vpack.c.b16 %v2110, %v2109
        %v2255 = vpack.c.b16 %v2112, %v2111
        %v2256 = vpack.c.b16 %v2114, %v2113
        %v2257 = vpack.c.b16 %v2116, %v2115
        %v2258 = vpack.c.b16 %v2118, %v2117
        %v2259 = vpack.c.b16 %v2120, %v2119
        %v2260 = vpack.c.b16 %v2122, %v2121
        %v2261 = vpack.c.b16 %v2124, %v2123
        %v2262 = vpack.c.b16 %v2126, %v2125
        %v2263 = vpack.c.b16 %v2128, %v2127
        %v2264 = vpack.c.b16 %v2130, %v2129
        %v2265 = vpack.c.b16 %v2132, %v2131
        %v2266 = vpack.c.b16 %v2134, %v2133
        %v2267 = vpack.c.b16 %v2136, %v2135
        %v2268 = vpack.c.b16 %v2138, %v2137
        %v2269 = vpack.c.b16 %v2140, %v2139
        %v2270 = vpack.c.b16 %v2142, %v2141
        %v2271 = vpack.c.b16 %v2144, %v2143
        %v2272 = vpack.c.b16 %v2146, %v2145
        %v2273 = vpack.c.b16 %v2148, %v2147
        %v2274 = vpack.c.b16 %v2150, %v2149
        %v2275 = vpack.c.b16 %v2152, %v2151
        %v2276 = vpack.c.b16 %v2154, %v2153
        %v2277 = vpack.c.b16 %v2156, %v2155
        %v2278 = vpack.c.b16 %v2158, %v2157
        %v2279 = vpack.c.b16 %v2160, %v2159
        %v2280 = vpack.c.b16 %v2162, %v2161
        %v2281 = vpack.c.b16 %v2164, %v2163
        %v2282 = vpack.c.b16 %v2166, %v2165
        %v2283 = vpack.c.b16 %v2168, %v2167
        %v2284 = vpack.c.b16 %v2170, %v2169
        %v2285 = vpack.c.b16 %v2172, %v2171
        %v2286 = vpack.c.b16 %v2174, %v2173
        %v2287 = vpack.c.b16 %v2176, %v2175
        %v2288 = vpack.c.b16 %v2178, %v2177
        %v2289 = vpack.c.b16 %v2180, %v2179
        %v2290 = vpack.c.b16 %v2182, %v2181
        %v2291 = vpack.c.b16 %v2184, %v2183
        %v2292 = vpack.c.b16 %v2186, %v2185
        %v2293 = vpack.c.b16 %v2188, %v2187
        %v2294 = vpack.c.b16 %v2190, %v2189
        %v2295 = vpack.c.b16 %v2192, %v2191
        %v2296 = vpack.c.b16 %v2194, %v2193
        %v2297 = vpack.c.b16 %v2196, %v2195
        %v2298 = vpack.c.b16 %v2198, %v2197
        %v2299 = vpack.c.b16 %v2200, %v2199
        %v2300 = vpack.c.b16 %v2202, %v2201
        %v2301 = vpack.c.b16 %v2204, %v2203
        %v2302 = vpack.c.b16 %v2206, %v2205
        %v2303 = vpack.c.b16 %v2208, %v2207
        %v2304 = vpack.c.b16 %v2210, %v2209
        %v2305 = vpack.c.b16 %v2212, %v2211
        %v2306 = vpack.c.b16 %v2214, %v2213
        %v2307 = vpack.c.b16 %v2216, %v2215
        %v2308 = vpack.c.b16 %v2218, %v2217
        %v2309 = vpack.c.b16 %v2220, %v2219
        %v2310 = vpack.c.b16 %v2222, %v2221
        %v2311 = vpack.c.b16 %v2224, %v2223
        %v2312 = vpack.c.b16 %v2226, %v2225
        %v2313 = vpack.c.b16 %v2228, %v2227
        %v2314 = vpack.c.b16 %v2230, %v2229
        %v2315 = vpack.c.b16 %v2232, %v2231
        %v2316 = vpack.c.b16 %v2234, %v2233
        %v2317 = vpack.c.b16 %v2236, %v2235
        %vm2399 = vcmask 130048
        %v2401 = vsel %vm2399, %v1901, 0
        %2403 = vmatprep.subr.bf16.mxu0 0
        %2404 = vmatpush1.bf16.msra.mxu0 %v2244
        %2405 = vmatprep.subr.bf16.mxu0 0
        %2406 = vmatpush1.bf16.msra.mxu0 %v2243
        %2407 = vmatprep.subr.bf16.mxu0 0
        %2408 = vmatpush1.bf16.msra.mxu0 %v2242
        %2409 = vmatprep.subr.bf16.mxu0 0
        %2410 = vmatpush1.bf16.msra.mxu0 %v2241
        %2411 = vmatprep.subr.bf16.mxu0 0
        %2412 = vmatpush1.bf16.msra.mxu0 %v2240
        %2413 = vmatprep.subr.bf16.mxu0 0
        %2414 = vmatpush1.bf16.msra.mxu0 %v2239
        %2415 = vmatprep.subr.bf16.mxu0 0
        %2416 = vmatpush1.bf16.msra.mxu0 %v2238
        %2417 = vmatprep.subr.bf16.mxu0 0
        %2418 = vmatpush1.bf16.msra.mxu0 %v2237
        %2419 = vmatprep.subr.bf16.mxu0 0
        %2420 = vmatpush2.bf16.msra.mxu0 %v2252
        %2421 = vmatprep.subr.bf16.mxu0 0
        %2422 = vmatpush2.bf16.msra.mxu0 %v2251
        %2423 = vmatprep.subr.bf16.mxu0 0
        %2424 = vmatpush2.bf16.msra.mxu0 %v2250
        %2425 = vmatprep.subr.bf16.mxu0 0
        %2426 = vmatpush2.bf16.msra.mxu0 %v2249
        %2427 = vmatprep.subr.bf16.mxu0 0
        %2428 = vmatpush2.bf16.msra.mxu0 %v2248
        %2429 = vmatprep.subr.bf16.mxu0 0
        %2430 = vmatpush2.bf16.msra.mxu0 %v2247
        %2431 = vmatprep.subr.bf16.mxu0 0
        %2432 = vmatpush2.bf16.msra.mxu0 %v2246
        %2433 = vmatprep.subr.bf16.mxu0 0
        %2434 = vmatpush2.bf16.msra.mxu0 %v2245
        %2435 = vmatprep.mubr.bf16.mxu0 %v1868
        %2436 = vmatmul.mubr.bf16.gmra.mxu0 %v1860
        %v2437 = vpop.f32.mrf.mxu0
        %v2438 = vadd.f32 0.0, %v2437
        %v2439 = vpop.f32.mrf.mxu0
        %v2440 = vpop.f32.mrf.mxu0
        %v2441 = vpop.f32.mrf.mxu0
        %2442 = vdwg.mxu0
        %2443 = vmatprep.subr.bf16.mxu0 0
        %2444 = vmatpush1.bf16.msra.mxu0 %v2260
        %2445 = vmatprep.subr.bf16.mxu0 0
        %2446 = vmatpush1.bf16.msra.mxu0 %v2259
        %2447 = vmatprep.subr.bf16.mxu0 0
        %2448 = vmatpush1.bf16.msra.mxu0 %v2258
        %2449 = vmatprep.subr.bf16.mxu0 0
        %2450 = vmatpush1.bf16.msra.mxu0 %v2257
        %2451 = vmatprep.subr.bf16.mxu0 0
        %2452 = vmatpush1.bf16.msra.mxu0 %v2256
        %2453 = vmatprep.subr.bf16.mxu0 0
        %2454 = vmatpush1.bf16.msra.mxu0 %v2255
        %2455 = vmatprep.subr.bf16.mxu0 0
        %2456 = vmatpush1.bf16.msra.mxu0 %v2254
        %2457 = vmatprep.subr.bf16.mxu0 0
        %2458 = vmatpush1.bf16.msra.mxu0 %v2253
        %2459 = vmatprep.subr.bf16.mxu0 0
        %2460 = vmatpush2.bf16.msra.mxu0 %v2268
        %2461 = vmatprep.subr.bf16.mxu0 0
        %2462 = vmatpush2.bf16.msra.mxu0 %v2267
        %2463 = vmatprep.subr.bf16.mxu0 0
        %2464 = vmatpush2.bf16.msra.mxu0 %v2266
        %2465 = vmatprep.subr.bf16.mxu0 0
        %2466 = vmatpush2.bf16.msra.mxu0 %v2265
        %2467 = vmatprep.subr.bf16.mxu0 0
        %2468 = vmatpush2.bf16.msra.mxu0 %v2264
        %2469 = vmatprep.subr.bf16.mxu0 0
        %2470 = vmatpush2.bf16.msra.mxu0 %v2263
        %2471 = vmatprep.subr.bf16.mxu0 0
        %2472 = vmatpush2.bf16.msra.mxu0 %v2262
        %2473 = vmatprep.subr.bf16.mxu0 0
        %2474 = vmatpush2.bf16.msra.mxu0 %v2261
        %2475 = vmatprep.mubr.bf16.mxu0 %v1869
        %2476 = vmatmul.mubr.bf16.gmra.mxu0 %v1867
        %v2477 = vpop.f32.mrf.mxu0
        %v2478 = vadd.f32 %v2438, %v2477
        %v2479 = vpop.f32.mrf.mxu0
        %v2480 = vpop.f32.mrf.mxu0
        %v2481 = vpop.f32.mrf.mxu0
        %2482 = vdwg.mxu0
        %2483 = vmatprep.subr.bf16.mxu0 0
        %2484 = vmatpush1.bf16.msra.mxu0 %v2276
        %2485 = vmatprep.subr.bf16.mxu0 0
        %2486 = vmatpush1.bf16.msra.mxu0 %v2275
        %2487 = vmatprep.subr.bf16.mxu0 0
        %2488 = vmatpush1.bf16.msra.mxu0 %v2274
        %2489 = vmatprep.subr.bf16.mxu0 0
        %2490 = vmatpush1.bf16.msra.mxu0 %v2273
        %2491 = vmatprep.subr.bf16.mxu0 0
        %2492 = vmatpush1.bf16.msra.mxu0 %v2272
        %2493 = vmatprep.subr.bf16.mxu0 0
        %2494 = vmatpush1.bf16.msra.mxu0 %v2271
        %2495 = vmatprep.subr.bf16.mxu0 0
        %2496 = vmatpush1.bf16.msra.mxu0 %v2270
        %2497 = vmatprep.subr.bf16.mxu0 0
        %2498 = vmatpush1.bf16.msra.mxu0 %v2269
        %2499 = vmatprep.subr.bf16.mxu0 0
        %2500 = vmatpush2.bf16.msra.mxu0 %v2284
        %2501 = vmatprep.subr.bf16.mxu0 0
        %2502 = vmatpush2.bf16.msra.mxu0 %v2283
        %2503 = vmatprep.subr.bf16.mxu0 0
        %2504 = vmatpush2.bf16.msra.mxu0 %v2282
        %2505 = vmatprep.subr.bf16.mxu0 0
        %2506 = vmatpush2.bf16.msra.mxu0 %v2281
        %2507 = vmatprep.subr.bf16.mxu0 0
        %2508 = vmatpush2.bf16.msra.mxu0 %v2280
        %2509 = vmatprep.subr.bf16.mxu0 0
        %2510 = vmatpush2.bf16.msra.mxu0 %v2279
        %2511 = vmatprep.subr.bf16.mxu0 0
        %2512 = vmatpush2.bf16.msra.mxu0 %v2278
        %2513 = vmatprep.subr.bf16.mxu0 0
        %2514 = vmatpush2.bf16.msra.mxu0 %v2277
        %2515 = vmatprep.mubr.bf16.mxu0 %v1885
        %2516 = vmatmul.mubr.bf16.gmra.mxu0 %v1877
        %v2517 = vpop.f32.mrf.mxu0
        %v2518 = vadd.f32 %v2478, %v2517
        %v2519 = vpop.f32.mrf.mxu0
        %v2520 = vpop.f32.mrf.mxu0
        %v2521 = vpop.f32.mrf.mxu0
        %2522 = vdwg.mxu0
        %2523 = vmatprep.subr.bf16.mxu0 0
        %2524 = vmatpush1.bf16.msra.mxu0 %v2292
        %2525 = vmatprep.subr.bf16.mxu0 0
        %2526 = vmatpush1.bf16.msra.mxu0 %v2291
        %2527 = vmatprep.subr.bf16.mxu0 0
        %2528 = vmatpush1.bf16.msra.mxu0 %v2290
        %2529 = vmatprep.subr.bf16.mxu0 0
        %2530 = vmatpush1.bf16.msra.mxu0 %v2289
        %2531 = vmatprep.subr.bf16.mxu0 0
        %2532 = vmatpush1.bf16.msra.mxu0 %v2288
        %2533 = vmatprep.subr.bf16.mxu0 0
        %2534 = vmatpush1.bf16.msra.mxu0 %v2287
        %2535 = vmatprep.subr.bf16.mxu0 0
        %2536 = vmatpush1.bf16.msra.mxu0 %v2286
        %2537 = vmatprep.subr.bf16.mxu0 0
        %2538 = vmatpush1.bf16.msra.mxu0 %v2285
        %2539 = vmatprep.subr.bf16.mxu0 0
        %2540 = vmatpush2.bf16.msra.mxu0 %v2300
        %2541 = vmatprep.subr.bf16.mxu0 0
        %2542 = vmatpush2.bf16.msra.mxu0 %v2299
        %2543 = vmatprep.subr.bf16.mxu0 0
        %2544 = vmatpush2.bf16.msra.mxu0 %v2298
        %2545 = vmatprep.subr.bf16.mxu0 0
        %2546 = vmatpush2.bf16.msra.mxu0 %v2297
        %2547 = vmatprep.subr.bf16.mxu0 0
        %2548 = vmatpush2.bf16.msra.mxu0 %v2296
        %2549 = vmatprep.subr.bf16.mxu0 0
        %2550 = vmatpush2.bf16.msra.mxu0 %v2295
        %2551 = vmatprep.subr.bf16.mxu0 0
        %2552 = vmatpush2.bf16.msra.mxu0 %v2294
        %2553 = vmatprep.subr.bf16.mxu0 0
        %2554 = vmatpush2.bf16.msra.mxu0 %v2293
        %2555 = vmatprep.mubr.bf16.mxu0 %v1886
        %2556 = vmatmul.mubr.bf16.gmra.mxu0 %v1884
        %v2557 = vpop.f32.mrf.mxu0
        %v2558 = vadd.f32 %v2518, %v2557
        %v2559 = vpop.f32.mrf.mxu0
        %v2560 = vpop.f32.mrf.mxu0
        %v2561 = vpop.f32.mrf.mxu0
        %2562 = vdwg.mxu0
        %2563 = vmatprep.subr.bf16.mxu0 0
        %2564 = vmatpush1.bf16.msra.mxu0 %v2308
        %2565 = vmatprep.subr.bf16.mxu0 0
        %2566 = vmatpush1.bf16.msra.mxu0 %v2307
        %2567 = vmatprep.subr.bf16.mxu0 0
        %2568 = vmatpush1.bf16.msra.mxu0 %v2306
        %2569 = vmatprep.subr.bf16.mxu0 0
        %2570 = vmatpush1.bf16.msra.mxu0 %v2305
        %2571 = vmatprep.subr.bf16.mxu0 0
        %2572 = vmatpush1.bf16.msra.mxu0 %v2304
        %2573 = vmatprep.subr.bf16.mxu0 0
        %2574 = vmatpush1.bf16.msra.mxu0 %v2303
        %2575 = vmatprep.subr.bf16.mxu0 0
        %2576 = vmatpush1.bf16.msra.mxu0 %v2302
        %2577 = vmatprep.subr.bf16.mxu0 0
        %2578 = vmatpush1.bf16.msra.mxu0 %v2301
        %2579 = vmatprep.subr.bf16.mxu0 0
        %2580 = vmatpush2.bf16.msra.mxu0 %v2316
        %2581 = vmatprep.subr.bf16.mxu0 0
        %2582 = vmatpush2.bf16.msra.mxu0 %v2315
        %2583 = vmatprep.subr.bf16.mxu0 0
        %2584 = vmatpush2.bf16.msra.mxu0 %v2314
        %2585 = vmatprep.subr.bf16.mxu0 0
        %2586 = vmatpush2.bf16.msra.mxu0 %v2313
        %2587 = vmatprep.subr.bf16.mxu0 0
        %2588 = vmatpush2.bf16.msra.mxu0 %v2312
        %2589 = vmatprep.subr.bf16.mxu0 0
        %2590 = vmatpush2.bf16.msra.mxu0 %v2311
        %2591 = vmatprep.subr.bf16.mxu0 0
        %2592 = vmatpush2.bf16.msra.mxu0 %v2310
        %2593 = vmatprep.subr.bf16.mxu0 0
        %2594 = vmatpush2.bf16.msra.mxu0 %v2309
        %2595 = vmatprep.mubr.bf16.mxu0 %v1902
        %2596 = vmatmul.mubr.bf16.gmra.mxu0 %v1894
        %v2597 = vpop.f32.mrf.mxu0
        %v2598 = vadd.f32 %v2558, %v2597
        %v2599 = vpop.f32.mrf.mxu0
        %v2600 = vpop.f32.mrf.mxu0
        %v2601 = vpop.f32.mrf.mxu0
        %2602 = vdwg.mxu0
        %2603 = vmatprep.subr.bf16.mxu0 0
        %2604 = vmatpush1.bf16.msra.mxu0 0
        %2605 = vmatprep.subr.bf16.mxu0 0
        %2606 = vmatpush1.bf16.msra.mxu0 0
        %2607 = vmatprep.subr.bf16.mxu0 0
        %2608 = vmatpush1.bf16.msra.mxu0 0
        %2609 = vmatprep.subr.bf16.mxu0 0
        %2610 = vmatpush1.bf16.msra.mxu0 0
        %2611 = vmatprep.subr.bf16.mxu0 0
        %2612 = vmatpush1.bf16.msra.mxu0 0
        %2613 = vmatprep.subr.bf16.mxu0 0
        %2614 = vmatpush1.bf16.msra.mxu0 0
        %2615 = vmatprep.subr.bf16.mxu0 0
        %2616 = vmatpush1.bf16.msra.mxu0 0
        %2617 = vmatprep.subr.bf16.mxu0 0
        %2618 = vmatpush1.bf16.msra.mxu0 %v2317
        %2619 = vmatprep.subr.bf16.mxu0 0
        %2620 = vmatpush2.bf16.msra.mxu0 0
        %2621 = vmatprep.subr.bf16.mxu0 0
        %2622 = vmatpush2.bf16.msra.mxu0 0
        %2623 = vmatprep.subr.bf16.mxu0 0
        %2624 = vmatpush2.bf16.msra.mxu0 0
        %2625 = vmatprep.subr.bf16.mxu0 0
        %2626 = vmatpush2.bf16.msra.mxu0 0
        %2627 = vmatprep.subr.bf16.mxu0 0
        %2628 = vmatpush2.bf16.msra.mxu0 0
        %2629 = vmatprep.subr.bf16.mxu0 0
        %2630 = vmatpush2.bf16.msra.mxu0 0
        %2631 = vmatprep.subr.bf16.mxu0 0
        %2632 = vmatpush2.bf16.msra.mxu0 0
        %2633 = vmatprep.subr.bf16.mxu0 0
        %2634 = vmatpush2.bf16.msra.mxu0 0
        %2635 = vmatprep.mubr.bf16.mxu0 0
        %2636 = vmatmul.mubr.bf16.gmra.mxu0 %v2401
        %v2637 = vpop.f32.mrf.mxu0
        %v2638 = vadd.f32 %v2598, %v2637
        %v2639 = vpop.f32.mrf.mxu0
        %v2640 = vpop.f32.mrf.mxu0
        %v2641 = vpop.f32.mrf.mxu0
        %2642 = vdwg.mxu0
        %v2646 = vcombine.high %v1523, %v1523
        %v2648 = vunpack.c.l.s4 1983009808
        %v2649 = vunpack.c.0.s8 %v2648
        %v2650 = vlaneseq
        %v2651 = vshrl.u32 %v2650, 7
        %v2652 = vsub.s32 %v2649, %v2651
        %v2653 = vrot.slane %v1523, %v2652
        %v2655 = vunpack.c.l.s4 1983009808
        %v2656 = vunpack.c.0.s8 %v2655
        %v2657 = vlaneseq
        %v2658 = vshrl.u32 %v2657, 7
        %v2659 = vsub.s32 %v2656, %v2658
        %v2660 = vrot.slane %v2646, %v2659
        %v2661 = vcombine.high %v2653, %v2653
        %v2662 = vcombine.high %v2660, %v2660
        %v2663 = vcombine.high %v1524, %v1524
        %v2665 = vunpack.c.l.s4 1983009808
        %v2666 = vunpack.c.0.s8 %v2665
        %v2667 = vlaneseq
        %v2668 = vshrl.u32 %v2667, 7
        %v2669 = vsub.s32 %v2666, %v2668
        %v2670 = vrot.slane %v1524, %v2669
        %v2672 = vunpack.c.l.s4 1983009808
        %v2673 = vunpack.c.0.s8 %v2672
        %v2674 = vlaneseq
        %v2675 = vshrl.u32 %v2674, 7
        %v2676 = vsub.s32 %v2673, %v2675
        %v2677 = vrot.slane %v2663, %v2676
        %v2678 = vcombine.high %v2670, %v2670
        %v2679 = vcombine.high %v2677, %v2677
        %v2680 = vcombine.high %v1525, %v1525
        %v2682 = vunpack.c.l.s4 1983009808
        %v2683 = vunpack.c.0.s8 %v2682
        %v2684 = vlaneseq
        %v2685 = vshrl.u32 %v2684, 7
        %v2686 = vsub.s32 %v2683, %v2685
        %v2687 = vrot.slane %v1525, %v2686
        %v2689 = vunpack.c.l.s4 1983009808
        %v2690 = vunpack.c.0.s8 %v2689
        %v2691 = vlaneseq
        %v2692 = vshrl.u32 %v2691, 7
        %v2693 = vsub.s32 %v2690, %v2692
        %v2694 = vrot.slane %v2680, %v2693
        %v2695 = vcombine.high %v2687, %v2687
        %v2868 = vunpack.c.l.b16 %v1688
        %v2869 = vunpack.c.l.b16 %v1689
        %v2870 = vunpack.c.l.b16 %v1690
        %v2871 = vunpack.c.l.b16 %v1691
        %v2872 = vunpack.c.l.b16 %v1692
        %v2873 = vunpack.c.l.b16 %v1693
        %v2874 = vunpack.c.l.b16 %v1694
        %v2875 = vunpack.c.l.b16 %v1695
        %v2876 = vunpack.c.l.b16 %v1696
        %v2877 = vunpack.c.l.b16 %v1697
        %v2878 = vunpack.c.l.b16 %v1698
        %v2879 = vunpack.c.l.b16 %v1699
        %v2880 = vunpack.c.l.b16 %v1700
        %v2881 = vunpack.c.l.b16 %v1701
        %v2882 = vunpack.c.l.b16 %v1702
        %v2883 = vunpack.c.l.b16 %v1703
        %v2884 = vunpack.c.l.b16 %v1704
        %v2885 = vunpack.c.l.b16 %v1705
        %v2886 = vunpack.c.l.b16 %v1706
        %v2887 = vunpack.c.l.b16 %v1707
        %v2888 = vunpack.c.l.b16 %v1708
        %v2889 = vunpack.c.l.b16 %v1709
        %v2890 = vunpack.c.l.b16 %v1710
        %v2891 = vunpack.c.l.b16 %v1711
        %v2892 = vunpack.c.l.b16 %v1712
        %v2893 = vunpack.c.l.b16 %v1713
        %v2894 = vunpack.c.l.b16 %v1714
        %v2895 = vunpack.c.l.b16 %v1715
        %v2896 = vunpack.c.l.b16 %v1716
        %v2897 = vunpack.c.l.b16 %v1717
        %v2898 = vunpack.c.l.b16 %v1718
        %v2899 = vunpack.c.l.b16 %v1719
        %v2900 = vunpack.c.l.b16 %v1720
        %v2901 = vunpack.c.l.b16 %v1721
        %v2902 = vunpack.c.l.b16 %v1722
        %v2903 = vunpack.c.l.b16 %v1723
        %v2904 = vunpack.c.l.b16 %v1724
        %v2905 = vunpack.c.l.b16 %v1725
        %v2906 = vunpack.c.l.b16 %v1726
        %v2907 = vunpack.c.l.b16 %v1727
        %v2908 = vunpack.c.l.b16 %v1728
        %v2909 = vunpack.c.l.b16 %v1729
        %v2910 = vunpack.c.l.b16 %v1730
        %v2911 = vunpack.c.l.b16 %v1731
        %v2912 = vunpack.c.l.b16 %v1732
        %v2913 = vunpack.c.l.b16 %v1733
        %v2914 = vunpack.c.l.b16 %v1734
        %v2915 = vunpack.c.l.b16 %v1735
        %v2916 = vunpack.c.l.b16 %v1736
        %v2917 = vunpack.c.l.b16 %v1737
        %v2918 = vunpack.c.l.b16 %v1738
        %v2919 = vunpack.c.l.b16 %v1739
        %v2920 = vunpack.c.l.b16 %v1740
        %v2921 = vunpack.c.l.b16 %v1741
        %v2922 = vunpack.c.l.b16 %v1742
        %v2923 = vunpack.c.l.b16 %v1743
        %v2924 = vunpack.c.l.b16 %v1744
        %v2925 = vunpack.c.l.b16 %v1745
        %v2926 = vunpack.c.l.b16 %v1746
        %v2927 = vunpack.c.l.b16 %v1747
        %v2928 = vunpack.c.l.b16 %v1748
        %v2929 = vunpack.c.l.b16 %v1749
        %v2930 = vunpack.c.l.b16 %v1750
        %v2931 = vunpack.c.l.b16 %v1751
        %v2932 = vunpack.c.l.b16 %v1752
        %v2933 = vunpack.c.l.b16 %v1753
        %v2934 = vunpack.c.l.b16 %v1754
        %v2935 = vunpack.c.l.b16 %v1755
        %v2936 = vunpack.c.l.b16 %v1756
        %v2937 = vunpack.c.l.b16 %v1757
        %v2938 = vunpack.c.l.b16 %v1758
        %v2939 = vunpack.c.l.b16 %v1759
        %v2940 = vunpack.c.l.b16 %v1760
        %v2941 = vunpack.c.l.b16 %v1761
        %v2942 = vunpack.c.l.b16 %v1762
        %v2943 = vunpack.c.l.b16 %v1763
        %v2944 = vunpack.c.l.b16 %v1764
        %v2945 = vunpack.c.l.b16 %v1765
        %v2946 = vunpack.c.l.b16 %v1766
        %v2947 = vunpack.c.l.b16 %v1767
        %v2948 = vunpack.c.l.b16 %v1768
        %v2949 = vunpack.c.l.b16 %v1769
        %v2950 = vunpack.c.l.b16 %v1770
        %v2951 = vunpack.c.l.b16 %v1771
        %v2952 = vunpack.c.l.b16 %v1772
        %v2953 = vunpack.c.l.b16 %v1773
        %v2954 = vunpack.c.l.b16 %v1774
        %v2955 = vunpack.c.l.b16 %v1775
        %v2956 = vunpack.c.l.b16 %v1776
        %v2957 = vunpack.c.l.b16 %v1777
        %v2958 = vunpack.c.l.b16 %v1778
        %v2959 = vunpack.c.l.b16 %v1779
        %v2960 = vunpack.c.l.b16 %v1780
        %v2961 = vunpack.c.l.b16 %v1781
        %v2962 = vunpack.c.l.b16 %v1782
        %v2963 = vunpack.c.l.b16 %v1783
        %v2964 = vunpack.c.l.b16 %v1784
        %v2965 = vunpack.c.l.b16 %v1785
        %v2966 = vunpack.c.l.b16 %v1786
        %v2967 = vunpack.c.l.b16 %v1787
        %v2968 = vunpack.c.l.b16 %v1788
        %v2969 = vunpack.c.l.b16 %v1789
        %v2970 = vunpack.c.l.b16 %v1790
        %v2971 = vunpack.c.l.b16 %v1791
        %v2972 = vunpack.c.l.b16 %v1792
        %v2973 = vunpack.c.l.b16 %v1793
        %v2974 = vunpack.c.l.b16 %v1794
        %v2975 = vunpack.c.l.b16 %v1795
        %v2976 = vunpack.c.l.b16 %v1796
        %v2977 = vunpack.c.l.b16 %v1797
        %v2978 = vunpack.c.l.b16 %v1798
        %v2979 = vunpack.c.l.b16 %v1799
        %v2980 = vunpack.c.l.b16 %v1800
        %v2981 = vunpack.c.l.b16 %v1801
        %v2982 = vunpack.c.l.b16 %v1802
        %v2983 = vunpack.c.l.b16 %v1803
        %v2984 = vunpack.c.l.b16 %v1804
        %v2985 = vunpack.c.l.b16 %v1805
        %v2986 = vunpack.c.l.b16 %v1806
        %v2987 = vunpack.c.l.b16 %v1807
        %v2988 = vunpack.c.l.b16 %v1808
        %v2989 = vunpack.c.l.b16 %v1809
        %v2990 = vunpack.c.l.b16 %v1810
        %v2991 = vunpack.c.l.b16 %v1811
        %v2992 = vunpack.c.l.b16 %v1812
        %v2993 = vunpack.c.l.b16 %v1813
        %v2994 = vunpack.c.l.b16 %v1814
        %v2995 = vunpack.c.l.b16 %v1815
        %v2996 = vunpack.c.l.b16 %v1816
        %v2997 = vunpack.c.l.b16 %v1817
        %v2998 = vunpack.c.l.b16 %v1818
        %v2999 = vunpack.c.l.b16 %v1819
        %v3000 = vunpack.c.l.b16 %v1820
        %v3001 = vunpack.c.l.b16 %v1821
        %v3002 = vunpack.c.l.b16 %v1822
        %v3003 = vunpack.c.l.b16 %v1823
        %v3004 = vunpack.c.l.b16 %v1824
        %v3005 = vunpack.c.l.b16 %v1825
        %v3006 = vunpack.c.l.b16 %v1826
        %v3007 = vunpack.c.l.b16 %v1827
        %v3008 = vunpack.c.l.b16 %v1828
        %v3009 = vunpack.c.l.b16 %v1829
        %v3010 = vunpack.c.l.b16 %v1830
        %v3011 = vunpack.c.l.b16 %v1831
        %v3012 = vunpack.c.l.b16 %v1832
        %v3013 = vunpack.c.l.b16 %v1833
        %v3014 = vunpack.c.l.b16 %v1834
        %v3015 = vunpack.c.l.b16 %v1835
        %v3016 = vunpack.c.l.b16 %v1836
        %v3017 = vunpack.c.l.b16 %v1837
        %v3018 = vunpack.c.l.b16 %v1838
        %v3019 = vunpack.c.l.b16 %v1839
        %v3020 = vunpack.c.l.b16 %v1840
        %v3021 = vunpack.c.l.b16 %v1841
        %v3022 = vunpack.c.l.b16 %v1842
        %v3023 = vunpack.c.l.b16 %v1843
        %v3024 = vunpack.c.l.b16 %v1844
        %v3025 = vunpack.c.l.b16 %v1845
        %v3026 = vunpack.c.l.b16 %v1846
        %v3027 = vunpack.c.l.b16 %v1847
        %v3028 = vunpack.c.l.b16 %v1848
        %v3029 = vunpack.c.l.b16 %v1849
        %v3030 = vpack.c.b16 %v2869, %v2868
        %v3031 = vpack.c.b16 %v2871, %v2870
        %v3032 = vpack.c.b16 %v2873, %v2872
        %v3033 = vpack.c.b16 %v2875, %v2874
        %v3034 = vpack.c.b16 %v2877, %v2876
        %v3035 = vpack.c.b16 %v2879, %v2878
        %v3036 = vpack.c.b16 %v2881, %v2880
        %v3037 = vpack.c.b16 %v2883, %v2882
        %v3038 = vpack.c.b16 %v2885, %v2884
        %v3039 = vpack.c.b16 %v2887, %v2886
        %v3040 = vpack.c.b16 %v2889, %v2888
        %v3041 = vpack.c.b16 %v2891, %v2890
        %v3042 = vpack.c.b16 %v2893, %v2892
        %v3043 = vpack.c.b16 %v2895, %v2894
        %v3044 = vpack.c.b16 %v2897, %v2896
        %v3045 = vpack.c.b16 %v2899, %v2898
        %v3046 = vpack.c.b16 %v2901, %v2900
        %v3047 = vpack.c.b16 %v2903, %v2902
        %v3048 = vpack.c.b16 %v2905, %v2904
        %v3049 = vpack.c.b16 %v2907, %v2906
        %v3050 = vpack.c.b16 %v2909, %v2908
        %v3051 = vpack.c.b16 %v2911, %v2910
        %v3052 = vpack.c.b16 %v2913, %v2912
        %v3053 = vpack.c.b16 %v2915, %v2914
        %v3054 = vpack.c.b16 %v2917, %v2916
        %v3055 = vpack.c.b16 %v2919, %v2918
        %v3056 = vpack.c.b16 %v2921, %v2920
        %v3057 = vpack.c.b16 %v2923, %v2922
        %v3058 = vpack.c.b16 %v2925, %v2924
        %v3059 = vpack.c.b16 %v2927, %v2926
        %v3060 = vpack.c.b16 %v2929, %v2928
        %v3061 = vpack.c.b16 %v2931, %v2930
        %v3062 = vpack.c.b16 %v2933, %v2932
        %v3063 = vpack.c.b16 %v2935, %v2934
        %v3064 = vpack.c.b16 %v2937, %v2936
        %v3065 = vpack.c.b16 %v2939, %v2938
        %v3066 = vpack.c.b16 %v2941, %v2940
        %v3067 = vpack.c.b16 %v2943, %v2942
        %v3068 = vpack.c.b16 %v2945, %v2944
        %v3069 = vpack.c.b16 %v2947, %v2946
        %v3070 = vpack.c.b16 %v2949, %v2948
        %v3071 = vpack.c.b16 %v2951, %v2950
        %v3072 = vpack.c.b16 %v2953, %v2952
        %v3073 = vpack.c.b16 %v2955, %v2954
        %v3074 = vpack.c.b16 %v2957, %v2956
        %v3075 = vpack.c.b16 %v2959, %v2958
        %v3076 = vpack.c.b16 %v2961, %v2960
        %v3077 = vpack.c.b16 %v2963, %v2962
        %v3078 = vpack.c.b16 %v2965, %v2964
        %v3079 = vpack.c.b16 %v2967, %v2966
        %v3080 = vpack.c.b16 %v2969, %v2968
        %v3081 = vpack.c.b16 %v2971, %v2970
        %v3082 = vpack.c.b16 %v2973, %v2972
        %v3083 = vpack.c.b16 %v2975, %v2974
        %v3084 = vpack.c.b16 %v2977, %v2976
        %v3085 = vpack.c.b16 %v2979, %v2978
        %v3086 = vpack.c.b16 %v2981, %v2980
        %v3087 = vpack.c.b16 %v2983, %v2982
        %v3088 = vpack.c.b16 %v2985, %v2984
        %v3089 = vpack.c.b16 %v2987, %v2986
        %v3090 = vpack.c.b16 %v2989, %v2988
        %v3091 = vpack.c.b16 %v2991, %v2990
        %v3092 = vpack.c.b16 %v2993, %v2992
        %v3093 = vpack.c.b16 %v2995, %v2994
        %v3094 = vpack.c.b16 %v2997, %v2996
        %v3095 = vpack.c.b16 %v2999, %v2998
        %v3096 = vpack.c.b16 %v3001, %v3000
        %v3097 = vpack.c.b16 %v3003, %v3002
        %v3098 = vpack.c.b16 %v3005, %v3004
        %v3099 = vpack.c.b16 %v3007, %v3006
        %v3100 = vpack.c.b16 %v3009, %v3008
        %v3101 = vpack.c.b16 %v3011, %v3010
        %v3102 = vpack.c.b16 %v3013, %v3012
        %v3103 = vpack.c.b16 %v3015, %v3014
        %v3104 = vpack.c.b16 %v3017, %v3016
        %v3105 = vpack.c.b16 %v3019, %v3018
        %v3106 = vpack.c.b16 %v3021, %v3020
        %v3107 = vpack.c.b16 %v3023, %v3022
        %v3108 = vpack.c.b16 %v3025, %v3024
        %v3109 = vpack.c.b16 %v3027, %v3026
        %v3110 = vpack.c.b16 %v3029, %v3028
        %v3193 = vsel %vm2399, %v2694, 0
        %3195 = vmatprep.subr.bf16.mxu0 0
        %3196 = vmatpush1.bf16.msra.mxu0 %v3037
        %3197 = vmatprep.subr.bf16.mxu0 0
        %3198 = vmatpush1.bf16.msra.mxu0 %v3036
        %3199 = vmatprep.subr.bf16.mxu0 0
        %3200 = vmatpush1.bf16.msra.mxu0 %v3035
        %3201 = vmatprep.subr.bf16.mxu0 0
        %3202 = vmatpush1.bf16.msra.mxu0 %v3034
        %3203 = vmatprep.subr.bf16.mxu0 0
        %3204 = vmatpush1.bf16.msra.mxu0 %v3033
        %3205 = vmatprep.subr.bf16.mxu0 0
        %3206 = vmatpush1.bf16.msra.mxu0 %v3032
        %3207 = vmatprep.subr.bf16.mxu0 0
        %3208 = vmatpush1.bf16.msra.mxu0 %v3031
        %3209 = vmatprep.subr.bf16.mxu0 0
        %3210 = vmatpush1.bf16.msra.mxu0 %v3030
        %3211 = vmatprep.subr.bf16.mxu0 0
        %3212 = vmatpush2.bf16.msra.mxu0 %v3045
        %3213 = vmatprep.subr.bf16.mxu0 0
        %3214 = vmatpush2.bf16.msra.mxu0 %v3044
        %3215 = vmatprep.subr.bf16.mxu0 0
        %3216 = vmatpush2.bf16.msra.mxu0 %v3043
        %3217 = vmatprep.subr.bf16.mxu0 0
        %3218 = vmatpush2.bf16.msra.mxu0 %v3042
        %3219 = vmatprep.subr.bf16.mxu0 0
        %3220 = vmatpush2.bf16.msra.mxu0 %v3041
        %3221 = vmatprep.subr.bf16.mxu0 0
        %3222 = vmatpush2.bf16.msra.mxu0 %v3040
        %3223 = vmatprep.subr.bf16.mxu0 0
        %3224 = vmatpush2.bf16.msra.mxu0 %v3039
        %3225 = vmatprep.subr.bf16.mxu0 0
        %3226 = vmatpush2.bf16.msra.mxu0 %v3038
        %3227 = vmatprep.mubr.bf16.mxu0 %v2661
        %3228 = vmatmul.mubr.bf16.gmra.mxu0 %v2653
        %v3229 = vpop.f32.mrf.mxu0
        %v3230 = vadd.f32 0.0, %v3229
        %v3231 = vpop.f32.mrf.mxu0
        %v3232 = vpop.f32.mrf.mxu0
        %v3233 = vpop.f32.mrf.mxu0
        %3234 = vdwg.mxu0
        %3235 = vmatprep.subr.bf16.mxu0 0
        %3236 = vmatpush1.bf16.msra.mxu0 %v3053
        %3237 = vmatprep.subr.bf16.mxu0 0
        %3238 = vmatpush1.bf16.msra.mxu0 %v3052
        %3239 = vmatprep.subr.bf16.mxu0 0
        %3240 = vmatpush1.bf16.msra.mxu0 %v3051
        %3241 = vmatprep.subr.bf16.mxu0 0
        %3242 = vmatpush1.bf16.msra.mxu0 %v3050
        %3243 = vmatprep.subr.bf16.mxu0 0
        %3244 = vmatpush1.bf16.msra.mxu0 %v3049
        %3245 = vmatprep.subr.bf16.mxu0 0
        %3246 = vmatpush1.bf16.msra.mxu0 %v3048
        %3247 = vmatprep.subr.bf16.mxu0 0
        %3248 = vmatpush1.bf16.msra.mxu0 %v3047
        %3249 = vmatprep.subr.bf16.mxu0 0
        %3250 = vmatpush1.bf16.msra.mxu0 %v3046
        %3251 = vmatprep.subr.bf16.mxu0 0
        %3252 = vmatpush2.bf16.msra.mxu0 %v3061
        %3253 = vmatprep.subr.bf16.mxu0 0
        %3254 = vmatpush2.bf16.msra.mxu0 %v3060
        %3255 = vmatprep.subr.bf16.mxu0 0
        %3256 = vmatpush2.bf16.msra.mxu0 %v3059
        %3257 = vmatprep.subr.bf16.mxu0 0
        %3258 = vmatpush2.bf16.msra.mxu0 %v3058
        %3259 = vmatprep.subr.bf16.mxu0 0
        %3260 = vmatpush2.bf16.msra.mxu0 %v3057
        %3261 = vmatprep.subr.bf16.mxu0 0
        %3262 = vmatpush2.bf16.msra.mxu0 %v3056
        %3263 = vmatprep.subr.bf16.mxu0 0
        %3264 = vmatpush2.bf16.msra.mxu0 %v3055
        %3265 = vmatprep.subr.bf16.mxu0 0
        %3266 = vmatpush2.bf16.msra.mxu0 %v3054
        %3267 = vmatprep.mubr.bf16.mxu0 %v2662
        %3268 = vmatmul.mubr.bf16.gmra.mxu0 %v2660
        %v3269 = vpop.f32.mrf.mxu0
        %v3270 = vadd.f32 %v3230, %v3269
        %v3271 = vpop.f32.mrf.mxu0
        %v3272 = vpop.f32.mrf.mxu0
        %v3273 = vpop.f32.mrf.mxu0
        %3274 = vdwg.mxu0
        %3275 = vmatprep.subr.bf16.mxu0 0
        %3276 = vmatpush1.bf16.msra.mxu0 %v3069
        %3277 = vmatprep.subr.bf16.mxu0 0
        %3278 = vmatpush1.bf16.msra.mxu0 %v3068
        %3279 = vmatprep.subr.bf16.mxu0 0
        %3280 = vmatpush1.bf16.msra.mxu0 %v3067
        %3281 = vmatprep.subr.bf16.mxu0 0
        %3282 = vmatpush1.bf16.msra.mxu0 %v3066
        %3283 = vmatprep.subr.bf16.mxu0 0
        %3284 = vmatpush1.bf16.msra.mxu0 %v3065
        %3285 = vmatprep.subr.bf16.mxu0 0
        %3286 = vmatpush1.bf16.msra.mxu0 %v3064
        %3287 = vmatprep.subr.bf16.mxu0 0
        %3288 = vmatpush1.bf16.msra.mxu0 %v3063
        %3289 = vmatprep.subr.bf16.mxu0 0
        %3290 = vmatpush1.bf16.msra.mxu0 %v3062
        %3291 = vmatprep.subr.bf16.mxu0 0
        %3292 = vmatpush2.bf16.msra.mxu0 %v3077
        %3293 = vmatprep.subr.bf16.mxu0 0
        %3294 = vmatpush2.bf16.msra.mxu0 %v3076
        %3295 = vmatprep.subr.bf16.mxu0 0
        %3296 = vmatpush2.bf16.msra.mxu0 %v3075
        %3297 = vmatprep.subr.bf16.mxu0 0
        %3298 = vmatpush2.bf16.msra.mxu0 %v3074
        %3299 = vmatprep.subr.bf16.mxu0 0
        %3300 = vmatpush2.bf16.msra.mxu0 %v3073
        %3301 = vmatprep.subr.bf16.mxu0 0
        %3302 = vmatpush2.bf16.msra.mxu0 %v3072
        %3303 = vmatprep.subr.bf16.mxu0 0
        %3304 = vmatpush2.bf16.msra.mxu0 %v3071
        %3305 = vmatprep.subr.bf16.mxu0 0
        %3306 = vmatpush2.bf16.msra.mxu0 %v3070
        %3307 = vmatprep.mubr.bf16.mxu0 %v2678
        %3308 = vmatmul.mubr.bf16.gmra.mxu0 %v2670
        %v3309 = vpop.f32.mrf.mxu0
        %v3310 = vadd.f32 %v3270, %v3309
        %v3311 = vpop.f32.mrf.mxu0
        %v3312 = vpop.f32.mrf.mxu0
        %v3313 = vpop.f32.mrf.mxu0
        %3314 = vdwg.mxu0
        %3315 = vmatprep.subr.bf16.mxu0 0
        %3316 = vmatpush1.bf16.msra.mxu0 %v3085
        %3317 = vmatprep.subr.bf16.mxu0 0
        %3318 = vmatpush1.bf16.msra.mxu0 %v3084
        %3319 = vmatprep.subr.bf16.mxu0 0
        %3320 = vmatpush1.bf16.msra.mxu0 %v3083
        %3321 = vmatprep.subr.bf16.mxu0 0
        %3322 = vmatpush1.bf16.msra.mxu0 %v3082
        %3323 = vmatprep.subr.bf16.mxu0 0
        %3324 = vmatpush1.bf16.msra.mxu0 %v3081
        %3325 = vmatprep.subr.bf16.mxu0 0
        %3326 = vmatpush1.bf16.msra.mxu0 %v3080
        %3327 = vmatprep.subr.bf16.mxu0 0
        %3328 = vmatpush1.bf16.msra.mxu0 %v3079
        %3329 = vmatprep.subr.bf16.mxu0 0
        %3330 = vmatpush1.bf16.msra.mxu0 %v3078
        %3331 = vmatprep.subr.bf16.mxu0 0
        %3332 = vmatpush2.bf16.msra.mxu0 %v3093
        %3333 = vmatprep.subr.bf16.mxu0 0
        %3334 = vmatpush2.bf16.msra.mxu0 %v3092
        %3335 = vmatprep.subr.bf16.mxu0 0
        %3336 = vmatpush2.bf16.msra.mxu0 %v3091
        %3337 = vmatprep.subr.bf16.mxu0 0
        %3338 = vmatpush2.bf16.msra.mxu0 %v3090
        %3339 = vmatprep.subr.bf16.mxu0 0
        %3340 = vmatpush2.bf16.msra.mxu0 %v3089
        %3341 = vmatprep.subr.bf16.mxu0 0
        %3342 = vmatpush2.bf16.msra.mxu0 %v3088
        %3343 = vmatprep.subr.bf16.mxu0 0
        %3344 = vmatpush2.bf16.msra.mxu0 %v3087
        %3345 = vmatprep.subr.bf16.mxu0 0
        %3346 = vmatpush2.bf16.msra.mxu0 %v3086
        %3347 = vmatprep.mubr.bf16.mxu0 %v2679
        %3348 = vmatmul.mubr.bf16.gmra.mxu0 %v2677
        %v3349 = vpop.f32.mrf.mxu0
        %v3350 = vadd.f32 %v3310, %v3349
        %v3351 = vpop.f32.mrf.mxu0
        %v3352 = vpop.f32.mrf.mxu0
        %v3353 = vpop.f32.mrf.mxu0
        %3354 = vdwg.mxu0
        %3355 = vmatprep.subr.bf16.mxu0 0
        %3356 = vmatpush1.bf16.msra.mxu0 %v3101
        %3357 = vmatprep.subr.bf16.mxu0 0
        %3358 = vmatpush1.bf16.msra.mxu0 %v3100
        %3359 = vmatprep.subr.bf16.mxu0 0
        %3360 = vmatpush1.bf16.msra.mxu0 %v3099
        %3361 = vmatprep.subr.bf16.mxu0 0
        %3362 = vmatpush1.bf16.msra.mxu0 %v3098
        %3363 = vmatprep.subr.bf16.mxu0 0
        %3364 = vmatpush1.bf16.msra.mxu0 %v3097
        %3365 = vmatprep.subr.bf16.mxu0 0
        %3366 = vmatpush1.bf16.msra.mxu0 %v3096
        %3367 = vmatprep.subr.bf16.mxu0 0
        %3368 = vmatpush1.bf16.msra.mxu0 %v3095
        %3369 = vmatprep.subr.bf16.mxu0 0
        %3370 = vmatpush1.bf16.msra.mxu0 %v3094
        %3371 = vmatprep.subr.bf16.mxu0 0
        %3372 = vmatpush2.bf16.msra.mxu0 %v3109
        %3373 = vmatprep.subr.bf16.mxu0 0
        %3374 = vmatpush2.bf16.msra.mxu0 %v3108
        %3375 = vmatprep.subr.bf16.mxu0 0
        %3376 = vmatpush2.bf16.msra.mxu0 %v3107
        %3377 = vmatprep.subr.bf16.mxu0 0
        %3378 = vmatpush2.bf16.msra.mxu0 %v3106
        %3379 = vmatprep.subr.bf16.mxu0 0
        %3380 = vmatpush2.bf16.msra.mxu0 %v3105
        %3381 = vmatprep.subr.bf16.mxu0 0
        %3382 = vmatpush2.bf16.msra.mxu0 %v3104
        %3383 = vmatprep.subr.bf16.mxu0 0
        %3384 = vmatpush2.bf16.msra.mxu0 %v3103
        %3385 = vmatprep.subr.bf16.mxu0 0
        %3386 = vmatpush2.bf16.msra.mxu0 %v3102
        %3387 = vmatprep.mubr.bf16.mxu0 %v2695
        %3388 = vmatmul.mubr.bf16.gmra.mxu0 %v2687
        %v3389 = vpop.f32.mrf.mxu0
        %v3390 = vadd.f32 %v3350, %v3389
        %v3391 = vpop.f32.mrf.mxu0
        %v3392 = vpop.f32.mrf.mxu0
        %v3393 = vpop.f32.mrf.mxu0
        %3394 = vdwg.mxu0
        %3395 = vmatprep.subr.bf16.mxu0 0
        %3396 = vmatpush1.bf16.msra.mxu0 0
        %3397 = vmatprep.subr.bf16.mxu0 0
        %3398 = vmatpush1.bf16.msra.mxu0 0
        %3399 = vmatprep.subr.bf16.mxu0 0
        %3400 = vmatpush1.bf16.msra.mxu0 0
        %3401 = vmatprep.subr.bf16.mxu0 0
        %3402 = vmatpush1.bf16.msra.mxu0 0
        %3403 = vmatprep.subr.bf16.mxu0 0
        %3404 = vmatpush1.bf16.msra.mxu0 0
        %3405 = vmatprep.subr.bf16.mxu0 0
        %3406 = vmatpush1.bf16.msra.mxu0 0
        %3407 = vmatprep.subr.bf16.mxu0 0
        %3408 = vmatpush1.bf16.msra.mxu0 0
        %3409 = vmatprep.subr.bf16.mxu0 0
        %3410 = vmatpush1.bf16.msra.mxu0 %v3110
        %3411 = vmatprep.subr.bf16.mxu0 0
        %3412 = vmatpush2.bf16.msra.mxu0 0
        %3413 = vmatprep.subr.bf16.mxu0 0
        %3414 = vmatpush2.bf16.msra.mxu0 0
        %3415 = vmatprep.subr.bf16.mxu0 0
        %3416 = vmatpush2.bf16.msra.mxu0 0
        %3417 = vmatprep.subr.bf16.mxu0 0
        %3418 = vmatpush2.bf16.msra.mxu0 0
        %3419 = vmatprep.subr.bf16.mxu0 0
        %3420 = vmatpush2.bf16.msra.mxu0 0
        %3421 = vmatprep.subr.bf16.mxu0 0
        %3422 = vmatpush2.bf16.msra.mxu0 0
        %3423 = vmatprep.subr.bf16.mxu0 0
        %3424 = vmatpush2.bf16.msra.mxu0 0
        %3425 = vmatprep.subr.bf16.mxu0 0
        %3426 = vmatpush2.bf16.msra.mxu0 0
        %3427 = vmatprep.mubr.bf16.mxu0 0
        %3428 = vmatmul.mubr.bf16.gmra.mxu0 %v3193
        %v3429 = vpop.f32.mrf.mxu0
        %v3430 = vadd.f32 %v3390, %v3429
        %v3431 = vpop.f32.mrf.mxu0
        %v3432 = vpop.f32.mrf.mxu0
        %v3433 = vpop.f32.mrf.mxu0
        %3434 = vdwg.mxu0
        %3435 = vst [vmem:[%s1509] sm:$0xf] %v2638
        %3436 = vst [vmem:[%s1509 + $0x4] sm:$0xf] %v3430
        %s3437 = sand.u32 %s89, 1
        %s3438 = sand.u32 %s89, 1
        %s3439 = smul.addr %s3438, 8
        %s3440 = scalar_lea.vmem [#allocation3], %s3439
        // Predicated region
        $region70: #{blur_by_kernel.1} parent=64 // pred_check
          %p3441 = pneg %p99
        $region71: #{blur_by_kernel.1} parent=64 // pred_check_branch
          %3443 = sbr.rel (%p3441) target = $region73
        $region72: #{blur_by_kernel.1} parent=64 // pred_region
          %s3444 = smul.u32 2, %s17
          %s3445 = smul.addr %s3444, 2
          %s3446 = sadd.s32 %s18, %s3445
          %s3447 = smul.addr %s3446, 4
          %s3448 = scalar_lea.vmem %s2, %s3447
          // Predicated region
          $region74: #{blur_by_kernel.1} parent=72 // pred_check
            _
          $region75: #{blur_by_kernel.1} parent=72 // pred_check_branch
            %3450 = sbr.rel (0) target = $region77
          $region76: #{blur_by_kernel.1} parent=72 // pred_region
            // Predicated region
            $region78: #{blur_by_kernel.1} parent=76 // pred_check
              _
            $region79: #{blur_by_kernel.1} parent=76 // pred_check_branch
              %3452 = sbr.rel target = $region81
            $region80: #{blur_by_kernel.1} parent=76 // pred_region
              // Predicated region
              $region93: #{blur_by_kernel.1} parent=80 // pred_check
                _
              $region94: #{blur_by_kernel.1} parent=80 // pred_check_branch
                %3470 = sbr.rel (0) target = $region96
              $region95: #{blur_by_kernel.1} parent=80 // pred_region
                loop: start=0, step=1, limit=1
                $region97: #{blur_by_kernel.1} parent=95 // loop_pre_header
                  _
                $region98: #{blur_by_kernel.1} parent=95 // loop_header
                  %s3472 = sphi 0, %s3476
                  %p3473 = scmp.ge.s32.totalorder %s3472, 1
                  %s3477 = sphi %s3440, %s3440
                  %s3478 = sphi %s3448, %s3448
                $region99: #{blur_by_kernel.1} parent=95 // loop_header_branch
                  %3475 = sbr.rel (%p3473) target = $region103
                $region100: #{blur_by_kernel.1} parent=95 // loop_body
                  _
                $region101: #{blur_by_kernel.1} parent=95 // loop_footer
                  %s3476 = sadd.s32 1, %s3472
                $region102: #{blur_by_kernel.1} parent=95 // loop_footer_branch
                  %3471 = sbr.rel target = $region98
                $region103: #{blur_by_kernel.1} parent=95 // loop_exit
                  _
                %s3480 = ssub.s32 16, 1
                loop: start=0, step=1, limit=1
                $region104: #{blur_by_kernel.1} parent=95 // loop_pre_header
                  _
                $region105: #{blur_by_kernel.1} parent=95 // loop_header
                  %s3482 = sphi 0, %s3486
                  %p3483 = scmp.ge.s32.totalorder %s3482, 1
                  %s3487 = sphi %s3440, %s3440
                  %s3488 = sphi %s3448, %s3448
                $region106: #{blur_by_kernel.1} parent=95 // loop_header_branch
                  %3485 = sbr.rel (%p3483) target = $region110
                $region107: #{blur_by_kernel.1} parent=95 // loop_body
                  %v3489 = vld [vmem:[%s3487] sm:%s3480]
                  %3490 = vst [vmem:[%s3488] sm:%s3480] %v3489
                  %v3491 = vld [vmem:[%s3487 + $0x4] sm:%s3480]
                  %3492 = vst [vmem:[%s3488 + $0x8] sm:%s3480] %v3491
                $region108: #{blur_by_kernel.1} parent=95 // loop_footer
                  %s3486 = sadd.s32 1, %s3482
                $region109: #{blur_by_kernel.1} parent=95 // loop_footer_branch
                  %3481 = sbr.rel target = $region105
                $region110: #{blur_by_kernel.1} parent=95 // loop_exit
                  _
              $region96: #{blur_by_kernel.1} parent=80 // pred_fallthru
                _
            $region81: #{blur_by_kernel.1} parent=76 // pred_fallthru
              _
            // Predicated region
            $region82: #{blur_by_kernel.1} parent=76 // pred_check
              _
            $region83: #{blur_by_kernel.1} parent=76 // pred_check_branch
              %3454 = sbr.rel (0) target = $region85
            $region84: #{blur_by_kernel.1} parent=76 // pred_region
              %s3456 = ssub.s32 16, 1
              loop: start=0, step=1, limit=1
              $region86: #{blur_by_kernel.1} parent=84 // loop_pre_header
                _
              $region87: #{blur_by_kernel.1} parent=84 // loop_header
                %s3458 = sphi 0, %s3462
                %p3459 = scmp.ge.s32.totalorder %s3458, 1
                %s3463 = sphi %s3440, %s3440
                %s3464 = sphi %s3448, %s3448
              $region88: #{blur_by_kernel.1} parent=84 // loop_header_branch
                %3461 = sbr.rel (%p3459) target = $region92
              $region89: #{blur_by_kernel.1} parent=84 // loop_body
                %v3465 = vld [vmem:[%s3463] sm:%s3456]
                %3466 = vst [vmem:[%s3464] sm:%s3456] %v3465
                %v3467 = vld [vmem:[%s3463 + $0x4] sm:%s3456]
                %3468 = vst [vmem:[%s3464 + $0x8] sm:%s3456] %v3467
              $region90: #{blur_by_kernel.1} parent=84 // loop_footer
                %s3462 = sadd.s32 1, %s3458
              $region91: #{blur_by_kernel.1} parent=84 // loop_footer_branch
                %3457 = sbr.rel target = $region87
              $region92: #{blur_by_kernel.1} parent=84 // loop_exit
                _
            $region85: #{blur_by_kernel.1} parent=76 // pred_fallthru
              _
          $region77: #{blur_by_kernel.1} parent=72 // pred_fallthru
            _
          %3493 = vnop
        $region73: #{blur_by_kernel.1} parent=64 // pred_fallthru
          _
      $region65: #{blur_by_kernel.1} parent=5 // pred_fallthru
        _
      %p3494 = scmp.le.s32.totalorder 2, %s8
      // Predicated region
      $region111: #{blur_by_kernel.1} parent=5 // pred_check
        %p3495 = pneg %p3494
      $region112: #{blur_by_kernel.1} parent=5 // pred_check_branch
        %3497 = sbr.rel (%p3495) target = $region114
      $region113: #{blur_by_kernel.1} parent=5 // pred_region
        %s3498 = ssub.s32 %s8, 2
        // Predicated region
        $region115: #{blur_by_kernel.1} parent=113 // pred_check
          %p3499 = pneg %p105
        $region116: #{blur_by_kernel.1} parent=113 // pred_check_branch
          %3501 = sbr.rel (%p3499) target = $region118
        $region117: #{blur_by_kernel.1} parent=113 // pred_region
          %s3502 = sand.u32 %s90, 1
          %s3503 = sand.u32 %s90, 1
          %s3504 = smul.addr %s3503, 8
          %s3505 = scalar_lea.vmem [#allocation3], %s3504
        $region118: #{blur_by_kernel.1} parent=113 // pred_fallthru
          _
      $region114: #{blur_by_kernel.1} parent=5 // pred_fallthru
        _
    $region6: #{blur_by_kernel.1} parent=1 // loop_footer
      %s12 = sadd.s32 1, %s8
    $region7: #{blur_by_kernel.1} parent=1 // loop_footer_branch
      %7 = sbr.rel target = $region3
    $region8: #{blur_by_kernel.1} parent=1 // loop_exit
      _

</llo_original>
